<compile_context>
chip_gen: v7x
topology: tpu7x:2x2x1
jax: 0.10.0
libtpu: 0.0.40
codegen_flags: <defaults>
</compile_context>

<pallas_src>
import functools

import jax
import jax.numpy as jnp
from jax.experimental import pallas as pl
from jax.experimental.pallas import tpu as pltpu

GROUPS = 32
EPS = 1e-6


# ----------------------------- kernel ----------------------------------------
def _fused_stage_kernel(x_ref, gamma_ref, beta_ref, mavg_ref, mexp_ref,
                        w_ref, b_ref, *rest,
                        H, W, Wp, Cin, Cout, apply_gn, residual):
    """One ResnetBlock conv stage for a single batch item (fully fused)."""
    if residual == "none":
        o_ref, xp_ref = rest
        res_ref = nin_w_ref = nin_b_ref = None
    elif residual == "identity":
        res_ref, o_ref, xp_ref = rest
        nin_w_ref = nin_b_ref = None
    else:  # "nin"
        res_ref, nin_w_ref, nin_b_ref, o_ref, xp_ref = rest

    HWp = H * Wp
    x3 = x_ref[0].astype(jnp.float32)                          # (H, W, Cin)

    if apply_gn:
        # Two-pass GroupNorm in f32 (center first, then E[(x-mu)^2]); group
        # reduce/expand via tiny (1,Cin)x(Cin,G) / (1,G)x(G,Cin) matmuls so no
        # minor-dim reshapes are needed.
        inv_hw = 1.0 / (H * W)
        sum_c = jnp.sum(jnp.sum(x3, axis=0), axis=0, keepdims=True)     # (1,Cin)
        mean_c = sum_c * inv_hw
        mean_g = jnp.dot(mean_c, mavg_ref[...], preferred_element_type=jnp.float32)
        mean_cb = jnp.dot(mean_g, mexp_ref[...], preferred_element_type=jnp.float32)
        xc3 = x3 - mean_cb                                              # centered
        var_c = jnp.sum(jnp.sum(xc3 * xc3, axis=0), axis=0, keepdims=True) * inv_hw
        var_g = jnp.dot(var_c, mavg_ref[...], preferred_element_type=jnp.float32)
        inv_g = jax.lax.rsqrt(var_g + EPS)
        inv_cb = jnp.dot(inv_g, mexp_ref[...], preferred_element_type=jnp.float32)
        y3 = xc3 * (inv_cb * gamma_ref[...]) + beta_ref[...]
        y3 = y3 * jax.nn.sigmoid(y3)                                    # swish fused
    else:
        y3 = x3
    yb = y3.astype(jnp.bfloat16)                                        # (H, W, Cin)

    # SAME padding into the flat ((H+2)*Wp + 8, Cin) VMEM scratch.  Every
    # padded position read by a valid output is written exactly once per step:
    # image rows + small zero stores for the border rows / column pads
    # (no full-buffer zero-fill, no interior double-write).
    zhead = jnp.zeros((Wp + 1, Cin), jnp.bfloat16)
    ztail = jnp.zeros((Wp + 8, Cin), jnp.bfloat16)
    zgap = jnp.zeros((Wp - W, Cin), jnp.bfloat16)
    xp_ref[pl.ds(0, Wp + 1), :] = zhead                 # top padded row (+ left pad of row 1)
    xp_ref[pl.ds((H + 1) * Wp, Wp + 8), :] = ztail      # bottom padded row + tap slack
    # TODO(synk): for large H replace this unrolled loop with spatial tiling.
    for y in range(H):
        base = (y + 1) * Wp
        xp_ref[pl.ds(base + 1, W), :] = yb[y]                     # image row y
        xp_ref[pl.ds(base + W + 1, Wp - W), :] = zgap             # right pad + next left pad

    # 3x3 conv = 9 accumulating bf16 MXU matmuls; each tap is a contiguous
    # row-slice of the flat padded scratch at static offset dy*Wp + dx
    # (no collapse reshapes / relayout copies).
    acc = jnp.zeros((HWp, Cout), jnp.float32)
    for dy in range(3):
        for dx in range(3):
            lhs = xp_ref[pl.ds(dy * Wp + dx, HWp), :]             # (H*Wp, Cin) bf16
            acc = acc + jnp.dot(lhs, w_ref[dy, dx],
                                preferred_element_type=jnp.float32)

    # Drop the wrap-around columns once at the store; Wp % 8 == 0 and
    # W % 8 == 0 make this reshape/slice layout-aligned (no relayout).
    out3 = acc.reshape(H, Wp, Cout)[:, :W, :] + b_ref[0]          # (H, W, Cout) f32

    if residual == "identity":
        out3 = out3 + res_ref[0].astype(jnp.float32)
    elif residual == "nin":
        cres = res_ref.shape[-1]
        r2 = res_ref[0].reshape(H * W, cres).astype(jnp.bfloat16)
        nin = jnp.dot(r2, nin_w_ref[...], preferred_element_type=jnp.float32)
        nin = nin + nin_b_ref[...]
        out3 = out3 + nin.reshape(H, W, Cout)

    o_ref[0] = out3.astype(o_ref.dtype)


# ----------------------------- wrapper ----------------------------------------
def _group_matrices(cin, apply_gn):
    g = GROUPS
    if apply_gn:
        assert cin % g == 0, f"GroupNorm(32) needs C % 32 == 0, got {cin}"
        cs = cin // g
        mexp = (jnp.arange(cin)[None, :] // cs == jnp.arange(g)[:, None]).astype(jnp.float32)
        mavg = mexp.T / cs
    else:  # unused by the kernel, shapes only
        mexp = jnp.zeros((g, cin), jnp.float32)
        mavg = jnp.zeros((cin, g), jnp.float32)
    return mavg, mexp  # (Cin, G), (G, Cin)


def _vmem_capacity_bytes():
    """Per-core VMEM capacity; conservative fallback = v7x's 64 MiB/TC."""
    try:
        info = pltpu.get_tpu_info()
        cap = getattr(info, "vmem_capacity_bytes", None)
        if cap:
            return int(cap)
    except Exception:
        pass
    return 64 * 1024 * 1024


def fused_gn_swish_conv(x, gamma, beta, w_hwio, bias_per_batch, *,
                        apply_gn=True, residual="none",
                        res=None, nin_w=None, nin_b=None, out_dtype=None):
    """Fused [GN+swish] + 3x3 conv + bias [+ residual] over a batch (grid=(B,))."""
    B, H, W, Cin = x.shape
    Cout = w_hwio.shape[-1]
    G = GROUPS
    Wp = ((W + 2 + 7) // 8) * 8          # padded row stride, 8-aligned
    out_dtype = x.dtype if out_dtype is None else jnp.dtype(out_dtype)
    mavg, mexp = _group_matrices(Cin, apply_gn)

    if gamma is None:
        gamma = jnp.ones((Cin,), jnp.float32)
    if beta is None:
        beta = jnp.zeros((Cin,), jnp.float32)

    inputs = [
        x,
        gamma.reshape(1, Cin).astype(jnp.float32),
        beta.reshape(1, Cin).astype(jnp.float32),
        mavg, mexp,
        w_hwio.astype(jnp.bfloat16),
        bias_per_batch.reshape(B, 1, Cout).astype(jnp.float32),
    ]
    in_specs = [
        pl.BlockSpec((1, H, W, Cin), lambda b: (b, 0, 0, 0)),
        pl.BlockSpec((1, Cin), lambda b: (0, 0)),
        pl.BlockSpec((1, Cin), lambda b: (0, 0)),
        pl.BlockSpec((Cin, G), lambda b: (0, 0)),
        pl.BlockSpec((G, Cin), lambda b: (0, 0)),
        pl.BlockSpec((3, 3, Cin, Cout), lambda b: (0, 0, 0, 0)),
        pl.BlockSpec((1, 1, Cout), lambda b: (b, 0, 0)),       # per-batch bias block
    ]

    res_bytes = 0
    if residual != "none":
        assert res is not None
        Cres = res.shape[-1]
        inputs.append(res)
        in_specs.append(pl.BlockSpec((1, H, W, Cres), lambda b: (b, 0, 0, 0)))
        res_bytes = H * W * Cres * res.dtype.itemsize
    if residual == "nin":
        Cres = res.shape[-1]
        inputs.append(nin_w.astype(jnp.bfloat16))
        inputs.append(nin_b.reshape(1, Cout).astype(jnp.float32))
        in_specs.append(pl.BlockSpec((Cres, Cout), lambda b: (0, 0)))
        in_specs.append(pl.BlockSpec((1, Cout), lambda b: (0, 0)))

    kernel = functools.partial(_fused_stage_kernel, H=H, W=W, Wp=Wp, Cin=Cin,
                               Cout=Cout, apply_gn=apply_gn, residual=residual)

    # VMEM budget: per-step activation blocks double-buffered; weights / GN
    # tables (constant index_maps) single-resident; + scratch and big
    # in-kernel temporaries (wide accumulator, GN intermediates).
    blk_bytes = (H * W * Cin * x.dtype.itemsize
                 + H * W * Cout * out_dtype.itemsize
                 + res_bytes + Cout * 4)
    w_bytes = (9 * Cin * Cout * 2 + 2 * Cin * 4 + 2 * Cin * G * 4
               + (Cin * Cout * 2 + Cout * 4 if residual == "nin" else 0))
    scratch_bytes = ((H + 2) * Wp + 8) * Cin * 2
    intern_bytes = H * Wp * Cout * 4 + 2 * H * W * Cin * 4
    est = 2 * blk_bytes + w_bytes + scratch_bytes + intern_bytes
    cap = _vmem_capacity_bytes()
    vmem_limit = int(min(max(est + est // 4, 32 * 1024 * 1024), (cap * 4) // 5))

    return pl.pallas_call(
        kernel,
        out_shape=jax.ShapeDtypeStruct((B, H, W, Cout), out_dtype),
        grid=(B,),
        in_specs=in_specs,
        out_specs=pl.BlockSpec((1, H, W, Cout), lambda b: (b, 0, 0, 0)),
        scratch_shapes=[pltpu.VMEM(((H + 2) * Wp + 8, Cin), jnp.bfloat16)],
        compiler_params=pltpu.CompilerParams(
            dimension_semantics=("parallel",),
            vmem_limit_bytes=vmem_limit,
        ),
    )(*inputs)


def resnet_block_forward(params, x_nchw, temb, *, use_conv_shortcut=False):
    """Matches ResnetBlock.forward (eval mode; dropout = identity)."""
    # TODO(synk): boundary NCHW<->NHWC transposes are XLA glue; drop them if the
    # surrounding model already runs channels-last.
    x = jnp.transpose(x_nchw, (0, 2, 3, 1))
    B = x.shape[0]
    cin = x.shape[-1]
    cout = params["conv1_w"].shape[-1]

    # Stage 1: GN1 + swish + conv1; (conv1 bias + temb projection) folded into a
    # per-batch bias applied inside the kernel.  The tiny (B, temb) Linear stays
    # as JAX glue.  Inter-stage activation h is handed off in bf16.
    if temb is not None:
        temb_proj = jnp.dot(temb * jax.nn.sigmoid(temb), params["temb_w"].T) + params["temb_b"]
        bias1 = params["conv1_b"][None, :] + temb_proj             # (B, Cout)
    else:
        bias1 = jnp.broadcast_to(params["conv1_b"][None, :], (B, cout))
    h = fused_gn_swish_conv(x, params["norm1_g"], params["norm1_b"],
                            params["conv1_w"], bias1, out_dtype=jnp.bfloat16)

    # Stage 2: GN2 + swish + dropout(identity in eval) + conv2 + fused residual.
    bias2 = jnp.broadcast_to(params["conv2_b"][None, :], (B, cout))
    if cin == cout:
        out = fused_gn_swish_conv(h, params["norm2_g"], params["norm2_b"],
                                  params["conv2_w"], bias2,
                                  residual="identity", res=x,
                                  out_dtype=jnp.float32)
    elif not use_conv_shortcut:
        out = fused_gn_swish_conv(h, params["norm2_g"], params["norm2_b"],
                                  params["conv2_w"], bias2,
                                  residual="nin", res=x.astype(jnp.bfloat16),
                                  nin_w=params["nin_w"], nin_b=params["nin_b"],
                                  out_dtype=jnp.float32)
    else:
        h2 = fused_gn_swish_conv(h, params["norm2_g"], params["norm2_b"],
                                 params["conv2_w"], bias2, out_dtype=jnp.bfloat16)
        biass = jnp.broadcast_to(params["shortcut_b"][None, :], (B, cout))
        # conv_shortcut(x) with the residual add of h2 fused into the same kernel.
        out = fused_gn_swish_conv(x, None, None, params["shortcut_w"], biass,
                                  apply_gn=False, residual="identity", res=h2,
                                  out_dtype=jnp.float32)
    return jnp.transpose(out, (0, 3, 1, 2))                        # NHWC -> NCHW


# ----------------------------- params + reference -----------------------------
def init_params(key, cin, cout, temb_ch):
    ks = jax.random.split(key, 14)

    def u(k, shape, fan_in):
        s = 1.0 / (fan_in ** 0.5)
        return jax.random.uniform(k, shape, jnp.float32, -s, s)

    return {
        "norm1_g": 1.0 + 0.1 * jax.random.normal(ks[0], (cin,), jnp.float32),
        "norm1_b": 0.1 * jax.random.normal(ks[1], (cin,), jnp.float32),
        "conv1_w": u(ks[2], (3, 3, cin, cout), cin * 9),
        "conv1_b": u(ks[3], (cout,), cin * 9),
        "temb_w": u(ks[4], (cout, temb_ch), temb_ch),   # PyTorch Linear (out, in)
        "temb_b": u(ks[5], (cout,), temb_ch),
        "norm2_g": 1.0 + 0.1 * jax.random.normal(ks[6], (cout,), jnp.float32),
        "norm2_b": 0.1 * jax.random.normal(ks[7], (cout,), jnp.float32),
        "conv2_w": u(ks[8], (3, 3, cout, cout), cout * 9),
        "conv2_b": u(ks[9], (cout,), cout * 9),
        "nin_w": u(ks[10], (cin, cout), cin),           # 1x1 conv as (Cin, Cout)
        "nin_b": u(ks[11], (cout,), cin),
        "shortcut_w": u(ks[12], (3, 3, cin, cout), cin * 9),
        "shortcut_b": u(ks[13], (cout,), cin * 9),
    }


def ref_forward(params, x, temb, *, use_conv_shortcut=False):
    def gn(v, gamma, beta):
        B, C, H, W = v.shape
        vg = v.reshape(B, GROUPS, C // GROUPS, H, W)
        mean = vg.mean(axis=(2, 3, 4), keepdims=True)
        var = jnp.mean((vg - mean) ** 2, axis=(2, 3, 4), keepdims=True)
        vn = ((vg - mean) / jnp.sqrt(var + EPS)).reshape(B, C, H, W)
        return vn * gamma[None, :, None, None] + beta[None, :, None, None]

    def swish(v):
        return v * jax.nn.sigmoid(v)

    def conv(v, w_hwio, b, pad):
        y = jax.lax.conv_general_dilated(v, w_hwio, (1, 1), [(pad, pad), (pad, pad)],
                                         dimension_numbers=("NCHW", "HWIO", "NCHW"))
        return y + b[None, :, None, None]

    cin = x.shape[1]
    cout = params["conv1_w"].shape[-1]
    h = conv(swish(gn(x, params["norm1_g"], params["norm1_b"])),
             params["conv1_w"], params["conv1_b"], 1)
    h = h + (jnp.dot(swish(temb), params["temb_w"].T) + params["temb_b"])[:, :, None, None]
    h = conv(swish(gn(h, params["norm2_g"], params["norm2_b"])),
             params["conv2_w"], params["conv2_b"], 1)
    if cin != cout:
        if use_conv_shortcut:
            xs = conv(x, params["shortcut_w"], params["shortcut_b"], 1)
        else:
            xs = conv(x, params["nin_w"][None, None], params["nin_b"], 0)
    else:
        xs = x
    return xs + h


# ----------------------------- main -------------------------------------------
if __name__ == "__main__":
    key = jax.random.PRNGKey(0)
    B, H, W, TEMB = 2, 8, 8, 64                         # GroupNorm(32) needs C % 32 == 0
    configs = [
        (32, 64, False),   # cin != cout, nin_shortcut fused into conv2 kernel
        (32, 32, False),   # cin == cout, identity residual fused into conv2 kernel
        (32, 64, True),    # cin != cout, conv_shortcut path
    ]
    for i, (cin, cout, use_cs) in enumerate(configs):
        kx, kt, kp = jax.random.split(jax.random.fold_in(key, i), 3)
        x = jax.random.normal(kx, (B, cin, H, W), jnp.float32)
        temb = jax.random.normal(kt, (B, TEMB), jnp.float32)
        params = init_params(kp, cin, cout, TEMB)

        out = jax.block_until_ready(
            resnet_block_forward(params, x, temb, use_conv_shortcut=use_cs))
        ref = ref_forward(params, x, temb, use_conv_shortcut=use_cs)

        assert out.shape == (B, cout, H, W), out.shape
        # Tolerance accounts for bf16 conv operands + bf16 inter-stage handoff
        # (GN stats, accumulation, bias and residual adds stay f32).
        err = float(jnp.max(jnp.abs(out - ref)))
        assert err < 8e-2, f"config {i} (cin={cin}, cout={cout}, cs={use_cs}): max abs err {err}"
    print("KERNEL_OK")
</pallas_src>

<mosaic_0001>
module attributes {stable_mosaic.version = 11 : i64} {
  func.func @_fused_stage_kernel(%arg0: i32, %arg1: memref<1x8x8x32xf32, #tpu.memory_space<vmem>>, %arg2: memref<1x32xf32, #tpu.memory_space<vmem>>, %arg3: memref<1x32xf32, #tpu.memory_space<vmem>>, %arg4: memref<32x32xf32, #tpu.memory_space<vmem>>, %arg5: memref<32x32xf32, #tpu.memory_space<vmem>>, %arg6: memref<3x3x32x64xbf16, #tpu.memory_space<vmem>>, %arg7: memref<1x1x64xf32, #tpu.memory_space<vmem>>, %arg8: memref<1x8x8x64xbf16, #tpu.memory_space<vmem>>, %arg9: memref<168x32xbf16, #tpu.memory_space<vmem>>) attributes {dimension_semantics = [#tpu.dimension_semantics<parallel>], iteration_bounds = array<i64: 2>, scalar_prefetch = 0 : i64, scratch_operands = 1 : i64, tpu.core_type = #tpu.core_type<tc>, window_params = [{transform_indices = @transform_0, window_bounds = array<i64: 1, 8, 8, 32>}, {pipeline_mode = #tpu.pipeline_mode<synchronous>, transform_indices = @transform_1, window_bounds = array<i64: 1, 32>}, {pipeline_mode = #tpu.pipeline_mode<synchronous>, transform_indices = @transform_2, window_bounds = array<i64: 1, 32>}, {pipeline_mode = #tpu.pipeline_mode<synchronous>, transform_indices = @transform_3, window_bounds = array<i64: 32, 32>}, {pipeline_mode = #tpu.pipeline_mode<synchronous>, transform_indices = @transform_4, window_bounds = array<i64: 32, 32>}, {pipeline_mode = #tpu.pipeline_mode<synchronous>, transform_indices = @transform_5, window_bounds = array<i64: 3, 3, 32, 64>}, {transform_indices = @transform_6, window_bounds = array<i64: 1, 1, 64>}, {transform_indices = @transform_7, window_bounds = array<i64: 1, 8, 8, 64>}]} {
    %c0 = arith.constant 0 : index
    %c0_0 = arith.constant 0 : index
    %c0_1 = arith.constant 0 : index
    %c0_2 = arith.constant 0 : index
    %0 = vector.load %arg1[%c0, %c0_0, %c0_1, %c0_2] : memref<1x8x8x32xf32, #tpu.memory_space<vmem>>, vector<1x8x8x32xf32>
    %1 = vector.shape_cast %0 : vector<1x8x8x32xf32> to vector<8x8x32xf32>
    %cst = arith.constant dense<0.000000e+00> : vector<8x32xf32>
    %2 = vector.multi_reduction <add>, %1, %cst [0] : vector<8x8x32xf32> to vector<8x32xf32>
    %cst_3 = arith.constant dense<0.000000e+00> : vector<32xf32>
    %3 = vector.multi_reduction <add>, %2, %cst_3 [0] : vector<8x32xf32> to vector<32xf32>
    %4 = vector.shape_cast %3 : vector<32xf32> to vector<1x32xf32>
    %cst_4 = arith.constant 1.562500e-02 : f32
    %5 = vector.broadcast %cst_4 : f32 to vector<1x32xf32>
    %6 = arith.mulf %4, %5 : vector<1x32xf32>
    %c0_5 = arith.constant 0 : index
    %c0_6 = arith.constant 0 : index
    %7 = vector.load %arg4[%c0_5, %c0_6] : memref<32x32xf32, #tpu.memory_space<vmem>>, vector<32x32xf32>
    %cst_7 = arith.constant dense<0.000000e+00> : vector<1x32xf32>
    %8 = tpu.matmul %6, %7, %cst_7 {dimension_numbers = #tpu.dot_dimension_numbers<[1], [0], [0], [1], [0, 0, 1, 1], [], []>} : vector<1x32xf32>, vector<32x32xf32>, vector<1x32xf32> -> vector<1x32xf32>
    %c0_8 = arith.constant 0 : index
    %c0_9 = arith.constant 0 : index
    %9 = vector.load %arg5[%c0_8, %c0_9] : memref<32x32xf32, #tpu.memory_space<vmem>>, vector<32x32xf32>
    %cst_10 = arith.constant dense<0.000000e+00> : vector<1x32xf32>
    %10 = tpu.matmul %8, %9, %cst_10 {dimension_numbers = #tpu.dot_dimension_numbers<[1], [0], [0], [1], [0, 0, 1, 1], [], []>} : vector<1x32xf32>, vector<32x32xf32>, vector<1x32xf32> -> vector<1x32xf32>
    %11 = vector.shape_cast %10 : vector<1x32xf32> to vector<1x1x32xf32>
    %12 = vector.broadcast %11 : vector<1x1x32xf32> to vector<8x8x32xf32>
    %13 = arith.subf %1, %12 : vector<8x8x32xf32>
    %14 = arith.mulf %13, %13 : vector<8x8x32xf32>
    %cst_11 = arith.constant dense<0.000000e+00> : vector<8x32xf32>
    %15 = vector.multi_reduction <add>, %14, %cst_11 [0] : vector<8x8x32xf32> to vector<8x32xf32>
    %cst_12 = arith.constant dense<0.000000e+00> : vector<32xf32>
    %16 = vector.multi_reduction <add>, %15, %cst_12 [0] : vector<8x32xf32> to vector<32xf32>
    %17 = vector.shape_cast %16 : vector<32xf32> to vector<1x32xf32>
    %cst_13 = arith.constant 1.562500e-02 : f32
    %18 = vector.broadcast %cst_13 : f32 to vector<1x32xf32>
    %19 = arith.mulf %17, %18 : vector<1x32xf32>
    %c0_14 = arith.constant 0 : index
    %c0_15 = arith.constant 0 : index
    %20 = vector.load %arg4[%c0_14, %c0_15] : memref<32x32xf32, #tpu.memory_space<vmem>>, vector<32x32xf32>
    %cst_16 = arith.constant dense<0.000000e+00> : vector<1x32xf32>
    %21 = tpu.matmul %19, %20, %cst_16 {dimension_numbers = #tpu.dot_dimension_numbers<[1], [0], [0], [1], [0, 0, 1, 1], [], []>} : vector<1x32xf32>, vector<32x32xf32>, vector<1x32xf32> -> vector<1x32xf32>
    %cst_17 = arith.constant 9.99999997E-7 : f32
    %22 = vector.broadcast %cst_17 : f32 to vector<1x32xf32>
    %23 = arith.addf %21, %22 : vector<1x32xf32>
    %24 = math.rsqrt %23 : vector<1x32xf32>
    %c0_18 = arith.constant 0 : index
    %c0_19 = arith.constant 0 : index
    %25 = vector.load %arg5[%c0_18, %c0_19] : memref<32x32xf32, #tpu.memory_space<vmem>>, vector<32x32xf32>
    %cst_20 = arith.constant dense<0.000000e+00> : vector<1x32xf32>
    %26 = tpu.matmul %24, %25, %cst_20 {dimension_numbers = #tpu.dot_dimension_numbers<[1], [0], [0], [1], [0, 0, 1, 1], [], []>} : vector<1x32xf32>, vector<32x32xf32>, vector<1x32xf32> -> vector<1x32xf32>
    %c0_21 = arith.constant 0 : index
    %c0_22 = arith.constant 0 : index
    %27 = vector.load %arg2[%c0_21, %c0_22] : memref<1x32xf32, #tpu.memory_space<vmem>>, vector<1x32xf32>
    %28 = arith.mulf %26, %27 : vector<1x32xf32>
    %29 = vector.shape_cast %28 : vector<1x32xf32> to vector<1x1x32xf32>
    %30 = vector.broadcast %29 : vector<1x1x32xf32> to vector<8x8x32xf32>
    %31 = arith.mulf %13, %30 : vector<8x8x32xf32>
    %c0_23 = arith.constant 0 : index
    %c0_24 = arith.constant 0 : index
    %32 = vector.load %arg3[%c0_23, %c0_24] : memref<1x32xf32, #tpu.memory_space<vmem>>, vector<1x32xf32>
    %33 = vector.shape_cast %32 : vector<1x32xf32> to vector<1x1x32xf32>
    %34 = vector.broadcast %33 : vector<1x1x32xf32> to vector<8x8x32xf32>
    %35 = arith.addf %31, %34 : vector<8x8x32xf32>
    %36 = arith.negf %35 : vector<8x8x32xf32>
    %37 = math.exp %36 : vector<8x8x32xf32>
    %cst_25 = arith.constant 1.000000e+00 : f32
    %38 = vector.broadcast %cst_25 : f32 to vector<8x8x32xf32>
    %39 = arith.addf %38, %37 : vector<8x8x32xf32>
    %40 = arith.divf %38, %39 : vector<8x8x32xf32>
    %41 = arith.mulf %35, %40 : vector<8x8x32xf32>
    %42 = arith.truncf %41 : vector<8x8x32xf32> to vector<8x8x32xbf16>
    %cst_26 = arith.constant 0.000000e+00 : bf16
    %43 = vector.broadcast %cst_26 : bf16 to vector<17x32xbf16>
    %cst_27 = arith.constant 0.000000e+00 : bf16
    %44 = vector.broadcast %cst_27 : bf16 to vector<24x32xbf16>
    %cst_28 = arith.constant 0.000000e+00 : bf16
    %45 = vector.broadcast %cst_28 : bf16 to vector<8x32xbf16>
    %c0_29 = arith.constant 0 : index
    %c0_30 = arith.constant 0 : index
    %46 = vector.load %arg9[%c0_29, %c0_30] : memref<168x32xbf16, #tpu.memory_space<vmem>>, vector<17x32xbf16>
    tpu.vector_store %arg9[%c0_29, %c0_30], %43 {strides = array<i32>} : memref<168x32xbf16, #tpu.memory_space<vmem>>, vector<17x32xbf16>,
    %c144 = arith.constant 144 : index
    %c0_31 = arith.constant 0 : index
    %47 = vector.load %arg9[%c144, %c0_31] : memref<168x32xbf16, #tpu.memory_space<vmem>>, vector<24x32xbf16>
    tpu.vector_store %arg9[%c144, %c0_31], %44 {strides = array<i32>} : memref<168x32xbf16, #tpu.memory_space<vmem>>, vector<24x32xbf16>,
    %48 = vector.extract_strided_slice %42 {offsets = [0, 0, 0], sizes = [1, 8, 32], strides = [1, 1, 1]} : vector<8x8x32xbf16> to vector<1x8x32xbf16>
    %49 = vector.shape_cast %48 : vector<1x8x32xbf16> to vector<8x32xbf16>
    %c17 = arith.constant 17 : index
    %c0_32 = arith.constant 0 : index
    %50 = vector.load %arg9[%c17, %c0_32] : memref<168x32xbf16, #tpu.memory_space<vmem>>, vector<8x32xbf16>
    tpu.vector_store %arg9[%c17, %c0_32], %49 {strides = array<i32>} : memref<168x32xbf16, #tpu.memory_space<vmem>>, vector<8x32xbf16>,
    %c25 = arith.constant 25 : index
    %c0_33 = arith.constant 0 : index
    %51 = vector.load %arg9[%c25, %c0_33] : memref<168x32xbf16, #tpu.memory_space<vmem>>, vector<8x32xbf16>
    tpu.vector_store %arg9[%c25, %c0_33], %45 {strides = array<i32>} : memref<168x32xbf16, #tpu.memory_space<vmem>>, vector<8x32xbf16>,
    %52 = vector.extract_strided_slice %42 {offsets = [1, 0, 0], sizes = [1, 8, 32], strides = [1, 1, 1]} : vector<8x8x32xbf16> to vector<1x8x32xbf16>
    %53 = vector.shape_cast %52 : vector<1x8x32xbf16> to vector<8x32xbf16>
    %c33 = arith.constant 33 : index
    %c0_34 = arith.constant 0 : index
    %54 = vector.load %arg9[%c33, %c0_34] : memref<168x32xbf16, #tpu.memory_space<vmem>>, vector<8x32xbf16>
    tpu.vector_store %arg9[%c33, %c0_34], %53 {strides = array<i32>} : memref<168x32xbf16, #tpu.memory_space<vmem>>, vector<8x32xbf16>,
    %c41 = arith.constant 41 : index
    %c0_35 = arith.constant 0 : index
    %55 = vector.load %arg9[%c41, %c0_35] : memref<168x32xbf16, #tpu.memory_space<vmem>>, vector<8x32xbf16>
    tpu.vector_store %arg9[%c41, %c0_35], %45 {strides = array<i32>} : memref<168x32xbf16, #tpu.memory_space<vmem>>, vector<8x32xbf16>,
    %56 = vector.extract_strided_slice %42 {offsets = [2, 0, 0], sizes = [1, 8, 32], strides = [1, 1, 1]} : vector<8x8x32xbf16> to vector<1x8x32xbf16>
    %57 = vector.shape_cast %56 : vector<1x8x32xbf16> to vector<8x32xbf16>
    %c49 = arith.constant 49 : index
    %c0_36 = arith.constant 0 : index
    %58 = vector.load %arg9[%c49, %c0_36] : memref<168x32xbf16, #tpu.memory_space<vmem>>, vector<8x32xbf16>
    tpu.vector_store %arg9[%c49, %c0_36], %57 {strides = array<i32>} : memref<168x32xbf16, #tpu.memory_space<vmem>>, vector<8x32xbf16>,
    %c57 = arith.constant 57 : index
    %c0_37 = arith.constant 0 : index
    %59 = vector.load %arg9[%c57, %c0_37] : memref<168x32xbf16, #tpu.memory_space<vmem>>, vector<8x32xbf16>
    tpu.vector_store %arg9[%c57, %c0_37], %45 {strides = array<i32>} : memref<168x32xbf16, #tpu.memory_space<vmem>>, vector<8x32xbf16>,
    %60 = vector.extract_strided_slice %42 {offsets = [3, 0, 0], sizes = [1, 8, 32], strides = [1, 1, 1]} : vector<8x8x32xbf16> to vector<1x8x32xbf16>
    %61 = vector.shape_cast %60 : vector<1x8x32xbf16> to vector<8x32xbf16>
    %c65 = arith.constant 65 : index
    %c0_38 = arith.constant 0 : index
    %62 = vector.load %arg9[%c65, %c0_38] : memref<168x32xbf16, #tpu.memory_space<vmem>>, vector<8x32xbf16>
    tpu.vector_store %arg9[%c65, %c0_38], %61 {strides = array<i32>} : memref<168x32xbf16, #tpu.memory_space<vmem>>, vector<8x32xbf16>,
    %c73 = arith.constant 73 : index
    %c0_39 = arith.constant 0 : index
    %63 = vector.load %arg9[%c73, %c0_39] : memref<168x32xbf16, #tpu.memory_space<vmem>>, vector<8x32xbf16>
    tpu.vector_store %arg9[%c73, %c0_39], %45 {strides = array<i32>} : memref<168x32xbf16, #tpu.memory_space<vmem>>, vector<8x32xbf16>,
    %64 = vector.extract_strided_slice %42 {offsets = [4, 0, 0], sizes = [1, 8, 32], strides = [1, 1, 1]} : vector<8x8x32xbf16> to vector<1x8x32xbf16>
    %65 = vector.shape_cast %64 : vector<1x8x32xbf16> to vector<8x32xbf16>
    %c81 = arith.constant 81 : index
    %c0_40 = arith.constant 0 : index
    %66 = vector.load %arg9[%c81, %c0_40] : memref<168x32xbf16, #tpu.memory_space<vmem>>, vector<8x32xbf16>
    tpu.vector_store %arg9[%c81, %c0_40], %65 {strides = array<i32>} : memref<168x32xbf16, #tpu.memory_space<vmem>>, vector<8x32xbf16>,
    %c89 = arith.constant 89 : index
    %c0_41 = arith.constant 0 : index
    %67 = vector.load %arg9[%c89, %c0_41] : memref<168x32xbf16, #tpu.memory_space<vmem>>, vector<8x32xbf16>
    tpu.vector_store %arg9[%c89, %c0_41], %45 {strides = array<i32>} : memref<168x32xbf16, #tpu.memory_space<vmem>>, vector<8x32xbf16>,
    %68 = vector.extract_strided_slice %42 {offsets = [5, 0, 0], sizes = [1, 8, 32], strides = [1, 1, 1]} : vector<8x8x32xbf16> to vector<1x8x32xbf16>
    %69 = vector.shape_cast %68 : vector<1x8x32xbf16> to vector<8x32xbf16>
    %c97 = arith.constant 97 : index
    %c0_42 = arith.constant 0 : index
    %70 = vector.load %arg9[%c97, %c0_42] : memref<168x32xbf16, #tpu.memory_space<vmem>>, vector<8x32xbf16>
    tpu.vector_store %arg9[%c97, %c0_42], %69 {strides = array<i32>} : memref<168x32xbf16, #tpu.memory_space<vmem>>, vector<8x32xbf16>,
    %c105 = arith.constant 105 : index
    %c0_43 = arith.constant 0 : index
    %71 = vector.load %arg9[%c105, %c0_43] : memref<168x32xbf16, #tpu.memory_space<vmem>>, vector<8x32xbf16>
    tpu.vector_store %arg9[%c105, %c0_43], %45 {strides = array<i32>} : memref<168x32xbf16, #tpu.memory_space<vmem>>, vector<8x32xbf16>,
    %72 = vector.extract_strided_slice %42 {offsets = [6, 0, 0], sizes = [1, 8, 32], strides = [1, 1, 1]} : vector<8x8x32xbf16> to vector<1x8x32xbf16>
    %73 = vector.shape_cast %72 : vector<1x8x32xbf16> to vector<8x32xbf16>
    %c113 = arith.constant 113 : index
    %c0_44 = arith.constant 0 : index
    %74 = vector.load %arg9[%c113, %c0_44] : memref<168x32xbf16, #tpu.memory_space<vmem>>, vector<8x32xbf16>
    tpu.vector_store %arg9[%c113, %c0_44], %73 {strides = array<i32>} : memref<168x32xbf16, #tpu.memory_space<vmem>>, vector<8x32xbf16>,
    %c121 = arith.constant 121 : index
    %c0_45 = arith.constant 0 : index
    %75 = vector.load %arg9[%c121, %c0_45] : memref<168x32xbf16, #tpu.memory_space<vmem>>, vector<8x32xbf16>
    tpu.vector_store %arg9[%c121, %c0_45], %45 {strides = array<i32>} : memref<168x32xbf16, #tpu.memory_space<vmem>>, vector<8x32xbf16>,
    %76 = vector.extract_strided_slice %42 {offsets = [7, 0, 0], sizes = [1, 8, 32], strides = [1, 1, 1]} : vector<8x8x32xbf16> to vector<1x8x32xbf16>
    %77 = vector.shape_cast %76 : vector<1x8x32xbf16> to vector<8x32xbf16>
    %c129 = arith.constant 129 : index
    %c0_46 = arith.constant 0 : index
    %78 = vector.load %arg9[%c129, %c0_46] : memref<168x32xbf16, #tpu.memory_space<vmem>>, vector<8x32xbf16>
    tpu.vector_store %arg9[%c129, %c0_46], %77 {strides = array<i32>} : memref<168x32xbf16, #tpu.memory_space<vmem>>, vector<8x32xbf16>,
    %c137 = arith.constant 137 : index
    %c0_47 = arith.constant 0 : index
    %79 = vector.load %arg9[%c137, %c0_47] : memref<168x32xbf16, #tpu.memory_space<vmem>>, vector<8x32xbf16>
    tpu.vector_store %arg9[%c137, %c0_47], %45 {strides = array<i32>} : memref<168x32xbf16, #tpu.memory_space<vmem>>, vector<8x32xbf16>,
    %cst_48 = arith.constant 0.000000e+00 : f32
    %80 = vector.broadcast %cst_48 : f32 to vector<128x64xf32>
    %c0_49 = arith.constant 0 : index
    %c0_50 = arith.constant 0 : index
    %81 = vector.load %arg9[%c0_49, %c0_50] : memref<168x32xbf16, #tpu.memory_space<vmem>>, vector<128x32xbf16>
    %c0_51 = arith.constant 0 : index
    %c0_52 = arith.constant 0 : index
    %c0_53 = arith.constant 0 : index
    %c0_54 = arith.constant 0 : index
    %82 = vector.load %arg6[%c0_51, %c0_52, %c0_53, %c0_54] : memref<3x3x32x64xbf16, #tpu.memory_space<vmem>>, vector<1x1x32x64xbf16>
    %83 = vector.shape_cast %82 : vector<1x1x32x64xbf16> to vector<32x64xbf16>
    %cst_55 = arith.constant dense<0.000000e+00> : vector<128x64xf32>
    %84 = tpu.matmul %81, %83, %cst_55 {dimension_numbers = #tpu.dot_dimension_numbers<[1], [0], [0], [1], [0, 0, 1, 1], [], []>} : vector<128x32xbf16>, vector<32x64xbf16>, vector<128x64xf32> -> vector<128x64xf32>
    %85 = arith.addf %80, %84 : vector<128x64xf32>
    %c1 = arith.constant 1 : index
    %c0_56 = arith.constant 0 : index
    %86 = vector.load %arg9[%c1, %c0_56] : memref<168x32xbf16, #tpu.memory_space<vmem>>, vector<128x32xbf16>
    %c0_57 = arith.constant 0 : index
    %c1_58 = arith.constant 1 : index
    %c0_59 = arith.constant 0 : index
    %c0_60 = arith.constant 0 : index
    %87 = vector.load %arg6[%c0_57, %c1_58, %c0_59, %c0_60] : memref<3x3x32x64xbf16, #tpu.memory_space<vmem>>, vector<1x1x32x64xbf16>
    %88 = vector.shape_cast %87 : vector<1x1x32x64xbf16> to vector<32x64xbf16>
    %cst_61 = arith.constant dense<0.000000e+00> : vector<128x64xf32>
    %89 = tpu.matmul %86, %88, %cst_61 {dimension_numbers = #tpu.dot_dimension_numbers<[1], [0], [0], [1], [0, 0, 1, 1], [], []>} : vector<128x32xbf16>, vector<32x64xbf16>, vector<128x64xf32> -> vector<128x64xf32>
    %90 = arith.addf %85, %89 : vector<128x64xf32>
    %c2 = arith.constant 2 : index
    %c0_62 = arith.constant 0 : index
    %91 = vector.load %arg9[%c2, %c0_62] : memref<168x32xbf16, #tpu.memory_space<vmem>>, vector<128x32xbf16>
    %c0_63 = arith.constant 0 : index
    %c2_64 = arith.constant 2 : index
    %c0_65 = arith.constant 0 : index
    %c0_66 = arith.constant 0 : index
    %92 = vector.load %arg6[%c0_63, %c2_64, %c0_65, %c0_66] : memref<3x3x32x64xbf16, #tpu.memory_space<vmem>>, vector<1x1x32x64xbf16>
    %93 = vector.shape_cast %92 : vector<1x1x32x64xbf16> to vector<32x64xbf16>
    %cst_67 = arith.constant dense<0.000000e+00> : vector<128x64xf32>
    %94 = tpu.matmul %91, %93, %cst_67 {dimension_numbers = #tpu.dot_dimension_numbers<[1], [0], [0], [1], [0, 0, 1, 1], [], []>} : vector<128x32xbf16>, vector<32x64xbf16>, vector<128x64xf32> -> vector<128x64xf32>
    %95 = arith.addf %90, %94 : vector<128x64xf32>
    %c16 = arith.constant 16 : index
    %c0_68 = arith.constant 0 : index
    %96 = vector.load %arg9[%c16, %c0_68] : memref<168x32xbf16, #tpu.memory_space<vmem>>, vector<128x32xbf16>
    %c1_69 = arith.constant 1 : index
    %c0_70 = arith.constant 0 : index
    %c0_71 = arith.constant 0 : index
    %c0_72 = arith.constant 0 : index
    %97 = vector.load %arg6[%c1_69, %c0_70, %c0_71, %c0_72] : memref<3x3x32x64xbf16, #tpu.memory_space<vmem>>, vector<1x1x32x64xbf16>
    %98 = vector.shape_cast %97 : vector<1x1x32x64xbf16> to vector<32x64xbf16>
    %cst_73 = arith.constant dense<0.000000e+00> : vector<128x64xf32>
    %99 = tpu.matmul %96, %98, %cst_73 {dimension_numbers = #tpu.dot_dimension_numbers<[1], [0], [0], [1], [0, 0, 1, 1], [], []>} : vector<128x32xbf16>, vector<32x64xbf16>, vector<128x64xf32> -> vector<128x64xf32>
    %100 = arith.addf %95, %99 : vector<128x64xf32>
    %c17_74 = arith.constant 17 : index
    %c0_75 = arith.constant 0 : index
    %101 = vector.load %arg9[%c17_74, %c0_75] : memref<168x32xbf16, #tpu.memory_space<vmem>>, vector<128x32xbf16>
    %c1_76 = arith.constant 1 : index
    %c1_77 = arith.constant 1 : index
    %c0_78 = arith.constant 0 : index
    %c0_79 = arith.constant 0 : index
    %102 = vector.load %arg6[%c1_76, %c1_77, %c0_78, %c0_79] : memref<3x3x32x64xbf16, #tpu.memory_space<vmem>>, vector<1x1x32x64xbf16>
    %103 = vector.shape_cast %102 : vector<1x1x32x64xbf16> to vector<32x64xbf16>
    %cst_80 = arith.constant dense<0.000000e+00> : vector<128x64xf32>
    %104 = tpu.matmul %101, %103, %cst_80 {dimension_numbers = #tpu.dot_dimension_numbers<[1], [0], [0], [1], [0, 0, 1, 1], [], []>} : vector<128x32xbf16>, vector<32x64xbf16>, vector<128x64xf32> -> vector<128x64xf32>
    %105 = arith.addf %100, %104 : vector<128x64xf32>
    %c18 = arith.constant 18 : index
    %c0_81 = arith.constant 0 : index
    %106 = vector.load %arg9[%c18, %c0_81] : memref<168x32xbf16, #tpu.memory_space<vmem>>, vector<128x32xbf16>
    %c1_82 = arith.constant 1 : index
    %c2_83 = arith.constant 2 : index
    %c0_84 = arith.constant 0 : index
    %c0_85 = arith.constant 0 : index
    %107 = vector.load %arg6[%c1_82, %c2_83, %c0_84, %c0_85] : memref<3x3x32x64xbf16, #tpu.memory_space<vmem>>, vector<1x1x32x64xbf16>
    %108 = vector.shape_cast %107 : vector<1x1x32x64xbf16> to vector<32x64xbf16>
    %cst_86 = arith.constant dense<0.000000e+00> : vector<128x64xf32>
    %109 = tpu.matmul %106, %108, %cst_86 {dimension_numbers = #tpu.dot_dimension_numbers<[1], [0], [0], [1], [0, 0, 1, 1], [], []>} : vector<128x32xbf16>, vector<32x64xbf16>, vector<128x64xf32> -> vector<128x64xf32>
    %110 = arith.addf %105, %109 : vector<128x64xf32>
    %c32 = arith.constant 32 : index
    %c0_87 = arith.constant 0 : index
    %111 = vector.load %arg9[%c32, %c0_87] : memref<168x32xbf16, #tpu.memory_space<vmem>>, vector<128x32xbf16>
    %c2_88 = arith.constant 2 : index
    %c0_89 = arith.constant 0 : index
    %c0_90 = arith.constant 0 : index
    %c0_91 = arith.constant 0 : index
    %112 = vector.load %arg6[%c2_88, %c0_89, %c0_90, %c0_91] : memref<3x3x32x64xbf16, #tpu.memory_space<vmem>>, vector<1x1x32x64xbf16>
    %113 = vector.shape_cast %112 : vector<1x1x32x64xbf16> to vector<32x64xbf16>
    %cst_92 = arith.constant dense<0.000000e+00> : vector<128x64xf32>
    %114 = tpu.matmul %111, %113, %cst_92 {dimension_numbers = #tpu.dot_dimension_numbers<[1], [0], [0], [1], [0, 0, 1, 1], [], []>} : vector<128x32xbf16>, vector<32x64xbf16>, vector<128x64xf32> -> vector<128x64xf32>
    %115 = arith.addf %110, %114 : vector<128x64xf32>
    %c33_93 = arith.constant 33 : index
    %c0_94 = arith.constant 0 : index
    %116 = vector.load %arg9[%c33_93, %c0_94] : memref<168x32xbf16, #tpu.memory_space<vmem>>, vector<128x32xbf16>
    %c2_95 = arith.constant 2 : index
    %c1_96 = arith.constant 1 : index
    %c0_97 = arith.constant 0 : index
    %c0_98 = arith.constant 0 : index
    %117 = vector.load %arg6[%c2_95, %c1_96, %c0_97, %c0_98] : memref<3x3x32x64xbf16, #tpu.memory_space<vmem>>, vector<1x1x32x64xbf16>
    %118 = vector.shape_cast %117 : vector<1x1x32x64xbf16> to vector<32x64xbf16>
    %cst_99 = arith.constant dense<0.000000e+00> : vector<128x64xf32>
    %119 = tpu.matmul %116, %118, %cst_99 {dimension_numbers = #tpu.dot_dimension_numbers<[1], [0], [0], [1], [0, 0, 1, 1], [], []>} : vector<128x32xbf16>, vector<32x64xbf16>, vector<128x64xf32> -> vector<128x64xf32>
    %120 = arith.addf %115, %119 : vector<128x64xf32>
    %c34 = arith.constant 34 : index
    %c0_100 = arith.constant 0 : index
    %121 = vector.load %arg9[%c34, %c0_100] : memref<168x32xbf16, #tpu.memory_space<vmem>>, vector<128x32xbf16>
    %c2_101 = arith.constant 2 : index
    %c2_102 = arith.constant 2 : index
    %c0_103 = arith.constant 0 : index
    %c0_104 = arith.constant 0 : index
    %122 = vector.load %arg6[%c2_101, %c2_102, %c0_103, %c0_104] : memref<3x3x32x64xbf16, #tpu.memory_space<vmem>>, vector<1x1x32x64xbf16>
    %123 = vector.shape_cast %122 : vector<1x1x32x64xbf16> to vector<32x64xbf16>
    %cst_105 = arith.constant dense<0.000000e+00> : vector<128x64xf32>
    %124 = tpu.matmul %121, %123, %cst_105 {dimension_numbers = #tpu.dot_dimension_numbers<[1], [0], [0], [1], [0, 0, 1, 1], [], []>} : vector<128x32xbf16>, vector<32x64xbf16>, vector<128x64xf32> -> vector<128x64xf32>
    %125 = arith.addf %120, %124 : vector<128x64xf32>
    %126 = vector.shape_cast %125 : vector<128x64xf32> to vector<8x16x64xf32>
    %127 = vector.extract_strided_slice %126 {offsets = [0, 0, 0], sizes = [8, 8, 64], strides = [1, 1, 1]} : vector<8x16x64xf32> to vector<8x8x64xf32>
    %c0_106 = arith.constant 0 : index
    %c0_107 = arith.constant 0 : index
    %c0_108 = arith.constant 0 : index
    %128 = vector.load %arg7[%c0_106, %c0_107, %c0_108] : memref<1x1x64xf32, #tpu.memory_space<vmem>>, vector<1x1x64xf32>
    %129 = vector.shape_cast %128 : vector<1x1x64xf32> to vector<1x64xf32>
    %130 = vector.shape_cast %129 : vector<1x64xf32> to vector<1x1x64xf32>
    %131 = vector.broadcast %130 : vector<1x1x64xf32> to vector<8x8x64xf32>
    %132 = arith.addf %127, %131 : vector<8x8x64xf32>
    %133 = arith.truncf %132 : vector<8x8x64xf32> to vector<8x8x64xbf16>
    %c0_109 = arith.constant 0 : index
    %c0_110 = arith.constant 0 : index
    %c0_111 = arith.constant 0 : index
    %c0_112 = arith.constant 0 : index
    %134 = vector.load %arg8[%c0_109, %c0_110, %c0_111, %c0_112] : memref<1x8x8x64xbf16, #tpu.memory_space<vmem>>, vector<1x8x8x64xbf16>
    %135 = vector.shape_cast %134 : vector<1x8x8x64xbf16> to vector<8x8x64xbf16>
    %136 = vector.shape_cast %133 : vector<8x8x64xbf16> to vector<1x8x8x64xbf16>
    tpu.vector_store %arg8[%c0_109, %c0_110, %c0_111, %c0_112], %136 {strides = array<i32>} : memref<1x8x8x64xbf16, #tpu.memory_space<vmem>>, vector<1x8x8x64xbf16>,
    return
  }
  func.func @transform_0(%arg0: i32) -> (i32, i32, i32, i32) {
    %c0_i32 = arith.constant 0 : i32
    %c0_i32_0 = arith.constant 0 : i32
    %c0_i32_1 = arith.constant 0 : i32
    %c0_i32_2 = arith.constant 0 : i32
    return %arg0, %c0_i32, %c0_i32_0, %c0_i32_1 : i32, i32, i32, i32
  }
  func.func @transform_1(%arg0: i32) -> (i32, i32) {
    %c0_i32 = arith.constant 0 : i32
    %c0_i32_0 = arith.constant 0 : i32
    %c0_i32_1 = arith.constant 0 : i32
    return %c0_i32, %c0_i32_0 : i32, i32
  }
  func.func @transform_2(%arg0: i32) -> (i32, i32) {
    %c0_i32 = arith.constant 0 : i32
    %c0_i32_0 = arith.constant 0 : i32
    %c0_i32_1 = arith.constant 0 : i32
    return %c0_i32, %c0_i32_0 : i32, i32
  }
  func.func @transform_3(%arg0: i32) -> (i32, i32) {
    %c0_i32 = arith.constant 0 : i32
    %c0_i32_0 = arith.constant 0 : i32
    %c0_i32_1 = arith.constant 0 : i32
    return %c0_i32, %c0_i32_0 : i32, i32
  }
  func.func @transform_4(%arg0: i32) -> (i32, i32) {
    %c0_i32 = arith.constant 0 : i32
    %c0_i32_0 = arith.constant 0 : i32
    %c0_i32_1 = arith.constant 0 : i32
    return %c0_i32, %c0_i32_0 : i32, i32
  }
  func.func @transform_5(%arg0: i32) -> (i32, i32, i32, i32) {
    %c0_i32 = arith.constant 0 : i32
    %c0_i32_0 = arith.constant 0 : i32
    %c0_i32_1 = arith.constant 0 : i32
    %c0_i32_2 = arith.constant 0 : i32
    %c0_i32_3 = arith.constant 0 : i32
    return %c0_i32, %c0_i32_0, %c0_i32_1, %c0_i32_2 : i32, i32, i32, i32
  }
  func.func @transform_6(%arg0: i32) -> (i32, i32, i32) {
    %c0_i32 = arith.constant 0 : i32
    %c0_i32_0 = arith.constant 0 : i32
    %c0_i32_1 = arith.constant 0 : i32
    return %arg0, %c0_i32, %c0_i32_0 : i32, i32, i32
  }
  func.func @transform_7(%arg0: i32) -> (i32, i32, i32, i32) {
    %c0_i32 = arith.constant 0 : i32
    %c0_i32_0 = arith.constant 0 : i32
    %c0_i32_1 = arith.constant 0 : i32
    %c0_i32_2 = arith.constant 0 : i32
    return %arg0, %c0_i32, %c0_i32_0, %c0_i32_1 : i32, i32, i32, i32
  }
}

</mosaic_0001>

<llo_original>
// kernel: tpu_custom_call.1
$region0: #{tpu_custom_call.1}
  #allocation0 [shape = 'u32[]', space=smem, size = 0x4, offset = 0x4, fixed_abs, tag = 'smem constant byte address 0x4 - core index']
  #allocation1 [shape = 'u32[144,128]{1,0:T(1,128)}', space=vmem, size = 0x12000, scoped, tag = 'internal scratch']
  #allocation2 [shape = 'bf16[168,32]{1,0:T(8,128)(2,1)}', space=vmem, size = 0xa800, scoped, tag = 'scratch operand']
  %s0 = inlined_call_operand.hbm [shape: f32[2,8,8,32], index: 0, kind: input, shape index: {}]
  %s1 = inlined_call_operand.vmem [shape: f32[1,32], index: 1, kind: input, shape index: {}]
  %s2 = inlined_call_operand.vmem [shape: f32[1,32], index: 2, kind: input, shape index: {}]
  %s3 = inlined_call_operand.hbm [shape: f32[32,32], index: 3, kind: input, shape index: {}]
  %s4 = inlined_call_operand.hbm [shape: f32[32,32], index: 4, kind: input, shape index: {}]
  %s5 = inlined_call_operand.hbm [shape: bf16[3,3,32,64], index: 5, kind: input, shape index: {}]
  %s6 = inlined_call_operand.vmem [shape: f32[2,1,64], index: 6, kind: input, shape index: {}]
  %s7 = inlined_call_operand.hbm [shape: bf16[2,8,8,64], index: 7, kind: output, shape index: {}]
  %s8 = sld [smem:[#allocation0]]
  $region77: #{tpu_custom_call.1} parent=0
    _
  %s10 = ssub.s32 1, %s8
  %s11 = scalar_select 0, %s10, %s8
  $region1: #{tpu_custom_call.1} parent=0
    #allocation3 [shape = 'u8[65536]{0}', space=vmem, size = 0x10000, scoped, tag = 'input window, operand 0']
    #allocation4 [shape = 's32[2]{0}', space=sflag, size = 0x8, scoped, tag = 'scoped memory for tpu_custom_call.1']
    #allocation5 [shape = 's32[2]{0}', space=sflag, size = 0x8, scoped, tag = 'scoped memory for tpu_custom_call.1']
    #allocation6 [shape = 'u8[16384]{0}', space=vmem, size = 0x4000, scoped, tag = 'input window, operand 3, single buffered']
    #allocation7 [shape = 's32[1]{0}', space=sflag, size = 0x4, scoped, tag = 'scoped memory for tpu_custom_call.1']
    #allocation8 [shape = 'u8[16384]{0}', space=vmem, size = 0x4000, scoped, tag = 'input window, operand 4, single buffered']
    #allocation9 [shape = 'u8[73728]{0}', space=vmem, size = 0x12000, scoped, tag = 'input window, operand 5, single buffered']
    #allocation10 [shape = 's32[1]{0}', space=sflag, size = 0x4, scoped, tag = 'scoped memory for tpu_custom_call.1']
    #allocation11 [shape = 'u8[32768]{0}', space=vmem, size = 0x8000, scoped, tag = 'output window, operand 0']
    %12 = vsyncpa [#allocation4], 0
    %s13 = scalar_lea.sflag [#allocation4], 1
    %14 = vsyncpa %s13, 0
    %15 = vsyncpa [#allocation7], 0
    %16 = vsyncpa [#allocation10], 0
    %17 = vsyncpa [#allocation5], 0
    %s18 = scalar_lea.sflag [#allocation5], 1
    %19 = vsyncpa %s18, 0
    loop: start=0, step=1, limit=4
    $region2: #{tpu_custom_call.1} parent=1 // loop_pre_header
      _
    $region3: #{tpu_custom_call.1} parent=1 // loop_header
      %s21 = sphi 0, %s25
      %p22 = scmp.ge.s32.totalorder %s21, 4
      %s31 = sphi 0, %s33
      %s34 = sphi 0, %s31
      %s35 = sphi 0, %s34
      %s51 = sphi 0, %s35
      %s55 = sphi 0, %s55
      %s57 = sphi 0, %s55
      %s58 = sphi 0, %s57
      %s72 = sphi 0, %s58
      %s76 = sphi 0, %s76
      %s78 = sphi 0, %s76
      %s79 = sphi 0, %s78
      %s93 = sphi 0, %s79
      %s97 = sphi 0, %s97
      %s99 = sphi 0, %s97
      %s100 = sphi 0, %s99
      %s114 = sphi 0, %s100
      %s118 = sphi 0, %s118
      %s120 = sphi 0, %s118
      %s121 = sphi 0, %s120
      %s135 = sphi 0, %s121
      %s139 = sphi 0, %s139
      %s141 = sphi 0, %s139
      %s142 = sphi 0, %s141
      %s156 = sphi 0, %s142
      %s162 = sphi 0, %s164
      %s165 = sphi 0, %s162
      %s166 = sphi 0, %s165
      %s182 = sphi 0, %s166
      %s188 = sphi 0, %s190
      %s191 = sphi 0, %s188
      %s192 = sphi 0, %s191
      %s208 = sphi 0, %s192
    $region4: #{tpu_custom_call.1} parent=1 // loop_header_branch
      %24 = sbr.rel (%p22) target = $region8
    $region5: #{tpu_custom_call.1} parent=1 // loop_body
      %s26 = ssub.s32 %s21, 1
      %s27 = ssub.s32 %s21, 2
      %s28 = sadd.s32 %s21, 1
      %s29 = ssub.s32 %s21, %s28
      %p30 = scmp.eq.s32.totalorder %s29, 0
      %s32 = sadd.s32 %s31, 1
      %s33 = scalar_select %p30, %s31, %s32
      %p36 = pneg %p30
      %p37 = scmp.eq.s32.totalorder %s21, 1
      %p38 = por %p36, %p37
      %p39 = scmp.ne.s32.totalorder %s31, %s34
      %p40 = scmp.eq.s32.totalorder %s21, 0
      %p41 = por %p39, %p40
      %p42 = scmp.ne.s32.totalorder %s31, %s34
      %p43 = scmp.eq.s32.totalorder %s26, 1
      %p44 = por %p42, %p43
      %p45 = scmp.ne.s32.totalorder %s34, %s35
      %p46 = scmp.eq.s32.totalorder %s26, 0
      %p47 = por %p45, %p46
      %p48 = scmp.ne.s32.totalorder %s34, %s35
      %p49 = scmp.eq.s32.totalorder %s27, 1
      %p50 = por %p48, %p49
      %p52 = scmp.ne.s32.totalorder %s35, %s51
      %p53 = scmp.eq.s32.totalorder %s27, 0
      %p54 = por %p52, %p53
      %s56 = sadd.s32 %s55, 1
      %p59 = scmp.eq.s32.totalorder %s21, 1
      %p60 = scmp.ne.s32.totalorder %s55, %s57
      %p61 = scmp.eq.s32.totalorder %s21, 0
      %p62 = por %p60, %p61
      %p63 = scmp.ne.s32.totalorder %s55, %s57
      %p64 = scmp.eq.s32.totalorder %s26, 1
      %p65 = por %p63, %p64
      %p66 = scmp.ne.s32.totalorder %s57, %s58
      %p67 = scmp.eq.s32.totalorder %s26, 0
      %p68 = por %p66, %p67
      %p69 = scmp.ne.s32.totalorder %s57, %s58
      %p70 = scmp.eq.s32.totalorder %s27, 1
      %p71 = por %p69, %p70
      %p73 = scmp.ne.s32.totalorder %s58, %s72
      %p74 = scmp.eq.s32.totalorder %s27, 0
      %p75 = por %p73, %p74
      %s77 = sadd.s32 %s76, 1
      %p80 = scmp.eq.s32.totalorder %s21, 1
      %p81 = scmp.ne.s32.totalorder %s76, %s78
      %p82 = scmp.eq.s32.totalorder %s21, 0
      %p83 = por %p81, %p82
      %p84 = scmp.ne.s32.totalorder %s76, %s78
      %p85 = scmp.eq.s32.totalorder %s26, 1
      %p86 = por %p84, %p85
      %p87 = scmp.ne.s32.totalorder %s78, %s79
      %p88 = scmp.eq.s32.totalorder %s26, 0
      %p89 = por %p87, %p88
      %p90 = scmp.ne.s32.totalorder %s78, %s79
      %p91 = scmp.eq.s32.totalorder %s27, 1
      %p92 = por %p90, %p91
      %p94 = scmp.ne.s32.totalorder %s79, %s93
      %p95 = scmp.eq.s32.totalorder %s27, 0
      %p96 = por %p94, %p95
      %s98 = sadd.s32 %s97, 1
      %p101 = scmp.eq.s32.totalorder %s21, 1
      %p102 = scmp.ne.s32.totalorder %s97, %s99
      %p103 = scmp.eq.s32.totalorder %s21, 0
      %p104 = por %p102, %p103
      %p105 = scmp.ne.s32.totalorder %s97, %s99
      %p106 = scmp.eq.s32.totalorder %s26, 1
      %p107 = por %p105, %p106
      %p108 = scmp.ne.s32.totalorder %s99, %s100
      %p109 = scmp.eq.s32.totalorder %s26, 0
      %p110 = por %p108, %p109
      %p111 = scmp.ne.s32.totalorder %s99, %s100
      %p112 = scmp.eq.s32.totalorder %s27, 1
      %p113 = por %p111, %p112
      %p115 = scmp.ne.s32.totalorder %s100, %s114
      %p116 = scmp.eq.s32.totalorder %s27, 0
      %p117 = por %p115, %p116
      %s119 = sadd.s32 %s118, 1
      %p122 = scmp.eq.s32.totalorder %s21, 1
      %p123 = scmp.ne.s32.totalorder %s118, %s120
      %p124 = scmp.eq.s32.totalorder %s21, 0
      %p125 = por %p123, %p124
      %p126 = scmp.ne.s32.totalorder %s118, %s120
      %p127 = scmp.eq.s32.totalorder %s26, 1
      %p128 = por %p126, %p127
      %p129 = scmp.ne.s32.totalorder %s120, %s121
      %p130 = scmp.eq.s32.totalorder %s26, 0
      %p131 = por %p129, %p130
      %p132 = scmp.ne.s32.totalorder %s120, %s121
      %p133 = scmp.eq.s32.totalorder %s27, 1
      %p134 = por %p132, %p133
      %p136 = scmp.ne.s32.totalorder %s121, %s135
      %p137 = scmp.eq.s32.totalorder %s27, 0
      %p138 = por %p136, %p137
      %s140 = sadd.s32 %s139, 1
      %p143 = scmp.eq.s32.totalorder %s21, 1
      %p144 = scmp.ne.s32.totalorder %s139, %s141
      %p145 = scmp.eq.s32.totalorder %s21, 0
      %p146 = por %p144, %p145
      %p147 = scmp.ne.s32.totalorder %s139, %s141
      %p148 = scmp.eq.s32.totalorder %s26, 1
      %p149 = por %p147, %p148
      %p150 = scmp.ne.s32.totalorder %s141, %s142
      %p151 = scmp.eq.s32.totalorder %s26, 0
      %p152 = por %p150, %p151
      %p153 = scmp.ne.s32.totalorder %s141, %s142
      %p154 = scmp.eq.s32.totalorder %s27, 1
      %p155 = por %p153, %p154
      %p157 = scmp.ne.s32.totalorder %s142, %s156
      %p158 = scmp.eq.s32.totalorder %s27, 0
      %p159 = por %p157, %p158
      %s160 = ssub.s32 %s21, %s28
      %p161 = scmp.eq.s32.totalorder %s160, 0
      %s163 = sadd.s32 %s162, 1
      %s164 = scalar_select %p161, %s162, %s163
      %p167 = pneg %p161
      %p168 = scmp.eq.s32.totalorder %s21, 1
      %p169 = por %p167, %p168
      %p170 = scmp.ne.s32.totalorder %s162, %s165
      %p171 = scmp.eq.s32.totalorder %s21, 0
      %p172 = por %p170, %p171
      %p173 = scmp.ne.s32.totalorder %s162, %s165
      %p174 = scmp.eq.s32.totalorder %s26, 1
      %p175 = por %p173, %p174
      %p176 = scmp.ne.s32.totalorder %s165, %s166
      %p177 = scmp.eq.s32.totalorder %s26, 0
      %p178 = por %p176, %p177
      %p179 = scmp.ne.s32.totalorder %s165, %s166
      %p180 = scmp.eq.s32.totalorder %s27, 1
      %p181 = por %p179, %p180
      %p183 = scmp.ne.s32.totalorder %s166, %s182
      %p184 = scmp.eq.s32.totalorder %s27, 0
      %p185 = por %p183, %p184
      %s186 = ssub.s32 %s21, %s28
      %p187 = scmp.eq.s32.totalorder %s186, 0
      %s189 = sadd.s32 %s188, 1
      %s190 = scalar_select %p187, %s188, %s189
      %p193 = pneg %p187
      %p194 = scmp.eq.s32.totalorder %s21, 1
      %p195 = por %p193, %p194
      %p196 = scmp.ne.s32.totalorder %s188, %s191
      %p197 = scmp.eq.s32.totalorder %s21, 0
      %p198 = por %p196, %p197
      %p199 = scmp.ne.s32.totalorder %s188, %s191
      %p200 = scmp.eq.s32.totalorder %s26, 1
      %p201 = por %p199, %p200
      %p202 = scmp.ne.s32.totalorder %s191, %s192
      %p203 = scmp.eq.s32.totalorder %s26, 0
      %p204 = por %p202, %p203
      %p205 = scmp.ne.s32.totalorder %s191, %s192
      %p206 = scmp.eq.s32.totalorder %s27, 1
      %p207 = por %p205, %p206
      %p209 = scmp.ne.s32.totalorder %s192, %s208
      %p210 = scmp.eq.s32.totalorder %s27, 0
      %p211 = por %p209, %p210
      %p212 = scmp.le.s32.totalorder 1, %s21
      %p213 = scmp.lt.s32.totalorder %s21, 3
      %p214 = pnand %p212, %p213
      %p215 = pneg %p214
      // Predicated region
      $region9: #{tpu_custom_call.1} parent=5 // pred_check
        _
      $region10: #{tpu_custom_call.1} parent=5 // pred_check_branch
        %217 = sbr.rel (%p214) target = $region12
      $region11: #{tpu_custom_call.1} parent=5 // pred_region
        %s218 = ssub.s32 %s21, 1
        // Predicated region
        $region13: #{tpu_custom_call.1} parent=11 // pred_check
          %p219 = pneg %p68
        $region14: #{tpu_custom_call.1} parent=11 // pred_check_branch
          %221 = sbr.rel (%p219) target = $region16
        $region15: #{tpu_custom_call.1} parent=11 // pred_region
          _
        $region16: #{tpu_custom_call.1} parent=11 // pred_fallthru
          _
        // Predicated region
        $region17: #{tpu_custom_call.1} parent=11 // pred_check
          %p222 = pneg %p89
        $region18: #{tpu_custom_call.1} parent=11 // pred_check_branch
          %224 = sbr.rel (%p222) target = $region20
        $region19: #{tpu_custom_call.1} parent=11 // pred_region
          _
        $region20: #{tpu_custom_call.1} parent=11 // pred_fallthru
          _
        // Predicated region
        $region21: #{tpu_custom_call.1} parent=11 // pred_check
          %p225 = pneg %p110
        $region22: #{tpu_custom_call.1} parent=11 // pred_check_branch
          %227 = sbr.rel (%p225) target = $region24
        $region23: #{tpu_custom_call.1} parent=11 // pred_region
          %s229 = ssub.s32 512, 512
          %230 = vsyncadd [#allocation7], %s229
          %s231 = sshll.u32 [#allocation6], 4
          %s232 = int_to_ptr.vmem [resolvable:$true] %s231
          %237 = dma.hbm_to_vmem [thread:$0]  %s3, 512, %s232, [#allocation7], 128, 128, 8
        $region24: #{tpu_custom_call.1} parent=11 // pred_fallthru
          _
        // Predicated region
        $region25: #{tpu_custom_call.1} parent=11 // pred_check
          %p238 = pneg %p131
        $region26: #{tpu_custom_call.1} parent=11 // pred_check_branch
          %240 = sbr.rel (%p238) target = $region28
        $region27: #{tpu_custom_call.1} parent=11 // pred_region
          %s242 = ssub.s32 512, 512
          %243 = vsyncadd [#allocation7], %s242
          %s244 = sshll.u32 [#allocation8], 4
          %s245 = int_to_ptr.vmem [resolvable:$true] %s244
          %250 = dma.hbm_to_vmem [thread:$0]  %s4, 512, %s245, [#allocation7], 128, 128, 8
        $region28: #{tpu_custom_call.1} parent=11 // pred_fallthru
          _
        // Predicated region
        $region29: #{tpu_custom_call.1} parent=11 // pred_check
          %p251 = pneg %p152
        $region30: #{tpu_custom_call.1} parent=11 // pred_check_branch
          %253 = sbr.rel (%p251) target = $region32
        $region31: #{tpu_custom_call.1} parent=11 // pred_region
          %s255 = ssub.s32 2304, 2304
          %256 = vsyncadd [#allocation10], %s255
          %s257 = sshll.u32 [#allocation9], 4
          %s258 = int_to_ptr.vmem [resolvable:$true] %s257
          %263 = dma.hbm_to_vmem [thread:$0]  %s5, 2304, %s258, [#allocation10], 64, 64, 4
        $region32: #{tpu_custom_call.1} parent=11 // pred_fallthru
          _
      $region12: #{tpu_custom_call.1} parent=5 // pred_fallthru
        _
      %p264 = scmp.lt.s32.totalorder %s21, 2
      // Predicated region
      $region33: #{tpu_custom_call.1} parent=5 // pred_check
        %p265 = pneg %p264
      $region34: #{tpu_custom_call.1} parent=5 // pred_check_branch
        %267 = sbr.rel (%p265) target = $region36
      $region35: #{tpu_custom_call.1} parent=5 // pred_region
        // Predicated region
        $region37: #{tpu_custom_call.1} parent=35 // pred_check
          %p268 = pneg %p41
        $region38: #{tpu_custom_call.1} parent=35 // pred_check_branch
          %270 = sbr.rel (%p268) target = $region40
        $region39: #{tpu_custom_call.1} parent=35 // pred_region
          %s271 = sand.u32 %s31, 1
          %s272 = scalar_lea.sflag [#allocation4], %s271
          %s273 = sand.u32 %s31, 1
          %s274 = smul.addr %s273, 64
          %s275 = scalar_lea.vmem [#allocation3], %s274
          %s277 = ssub.s32 1024, 1024
          %278 = vsyncadd %s272, %s277
          %s279 = smul.addr %s21, 8
          %s280 = smul.addr %s279, 128
          %s281 = scalar_lea.hbm %s0, %s280
          %s282 = sshll.u32 %s275, 4
          %s283 = int_to_ptr.vmem [resolvable:$true] %s282
          %288 = dma.hbm_to_vmem [thread:$0]  %s281, 1024, %s283, %s272, 128, 128, 8
        $region40: #{tpu_custom_call.1} parent=35 // pred_fallthru
          _
        // Predicated region
        $region41: #{tpu_custom_call.1} parent=35 // pred_check
          %p289 = pneg %p172
        $region42: #{tpu_custom_call.1} parent=35 // pred_check_branch
          %291 = sbr.rel (%p289) target = $region44
        $region43: #{tpu_custom_call.1} parent=35 // pred_region
          %p292 = scmp.lt.s32.totalorder %s21, 1
          %s293 = scalar_select %p292, %s21, 1
          %s294 = scalar_lea.vmem %s6, %s293
        $region44: #{tpu_custom_call.1} parent=35 // pred_fallthru
          _
      $region36: #{tpu_custom_call.1} parent=5 // pred_fallthru
        _
      %p295 = scmp.le.s32.totalorder 1, %s21
      %p296 = scmp.lt.s32.totalorder %s21, 3
      %p297 = pnand %p295, %p296
      %p298 = pneg %p297
      // Predicated region
      $region45: #{tpu_custom_call.1} parent=5 // pred_check
        _
      $region46: #{tpu_custom_call.1} parent=5 // pred_check_branch
        %300 = sbr.rel (%p297) target = $region48
      $region47: #{tpu_custom_call.1} parent=5 // pred_region
        %s301 = ssub.s32 %s21, 1
        %s302 = sand.u32 %s34, 1
        %s303 = scalar_lea.sflag [#allocation4], %s302
        %s304 = sand.u32 %s34, 1
        %s305 = smul.addr %s304, 64
        %s306 = scalar_lea.vmem [#allocation3], %s305
        // Predicated region
        $region49: #{tpu_custom_call.1} parent=47 // pred_check
          %p307 = pneg %p47
        $region50: #{tpu_custom_call.1} parent=47 // pred_check_branch
          %309 = sbr.rel (%p307) target = $region52
        $region51: #{tpu_custom_call.1} parent=47 // pred_region
          %310 = dma.done %s303, 1024
        $region52: #{tpu_custom_call.1} parent=47 // pred_fallthru
          _
        // Predicated region
        $region53: #{tpu_custom_call.1} parent=47 // pred_check
          %p311 = pneg %p110
        $region54: #{tpu_custom_call.1} parent=47 // pred_check_branch
          %313 = sbr.rel (%p311) target = $region56
        $region55: #{tpu_custom_call.1} parent=47 // pred_region
          %314 = dma.done [#allocation7], 512
        $region56: #{tpu_custom_call.1} parent=47 // pred_fallthru
          _
        // Predicated region
        $region57: #{tpu_custom_call.1} parent=47 // pred_check
          %p315 = pneg %p131
        $region58: #{tpu_custom_call.1} parent=47 // pred_check_branch
          %317 = sbr.rel (%p315) target = $region60
        $region59: #{tpu_custom_call.1} parent=47 // pred_region
          %318 = dma.done [#allocation7], 512
        $region60: #{tpu_custom_call.1} parent=47 // pred_fallthru
          _
        // Predicated region
        $region61: #{tpu_custom_call.1} parent=47 // pred_check
          %p319 = pneg %p152
        $region62: #{tpu_custom_call.1} parent=47 // pred_check_branch
          %321 = sbr.rel (%p319) target = $region64
        $region63: #{tpu_custom_call.1} parent=47 // pred_region
          %322 = dma.done [#allocation10], 2304
        $region64: #{tpu_custom_call.1} parent=47 // pred_fallthru
          _
        %s323 = sand.u32 %s34, 1
        %s324 = scalar_lea.sflag [#allocation4], %s323
        %s325 = sand.u32 %s34, 1
        %s326 = smul.addr %s325, 64
        %s327 = scalar_lea.vmem [#allocation3], %s326
        %p328 = pneg %p47
        %p329 = pneg %p44
        %p330 = pneg %p68
        %p331 = pneg %p65
        %p332 = pneg %p89
        %p333 = pneg %p86
        %p334 = pneg %p110
        %p335 = pneg %p107
        %p336 = pneg %p131
        %p337 = pneg %p128
        %p338 = pneg %p152
        %p339 = pneg %p149
        %p340 = scmp.lt.s32.totalorder %s26, 1
        %s341 = scalar_select %p340, %s26, 1
        %s342 = scalar_lea.vmem %s6, %s341
        %p343 = pneg %p178
        %p344 = pneg %p175
        %p345 = pneg %p204
        %p346 = pneg %p201
        %s347 = sand.u32 %s191, 1
        %s348 = scalar_lea.sflag [#allocation5], %s347
        %s349 = sand.u32 %s191, 1
        %s350 = smul.addr %s349, 32
        %s351 = scalar_lea.vmem [#allocation11], %s350
        %p352 = scmp.lt.s32.totalorder %s26, 1
        %s353 = scalar_select %p352, %s26, 1
        %s354 = scalar_lea.vmem %s6, %s353
        %v356 = vld [vmem:[%s306] sm:$0xff]
        %v357 = vld [vmem:[%s306 + $0x8] sm:$0xff]
        %v358 = vld [vmem:[%s306 + $0x10] sm:$0xff]
        %v359 = vld [vmem:[%s306 + $0x18] sm:$0xff]
        %v360 = vld [vmem:[%s306 + $0x20] sm:$0xff]
        %v361 = vld [vmem:[%s306 + $0x28] sm:$0xff]
        %v362 = vld [vmem:[%s306 + $0x30] sm:$0xff]
        %v363 = vld [vmem:[%s306 + $0x38] sm:$0xff]
        %vm364 = vcmask 261120
        %v365 = vsel %vm364, %v356, 0.0
        %v366 = vsel %vm364, %v357, 0.0
        %v367 = vadd.f32 %v365, %v366
        %v368 = vsel %vm364, %v358, 0.0
        %v369 = vadd.f32 %v367, %v368
        %v370 = vsel %vm364, %v359, 0.0
        %v371 = vadd.f32 %v369, %v370
        %v372 = vsel %vm364, %v360, 0.0
        %v373 = vadd.f32 %v371, %v372
        %v374 = vsel %vm364, %v361, 0.0
        %v375 = vadd.f32 %v373, %v374
        %v376 = vsel %vm364, %v362, 0.0
        %v377 = vadd.f32 %v375, %v376
        %v378 = vsel %vm364, %v363, 0.0
        %v379 = vadd.f32 %v377, %v378
        %v380 = vsel %vm364, %v379, 0.0
        %v381 = vrot.slane %v380, 4
        %v382 = vadd.f32 %v380, %v381
        %v383 = vrot.slane %v382, 2
        %v384 = vadd.f32 %v382, %v383
        %v385 = vrot.slane %v384, 1
        %v386 = vadd.f32 %v384, %v385
        %v387 = vmul.f32 %v386, 0.015625
        %v388 = vld [vmem:[#allocation6] sm:$0xff]
        %v389 = vld [vmem:[#allocation6 + $0x8] sm:$0xff]
        %v390 = vld [vmem:[#allocation6 + $0x10] sm:$0xff]
        %v391 = vld [vmem:[#allocation6 + $0x18] sm:$0xff]
        %v393 = vsel %vm364, %v387, 0
        %395 = vmatprep.subr.mxu0 0.0
        %396 = vmatpush1.msra.mxu0 %v388
        %397 = vmatprep.subr.mxu0 0.0
        %398 = vmatpush1.msra.mxu0 %v389
        %399 = vmatprep.subr.mxu0 0.0
        %400 = vmatpush1.msra.mxu0 %v390
        %401 = vmatprep.subr.mxu0 0.0
        %402 = vmatpush1.msra.mxu0 %v391
        %403 = vmatprep.subr.mxu0 0.0
        %404 = vmatpush1.msra.mxu0 0.0
        %405 = vmatprep.subr.mxu0 0.0
        %406 = vmatpush1.msra.mxu0 0.0
        %407 = vmatprep.subr.mxu0 0.0
        %408 = vmatpush1.msra.mxu0 0.0
        %409 = vmatprep.subr.mxu0 0.0
        %410 = vmatpush1.msra.mxu0 0.0
        %411 = vmatprep.subr.mxu0 0.0
        %412 = vmatpush1.msra.mxu0 0.0
        %413 = vmatprep.subr.mxu0 0.0
        %414 = vmatpush1.msra.mxu0 0.0
        %415 = vmatprep.subr.mxu0 0.0
        %416 = vmatpush1.msra.mxu0 0.0
        %417 = vmatprep.subr.mxu0 0.0
        %418 = vmatpush1.msra.mxu0 0.0
        %419 = vmatprep.subr.mxu0 0.0
        %420 = vmatpush1.msra.mxu0 0.0
        %421 = vmatprep.subr.mxu0 0.0
        %422 = vmatpush1.msra.mxu0 0.0
        %423 = vmatprep.subr.mxu0 0.0
        %424 = vmatpush1.msra.mxu0 0.0
        %425 = vmatprep.subr.mxu0 0.0
        %426 = vmatpush1.msra.mxu0 0.0
        %427 = vmatprep.subr.mxu0 0.0
        %428 = vmatpush1.msra.mxu0 0.0
        %429 = vmatprep.subr.mxu0 0.0
        %430 = vmatpush1.msra.mxu0 0.0
        %431 = vmatprep.subr.mxu0 0.0
        %432 = vmatpush1.msra.mxu0 0.0
        %433 = vmatprep.subr.mxu0 0.0
        %434 = vmatpush1.msra.mxu0 0.0
        %435 = vmatprep.subr.mxu0 0.0
        %436 = vmatpush1.msra.mxu0 0.0
        %437 = vmatprep.subr.mxu0 0.0
        %438 = vmatpush1.msra.mxu0 0.0
        %439 = vmatprep.subr.mxu0 0.0
        %440 = vmatpush1.msra.mxu0 0.0
        %441 = vmatprep.subr.mxu0 0.0
        %442 = vmatpush1.msra.mxu0 0.0
        %443 = vmatprep.subr.mxu0 0.0
        %444 = vmatpush1.msra.mxu0 0.0
        %445 = vmatprep.subr.mxu0 0.0
        %446 = vmatpush1.msra.mxu0 0.0
        %447 = vmatprep.subr.mxu0 0.0
        %448 = vmatpush1.msra.mxu0 0.0
        %449 = vmatprep.subr.mxu0 0.0
        %450 = vmatpush1.msra.mxu0 0.0
        %451 = vmatprep.subr.mxu0 0.0
        %452 = vmatpush1.msra.mxu0 0.0
        %453 = vmatprep.subr.mxu0 0.0
        %454 = vmatpush1.msra.mxu0 0.0
        %455 = vmatprep.subr.mxu0 0.0
        %456 = vmatpush1.msra.mxu0 0.0
        %457 = vmatprep.subr.mxu0 0.0
        %458 = vmatpush1.msra.mxu0 0.0
        %459 = vmatprep.mubr.f32.mxu0 0.0
        %460 = vmatmul.mubr.f32.gmra.mrb[0].mxu0 %v393
        %v461 = vpop.f32.mrb[0].mxu0
        %v462 = vadd.f32 0.0, %v461
        %v463 = vpop.f32.mrb[0].mxu0
        %464 = vdwg.mxu0
        %v465 = vld [vmem:[#allocation8] sm:$0xff]
        %v466 = vld [vmem:[#allocation8 + $0x8] sm:$0xff]
        %v467 = vld [vmem:[#allocation8 + $0x10] sm:$0xff]
        %v468 = vld [vmem:[#allocation8 + $0x18] sm:$0xff]
        %v470 = vsel %vm364, %v462, 0
        %472 = vmatprep.subr.mxu0 0.0
        %473 = vmatpush1.msra.mxu0 %v465
        %474 = vmatprep.subr.mxu0 0.0
        %475 = vmatpush1.msra.mxu0 %v466
        %476 = vmatprep.subr.mxu0 0.0
        %477 = vmatpush1.msra.mxu0 %v467
        %478 = vmatprep.subr.mxu0 0.0
        %479 = vmatpush1.msra.mxu0 %v468
        %480 = vmatprep.subr.mxu0 0.0
        %481 = vmatpush1.msra.mxu0 0.0
        %482 = vmatprep.subr.mxu0 0.0
        %483 = vmatpush1.msra.mxu0 0.0
        %484 = vmatprep.subr.mxu0 0.0
        %485 = vmatpush1.msra.mxu0 0.0
        %486 = vmatprep.subr.mxu0 0.0
        %487 = vmatpush1.msra.mxu0 0.0
        %488 = vmatprep.subr.mxu0 0.0
        %489 = vmatpush1.msra.mxu0 0.0
        %490 = vmatprep.subr.mxu0 0.0
        %491 = vmatpush1.msra.mxu0 0.0
        %492 = vmatprep.subr.mxu0 0.0
        %493 = vmatpush1.msra.mxu0 0.0
        %494 = vmatprep.subr.mxu0 0.0
        %495 = vmatpush1.msra.mxu0 0.0
        %496 = vmatprep.subr.mxu0 0.0
        %497 = vmatpush1.msra.mxu0 0.0
        %498 = vmatprep.subr.mxu0 0.0
        %499 = vmatpush1.msra.mxu0 0.0
        %500 = vmatprep.subr.mxu0 0.0
        %501 = vmatpush1.msra.mxu0 0.0
        %502 = vmatprep.subr.mxu0 0.0
        %503 = vmatpush1.msra.mxu0 0.0
        %504 = vmatprep.subr.mxu0 0.0
        %505 = vmatpush1.msra.mxu0 0.0
        %506 = vmatprep.subr.mxu0 0.0
        %507 = vmatpush1.msra.mxu0 0.0
        %508 = vmatprep.subr.mxu0 0.0
        %509 = vmatpush1.msra.mxu0 0.0
        %510 = vmatprep.subr.mxu0 0.0
        %511 = vmatpush1.msra.mxu0 0.0
        %512 = vmatprep.subr.mxu0 0.0
        %513 = vmatpush1.msra.mxu0 0.0
        %514 = vmatprep.subr.mxu0 0.0
        %515 = vmatpush1.msra.mxu0 0.0
        %516 = vmatprep.subr.mxu0 0.0
        %517 = vmatpush1.msra.mxu0 0.0
        %518 = vmatprep.subr.mxu0 0.0
        %519 = vmatpush1.msra.mxu0 0.0
        %520 = vmatprep.subr.mxu0 0.0
        %521 = vmatpush1.msra.mxu0 0.0
        %522 = vmatprep.subr.mxu0 0.0
        %523 = vmatpush1.msra.mxu0 0.0
        %524 = vmatprep.subr.mxu0 0.0
        %525 = vmatpush1.msra.mxu0 0.0
        %526 = vmatprep.subr.mxu0 0.0
        %527 = vmatpush1.msra.mxu0 0.0
        %528 = vmatprep.subr.mxu0 0.0
        %529 = vmatpush1.msra.mxu0 0.0
        %530 = vmatprep.subr.mxu0 0.0
        %531 = vmatpush1.msra.mxu0 0.0
        %532 = vmatprep.subr.mxu0 0.0
        %533 = vmatpush1.msra.mxu0 0.0
        %534 = vmatprep.subr.mxu0 0.0
        %535 = vmatpush1.msra.mxu0 0.0
        %536 = vmatprep.mubr.f32.mxu0 0.0
        %537 = vmatmul.mubr.f32.gmra.mrb[0].mxu0 %v470
        %v538 = vpop.f32.mrb[0].mxu0
        %v539 = vadd.f32 0.0, %v538
        %v540 = vpop.f32.mrb[0].mxu0
        %541 = vdwg.mxu0
        %v542 = vlaneseq
        %v543 = vshrl.u32 %v542, 7
        %v544 = vsub.s32 0, %v543
        %v545 = vrot.slane %v539, %v544
        %v546 = vsub.f32 %v356, %v545
        %v547 = vsub.f32 %v357, %v545
        %v548 = vsub.f32 %v358, %v545
        %v549 = vsub.f32 %v359, %v545
        %v550 = vsub.f32 %v360, %v545
        %v551 = vsub.f32 %v361, %v545
        %v552 = vsub.f32 %v362, %v545
        %v553 = vsub.f32 %v363, %v545
        %v554 = vmul.f32 %v546, %v546
        %v555 = vmul.f32 %v547, %v547
        %v556 = vmul.f32 %v548, %v548
        %v557 = vmul.f32 %v549, %v549
        %v558 = vmul.f32 %v550, %v550
        %v559 = vmul.f32 %v551, %v551
        %v560 = vmul.f32 %v552, %v552
        %v561 = vmul.f32 %v553, %v553
        %v562 = vsel %vm364, %v554, 0.0
        %v563 = vsel %vm364, %v555, 0.0
        %v564 = vadd.f32 %v562, %v563
        %v565 = vsel %vm364, %v556, 0.0
        %v566 = vadd.f32 %v564, %v565
        %v567 = vsel %vm364, %v557, 0.0
        %v568 = vadd.f32 %v566, %v567
        %v569 = vsel %vm364, %v558, 0.0
        %v570 = vadd.f32 %v568, %v569
        %v571 = vsel %vm364, %v559, 0.0
        %v572 = vadd.f32 %v570, %v571
        %v573 = vsel %vm364, %v560, 0.0
        %v574 = vadd.f32 %v572, %v573
        %v575 = vsel %vm364, %v561, 0.0
        %v576 = vadd.f32 %v574, %v575
        %v577 = vsel %vm364, %v576, 0.0
        %v578 = vrot.slane %v577, 4
        %v579 = vadd.f32 %v577, %v578
        %v580 = vrot.slane %v579, 2
        %v581 = vadd.f32 %v579, %v580
        %v582 = vrot.slane %v581, 1
        %v583 = vadd.f32 %v581, %v582
        %v584 = vmul.f32 %v583, 0.015625
        %v586 = vsel %vm364, %v584, 0
        %588 = vmatprep.subr.mxu0 0.0
        %589 = vmatpush1.msra.mxu0 %v388
        %590 = vmatprep.subr.mxu0 0.0
        %591 = vmatpush1.msra.mxu0 %v389
        %592 = vmatprep.subr.mxu0 0.0
        %593 = vmatpush1.msra.mxu0 %v390
        %594 = vmatprep.subr.mxu0 0.0
        %595 = vmatpush1.msra.mxu0 %v391
        %596 = vmatprep.subr.mxu0 0.0
        %597 = vmatpush1.msra.mxu0 0.0
        %598 = vmatprep.subr.mxu0 0.0
        %599 = vmatpush1.msra.mxu0 0.0
        %600 = vmatprep.subr.mxu0 0.0
        %601 = vmatpush1.msra.mxu0 0.0
        %602 = vmatprep.subr.mxu0 0.0
        %603 = vmatpush1.msra.mxu0 0.0
        %604 = vmatprep.subr.mxu0 0.0
        %605 = vmatpush1.msra.mxu0 0.0
        %606 = vmatprep.subr.mxu0 0.0
        %607 = vmatpush1.msra.mxu0 0.0
        %608 = vmatprep.subr.mxu0 0.0
        %609 = vmatpush1.msra.mxu0 0.0
        %610 = vmatprep.subr.mxu0 0.0
        %611 = vmatpush1.msra.mxu0 0.0
        %612 = vmatprep.subr.mxu0 0.0
        %613 = vmatpush1.msra.mxu0 0.0
        %614 = vmatprep.subr.mxu0 0.0
        %615 = vmatpush1.msra.mxu0 0.0
        %616 = vmatprep.subr.mxu0 0.0
        %617 = vmatpush1.msra.mxu0 0.0
        %618 = vmatprep.subr.mxu0 0.0
        %619 = vmatpush1.msra.mxu0 0.0
        %620 = vmatprep.subr.mxu0 0.0
        %621 = vmatpush1.msra.mxu0 0.0
        %622 = vmatprep.subr.mxu0 0.0
        %623 = vmatpush1.msra.mxu0 0.0
        %624 = vmatprep.subr.mxu0 0.0
        %625 = vmatpush1.msra.mxu0 0.0
        %626 = vmatprep.subr.mxu0 0.0
        %627 = vmatpush1.msra.mxu0 0.0
        %628 = vmatprep.subr.mxu0 0.0
        %629 = vmatpush1.msra.mxu0 0.0
        %630 = vmatprep.subr.mxu0 0.0
        %631 = vmatpush1.msra.mxu0 0.0
        %632 = vmatprep.subr.mxu0 0.0
        %633 = vmatpush1.msra.mxu0 0.0
        %634 = vmatprep.subr.mxu0 0.0
        %635 = vmatpush1.msra.mxu0 0.0
        %636 = vmatprep.subr.mxu0 0.0
        %637 = vmatpush1.msra.mxu0 0.0
        %638 = vmatprep.subr.mxu0 0.0
        %639 = vmatpush1.msra.mxu0 0.0
        %640 = vmatprep.subr.mxu0 0.0
        %641 = vmatpush1.msra.mxu0 0.0
        %642 = vmatprep.subr.mxu0 0.0
        %643 = vmatpush1.msra.mxu0 0.0
        %644 = vmatprep.subr.mxu0 0.0
        %645 = vmatpush1.msra.mxu0 0.0
        %646 = vmatprep.subr.mxu0 0.0
        %647 = vmatpush1.msra.mxu0 0.0
        %648 = vmatprep.subr.mxu0 0.0
        %649 = vmatpush1.msra.mxu0 0.0
        %650 = vmatprep.subr.mxu0 0.0
        %651 = vmatpush1.msra.mxu0 0.0
        %652 = vmatprep.mubr.f32.mxu0 0.0
        %653 = vmatmul.mubr.f32.gmra.mrb[0].mxu0 %v586
        %v654 = vpop.f32.mrb[0].mxu0
        %v655 = vadd.f32 1e-06, %v654
        %v656 = vpop.f32.mrb[0].mxu0
        %657 = vdwg.mxu0
        %v658 = vrsqrt.pop %v655
        %v660 = vsel %vm364, %v658, 0
        %662 = vmatprep.subr.mxu0 0.0
        %663 = vmatpush1.msra.mxu0 %v465
        %664 = vmatprep.subr.mxu0 0.0
        %665 = vmatpush1.msra.mxu0 %v466
        %666 = vmatprep.subr.mxu0 0.0
        %667 = vmatpush1.msra.mxu0 %v467
        %668 = vmatprep.subr.mxu0 0.0
        %669 = vmatpush1.msra.mxu0 %v468
        %670 = vmatprep.subr.mxu0 0.0
        %671 = vmatpush1.msra.mxu0 0.0
        %672 = vmatprep.subr.mxu0 0.0
        %673 = vmatpush1.msra.mxu0 0.0
        %674 = vmatprep.subr.mxu0 0.0
        %675 = vmatpush1.msra.mxu0 0.0
        %676 = vmatprep.subr.mxu0 0.0
        %677 = vmatpush1.msra.mxu0 0.0
        %678 = vmatprep.subr.mxu0 0.0
        %679 = vmatpush1.msra.mxu0 0.0
        %680 = vmatprep.subr.mxu0 0.0
        %681 = vmatpush1.msra.mxu0 0.0
        %682 = vmatprep.subr.mxu0 0.0
        %683 = vmatpush1.msra.mxu0 0.0
        %684 = vmatprep.subr.mxu0 0.0
        %685 = vmatpush1.msra.mxu0 0.0
        %686 = vmatprep.subr.mxu0 0.0
        %687 = vmatpush1.msra.mxu0 0.0
        %688 = vmatprep.subr.mxu0 0.0
        %689 = vmatpush1.msra.mxu0 0.0
        %690 = vmatprep.subr.mxu0 0.0
        %691 = vmatpush1.msra.mxu0 0.0
        %692 = vmatprep.subr.mxu0 0.0
        %693 = vmatpush1.msra.mxu0 0.0
        %694 = vmatprep.subr.mxu0 0.0
        %695 = vmatpush1.msra.mxu0 0.0
        %696 = vmatprep.subr.mxu0 0.0
        %697 = vmatpush1.msra.mxu0 0.0
        %698 = vmatprep.subr.mxu0 0.0
        %699 = vmatpush1.msra.mxu0 0.0
        %700 = vmatprep.subr.mxu0 0.0
        %701 = vmatpush1.msra.mxu0 0.0
        %702 = vmatprep.subr.mxu0 0.0
        %703 = vmatpush1.msra.mxu0 0.0
        %704 = vmatprep.subr.mxu0 0.0
        %705 = vmatpush1.msra.mxu0 0.0
        %706 = vmatprep.subr.mxu0 0.0
        %707 = vmatpush1.msra.mxu0 0.0
        %708 = vmatprep.subr.mxu0 0.0
        %709 = vmatpush1.msra.mxu0 0.0
        %710 = vmatprep.subr.mxu0 0.0
        %711 = vmatpush1.msra.mxu0 0.0
        %712 = vmatprep.subr.mxu0 0.0
        %713 = vmatpush1.msra.mxu0 0.0
        %714 = vmatprep.subr.mxu0 0.0
        %715 = vmatpush1.msra.mxu0 0.0
        %716 = vmatprep.subr.mxu0 0.0
        %717 = vmatpush1.msra.mxu0 0.0
        %718 = vmatprep.subr.mxu0 0.0
        %719 = vmatpush1.msra.mxu0 0.0
        %720 = vmatprep.subr.mxu0 0.0
        %721 = vmatpush1.msra.mxu0 0.0
        %722 = vmatprep.subr.mxu0 0.0
        %723 = vmatpush1.msra.mxu0 0.0
        %724 = vmatprep.subr.mxu0 0.0
        %725 = vmatpush1.msra.mxu0 0.0
        %726 = vmatprep.mubr.f32.mxu0 0.0
        %727 = vmatmul.mubr.f32.gmra.mrb[0].mxu0 %v660
        %v728 = vpop.f32.mrb[0].mxu0
        %v729 = vadd.f32 0.0, %v728
        %v730 = vpop.f32.mrb[0].mxu0
        %731 = vdwg.mxu0
        %v732 = vld [vmem:[%s1] sm:$0x1]
        %v733 = vmul.f32 %v729, %v732
        %v734 = vlaneseq
        %v735 = vshrl.u32 %v734, 7
        %v736 = vsub.s32 0, %v735
        %v737 = vrot.slane %v733, %v736
        %v738 = vmul.f32 %v546, %v737
        %v739 = vmul.f32 %v547, %v737
        %v740 = vmul.f32 %v548, %v737
        %v741 = vmul.f32 %v549, %v737
        %v742 = vmul.f32 %v550, %v737
        %v743 = vmul.f32 %v551, %v737
        %v744 = vmul.f32 %v552, %v737
        %v745 = vmul.f32 %v553, %v737
        %v746 = vld [vmem:[%s2] sm:$0x1]
        %v748 = vlaneseq
        %v749 = vshrl.u32 %v748, 7
        %v750 = vsub.s32 0, %v749
        %v751 = vrot.slane %v746, %v750
        %v753 = vadd.f32 %v738, %v751
        %v754 = vadd.f32 %v739, %v751
        %v755 = vadd.f32 %v740, %v751
        %v756 = vadd.f32 %v741, %v751
        %v757 = vadd.f32 %v742, %v751
        %v758 = vadd.f32 %v743, %v751
        %v759 = vadd.f32 %v744, %v751
        %v760 = vadd.f32 %v745, %v751
        %v761 = vxor.u32 %v753, 2147483648
        %v762 = vxor.u32 %v754, 2147483648
        %v763 = vxor.u32 %v755, 2147483648
        %v764 = vxor.u32 %v756, 2147483648
        %v765 = vxor.u32 %v757, 2147483648
        %v766 = vxor.u32 %v758, 2147483648
        %v767 = vxor.u32 %v759, 2147483648
        %v768 = vxor.u32 %v760, 2147483648
        %v769 = vmul.f32 %v761, 1.442695
        %v770 = vpow.pop %v769
        %v771 = vmul.f32 %v762, 1.442695
        %v772 = vpow.pop %v771
        %v773 = vmul.f32 %v763, 1.442695
        %v774 = vpow.pop %v773
        %v775 = vmul.f32 %v764, 1.442695
        %v776 = vpow.pop %v775
        %v777 = vmul.f32 %v765, 1.442695
        %v778 = vpow.pop %v777
        %v779 = vmul.f32 %v766, 1.442695
        %v780 = vpow.pop %v779
        %v781 = vmul.f32 %v767, 1.442695
        %v782 = vpow.pop %v781
        %v783 = vmul.f32 %v768, 1.442695
        %v784 = vpow.pop %v783
        %v785 = vadd.f32 %v770, 1.0
        %v786 = vadd.f32 %v772, 1.0
        %v787 = vadd.f32 %v774, 1.0
        %v788 = vadd.f32 %v776, 1.0
        %v789 = vadd.f32 %v778, 1.0
        %v790 = vadd.f32 %v780, 1.0
        %v791 = vadd.f32 %v782, 1.0
        %v792 = vadd.f32 %v784, 1.0
        %v793 = vrcp.pop %v785
        %v794 = vmul.f32 1.0, %v793
        %v795 = vrcp.pop %v786
        %v796 = vmul.f32 1.0, %v795
        %v797 = vrcp.pop %v787
        %v798 = vmul.f32 1.0, %v797
        %v799 = vrcp.pop %v788
        %v800 = vmul.f32 1.0, %v799
        %v801 = vrcp.pop %v789
        %v802 = vmul.f32 1.0, %v801
        %v803 = vrcp.pop %v790
        %v804 = vmul.f32 1.0, %v803
        %v805 = vrcp.pop %v791
        %v806 = vmul.f32 1.0, %v805
        %v807 = vrcp.pop %v792
        %v808 = vmul.f32 1.0, %v807
        %v809 = vmul.f32 %v753, %v794
        %v810 = vmul.f32 %v754, %v796
        %v811 = vmul.f32 %v755, %v798
        %v812 = vmul.f32 %v756, %v800
        %v813 = vmul.f32 %v757, %v802
        %v814 = vmul.f32 %v758, %v804
        %v815 = vmul.f32 %v759, %v806
        %v816 = vmul.f32 %v760, %v808
        %v817 = vpack.c.bf16 %v809, %v809
        %v818 = vpack.c.bf16 %v810, %v810
        %v819 = vpack.c.bf16 %v811, %v811
        %v820 = vpack.c.bf16 %v812, %v812
        %v821 = vpack.c.bf16 %v813, %v813
        %v822 = vpack.c.bf16 %v814, %v814
        %v823 = vpack.c.bf16 %v815, %v815
        %v824 = vpack.c.bf16 %v816, %v816
        %vm825 = vcmask 257024
        %826 = vst.msk [vmem:[#allocation2] sm:$0xf] %vm825, 0
        %827 = vst.msk [vmem:[#allocation2 + $0x4] sm:$0xf] %vm825, 0
        %vm828 = vcmask 253952
        %vm829 = vsmask.f32 256
        %vm830 = vmand %vm828, %vm829
        %v831 = vld [vmem:[#allocation2 + $0x8] sm:$0x1]
        %v832 = vsel %vm830, 0, %v831
        %833 = vst [vmem:[#allocation2 + $0x8] sm:$0x1] %v832
        %834 = vst.msk [vmem:[#allocation2 + $0x48] sm:$0xf] %vm825, 0
        %835 = vst.msk [vmem:[#allocation2 + $0x4c] sm:$0xf] %vm825, 0
        %836 = vst.msk [vmem:[#allocation2 + $0x50] sm:$0xf] %vm825, 0
        %v838 = vunpack.c.l.b16 %v817
        %v839 = vpack.c.b16 %v838, %v838
        %v841 = vshrl.u32 %v839, 16
        %v843 = vrot.slane %v841, 7
        %v844 = vshll.u32 %v839, 16
        %v846 = vor.u32 %v843, %v844
        %v847 = vrot.slane %v843, 4
        %vm850 = vcmask 257024
        %vm851 = vsmask.f32 7938
        %vm852 = vmand %vm850, %vm851
        %v853 = vld [vmem:[#allocation2 + $0x8] sm:$0xf]
        %v854 = vsel %vm852, %v846, %v853
        %855 = vst [vmem:[#allocation2 + $0x8] sm:$0xf] %v854
        %v856 = vld [vmem:[#allocation2 + $0xc] sm:$0x1]
        %v857 = vsel %vm830, %v847, %v856
        %858 = vst [vmem:[#allocation2 + $0xc] sm:$0x1] %v857
        %v859 = vld [vmem:[#allocation2 + $0xc] sm:$0xf]
        %v860 = vsel %vm852, 0, %v859
        %861 = vst [vmem:[#allocation2 + $0xc] sm:$0xf] %v860
        %v862 = vld [vmem:[#allocation2 + $0x10] sm:$0x1]
        %v863 = vsel %vm830, 0, %v862
        %864 = vst [vmem:[#allocation2 + $0x10] sm:$0x1] %v863
        %v866 = vunpack.c.l.b16 %v818
        %v867 = vpack.c.b16 %v866, %v866
        %v869 = vshrl.u32 %v867, 16
        %v871 = vrot.slane %v869, 7
        %v872 = vshll.u32 %v867, 16
        %v874 = vor.u32 %v871, %v872
        %v875 = vrot.slane %v871, 4
        %v878 = vld [vmem:[#allocation2 + $0x10] sm:$0xf]
        %v879 = vsel %vm852, %v874, %v878
        %880 = vst [vmem:[#allocation2 + $0x10] sm:$0xf] %v879
        %v881 = vld [vmem:[#allocation2 + $0x14] sm:$0x1]
        %v882 = vsel %vm830, %v875, %v881
        %883 = vst [vmem:[#allocation2 + $0x14] sm:$0x1] %v882
        %v884 = vld [vmem:[#allocation2 + $0x14] sm:$0xf]
        %v885 = vsel %vm852, 0, %v884
        %886 = vst [vmem:[#allocation2 + $0x14] sm:$0xf] %v885
        %v887 = vld [vmem:[#allocation2 + $0x18] sm:$0x1]
        %v888 = vsel %vm830, 0, %v887
        %889 = vst [vmem:[#allocation2 + $0x18] sm:$0x1] %v888
        %v891 = vunpack.c.l.b16 %v819
        %v892 = vpack.c.b16 %v891, %v891
        %v894 = vshrl.u32 %v892, 16
        %v896 = vrot.slane %v894, 7
        %v897 = vshll.u32 %v892, 16
        %v899 = vor.u32 %v896, %v897
        %v900 = vrot.slane %v896, 4
        %v903 = vld [vmem:[#allocation2 + $0x18] sm:$0xf]
        %v904 = vsel %vm852, %v899, %v903
        %905 = vst [vmem:[#allocation2 + $0x18] sm:$0xf] %v904
        %v906 = vld [vmem:[#allocation2 + $0x1c] sm:$0x1]
        %v907 = vsel %vm830, %v900, %v906
        %908 = vst [vmem:[#allocation2 + $0x1c] sm:$0x1] %v907
        %v909 = vld [vmem:[#allocation2 + $0x1c] sm:$0xf]
        %v910 = vsel %vm852, 0, %v909
        %911 = vst [vmem:[#allocation2 + $0x1c] sm:$0xf] %v910
        %v912 = vld [vmem:[#allocation2 + $0x20] sm:$0x1]
        %v913 = vsel %vm830, 0, %v912
        %914 = vst [vmem:[#allocation2 + $0x20] sm:$0x1] %v913
        %v916 = vunpack.c.l.b16 %v820
        %v917 = vpack.c.b16 %v916, %v916
        %v919 = vshrl.u32 %v917, 16
        %v921 = vrot.slane %v919, 7
        %v922 = vshll.u32 %v917, 16
        %v924 = vor.u32 %v921, %v922
        %v925 = vrot.slane %v921, 4
        %v928 = vld [vmem:[#allocation2 + $0x20] sm:$0xf]
        %v929 = vsel %vm852, %v924, %v928
        %930 = vst [vmem:[#allocation2 + $0x20] sm:$0xf] %v929
        %v931 = vld [vmem:[#allocation2 + $0x24] sm:$0x1]
        %v932 = vsel %vm830, %v925, %v931
        %933 = vst [vmem:[#allocation2 + $0x24] sm:$0x1] %v932
        %v934 = vld [vmem:[#allocation2 + $0x24] sm:$0xf]
        %v935 = vsel %vm852, 0, %v934
        %936 = vst [vmem:[#allocation2 + $0x24] sm:$0xf] %v935
        %v937 = vld [vmem:[#allocation2 + $0x28] sm:$0x1]
        %v938 = vsel %vm830, 0, %v937
        %939 = vst [vmem:[#allocation2 + $0x28] sm:$0x1] %v938
        %v941 = vunpack.c.l.b16 %v821
        %v942 = vpack.c.b16 %v941, %v941
        %v944 = vshrl.u32 %v942, 16
        %v946 = vrot.slane %v944, 7
        %v947 = vshll.u32 %v942, 16
        %v949 = vor.u32 %v946, %v947
        %v950 = vrot.slane %v946, 4
        %v953 = vld [vmem:[#allocation2 + $0x28] sm:$0xf]
        %v954 = vsel %vm852, %v949, %v953
        %955 = vst [vmem:[#allocation2 + $0x28] sm:$0xf] %v954
        %v956 = vld [vmem:[#allocation2 + $0x2c] sm:$0x1]
        %v957 = vsel %vm830, %v950, %v956
        %958 = vst [vmem:[#allocation2 + $0x2c] sm:$0x1] %v957
        %v959 = vld [vmem:[#allocation2 + $0x2c] sm:$0xf]
        %v960 = vsel %vm852, 0, %v959
        %961 = vst [vmem:[#allocation2 + $0x2c] sm:$0xf] %v960
        %v962 = vld [vmem:[#allocation2 + $0x30] sm:$0x1]
        %v963 = vsel %vm830, 0, %v962
        %964 = vst [vmem:[#allocation2 + $0x30] sm:$0x1] %v963
        %v966 = vunpack.c.l.b16 %v822
        %v967 = vpack.c.b16 %v966, %v966
        %v969 = vshrl.u32 %v967, 16
        %v971 = vrot.slane %v969, 7
        %v972 = vshll.u32 %v967, 16
        %v974 = vor.u32 %v971, %v972
        %v975 = vrot.slane %v971, 4
        %v978 = vld [vmem:[#allocation2 + $0x30] sm:$0xf]
        %v979 = vsel %vm852, %v974, %v978
        %980 = vst [vmem:[#allocation2 + $0x30] sm:$0xf] %v979
        %v981 = vld [vmem:[#allocation2 + $0x34] sm:$0x1]
        %v982 = vsel %vm830, %v975, %v981
        %983 = vst [vmem:[#allocation2 + $0x34] sm:$0x1] %v982
        %v984 = vld [vmem:[#allocation2 + $0x34] sm:$0xf]
        %v985 = vsel %vm852, 0, %v984
        %986 = vst [vmem:[#allocation2 + $0x34] sm:$0xf] %v985
        %v987 = vld [vmem:[#allocation2 + $0x38] sm:$0x1]
        %v988 = vsel %vm830, 0, %v987
        %989 = vst [vmem:[#allocation2 + $0x38] sm:$0x1] %v988
        %v991 = vunpack.c.l.b16 %v823
        %v992 = vpack.c.b16 %v991, %v991
        %v994 = vshrl.u32 %v992, 16
        %v996 = vrot.slane %v994, 7
        %v997 = vshll.u32 %v992, 16
        %v999 = vor.u32 %v996, %v997
        %v1000 = vrot.slane %v996, 4
        %v1003 = vld [vmem:[#allocation2 + $0x38] sm:$0xf]
        %v1004 = vsel %vm852, %v999, %v1003
        %1005 = vst [vmem:[#allocation2 + $0x38] sm:$0xf] %v1004
        %v1006 = vld [vmem:[#allocation2 + $0x3c] sm:$0x1]
        %v1007 = vsel %vm830, %v1000, %v1006
        %1008 = vst [vmem:[#allocation2 + $0x3c] sm:$0x1] %v1007
        %v1009 = vld [vmem:[#allocation2 + $0x3c] sm:$0xf]
        %v1010 = vsel %vm852, 0, %v1009
        %1011 = vst [vmem:[#allocation2 + $0x3c] sm:$0xf] %v1010
        %v1012 = vld [vmem:[#allocation2 + $0x40] sm:$0x1]
        %v1013 = vsel %vm830, 0, %v1012
        %1014 = vst [vmem:[#allocation2 + $0x40] sm:$0x1] %v1013
        %v1016 = vunpack.c.l.b16 %v824
        %v1017 = vpack.c.b16 %v1016, %v1016
        %v1019 = vshrl.u32 %v1017, 16
        %v1021 = vrot.slane %v1019, 7
        %v1022 = vshll.u32 %v1017, 16
        %v1024 = vor.u32 %v1021, %v1022
        %v1025 = vrot.slane %v1021, 4
        %v1028 = vld [vmem:[#allocation2 + $0x40] sm:$0xf]
        %v1029 = vsel %vm852, %v1024, %v1028
        %1030 = vst [vmem:[#allocation2 + $0x40] sm:$0xf] %v1029
        %v1031 = vld [vmem:[#allocation2 + $0x44] sm:$0x1]
        %v1032 = vsel %vm830, %v1025, %v1031
        %1033 = vst [vmem:[#allocation2 + $0x44] sm:$0x1] %v1032
        %v1034 = vld [vmem:[#allocation2 + $0x44] sm:$0xf]
        %v1035 = vsel %vm852, 0, %v1034
        %1036 = vst [vmem:[#allocation2 + $0x44] sm:$0xf] %v1035
        %v1037 = vld [vmem:[#allocation2 + $0x48] sm:$0x1]
        %v1038 = vsel %vm830, 0, %v1037
        %1039 = vst [vmem:[#allocation2 + $0x48] sm:$0x1] %v1038
        %v1040 = vld [vmem:[#allocation2] sm:$0xf]
        %v1041 = vld [vmem:[#allocation2 + $0x4] sm:$0xf]
        %v1042 = vld [vmem:[#allocation2 + $0x8] sm:$0xf]
        %v1043 = vld [vmem:[#allocation2 + $0xc] sm:$0xf]
        %v1044 = vld [vmem:[#allocation2 + $0x10] sm:$0xf]
        %v1045 = vld [vmem:[#allocation2 + $0x14] sm:$0xf]
        %v1046 = vld [vmem:[#allocation2 + $0x18] sm:$0xf]
        %v1047 = vld [vmem:[#allocation2 + $0x1c] sm:$0xf]
        %v1048 = vld [vmem:[#allocation2 + $0x20] sm:$0xf]
        %v1049 = vld [vmem:[#allocation2 + $0x24] sm:$0xf]
        %v1050 = vld [vmem:[#allocation2 + $0x28] sm:$0xf]
        %v1051 = vld [vmem:[#allocation2 + $0x2c] sm:$0xf]
        %v1052 = vld [vmem:[#allocation2 + $0x30] sm:$0xf]
        %v1053 = vld [vmem:[#allocation2 + $0x34] sm:$0xf]
        %v1054 = vld [vmem:[#allocation2 + $0x38] sm:$0xf]
        %v1055 = vld [vmem:[#allocation2 + $0x3c] sm:$0xf]
        %v1056 = vld [vmem:[#allocation9] sm:$0xf]
        %v1057 = vld [vmem:[#allocation9 + $0x4] sm:$0xf]
        %v1058 = vld [vmem:[#allocation9 + $0x8] sm:$0xf]
        %v1059 = vld [vmem:[#allocation9 + $0xc] sm:$0xf]
        %v1060 = vld [vmem:[#allocation2 + $0x40] sm:$0x1]
        %s1061 = scalar_lea.vmem [#allocation9], 16
        %v1062 = vld [vmem:[%s1061] sm:$0xf]
        %v1063 = vld [vmem:[%s1061 + $0x4] sm:$0xf]
        %v1064 = vld [vmem:[%s1061 + $0x8] sm:$0xf]
        %v1065 = vld [vmem:[%s1061 + $0xc] sm:$0xf]
        %v1083 = vunpack.c.l.b16 %v1040
        %v1084 = vunpack.c.l.b16 %v1041
        %v1085 = vunpack.c.l.b16 %v1042
        %v1086 = vunpack.c.l.b16 %v1043
        %v1087 = vunpack.c.l.b16 %v1044
        %v1088 = vunpack.c.l.b16 %v1045
        %v1089 = vunpack.c.l.b16 %v1046
        %v1090 = vunpack.c.l.b16 %v1047
        %v1091 = vunpack.c.l.b16 %v1048
        %v1092 = vunpack.c.l.b16 %v1049
        %v1093 = vunpack.c.l.b16 %v1050
        %v1094 = vunpack.c.l.b16 %v1051
        %v1095 = vunpack.c.l.b16 %v1052
        %v1096 = vunpack.c.l.b16 %v1053
        %v1097 = vunpack.c.l.b16 %v1054
        %v1098 = vunpack.c.l.b16 %v1055
        %v1099 = vunpack.c.l.b16 %v1060
        %v1100 = vpack.c.b16 %v1084, %v1083
        %v1101 = vpack.c.b16 %v1086, %v1085
        %v1102 = vpack.c.b16 %v1088, %v1087
        %v1103 = vpack.c.b16 %v1090, %v1089
        %v1104 = vpack.c.b16 %v1092, %v1091
        %v1105 = vpack.c.b16 %v1094, %v1093
        %v1106 = vpack.c.b16 %v1096, %v1095
        %v1107 = vpack.c.b16 %v1098, %v1097
        %v1108 = vpack.c.b16 %v1099, %v1099
        %vm1109 = vsmask.f32 7424
        %v1111 = vshrl.u32 %v1100, 16
        %v1113 = vshll.u32 %v1100, 16
        %v1115 = vrot.slane %v1113, 1
        %v1116 = vor.u32 %v1111, %v1115
        %v1118 = vshll.u32 %v1101, 16
        %v1120 = vrot.slane %v1118, 1
        %v1121 = vsel %vm1109, %v1116, %v1120
        %v1122 = vshrl.u32 %v1101, 16
        %v1124 = vor.u32 %v1122, %v1120
        %v1126 = vshll.u32 %v1102, 16
        %v1128 = vrot.slane %v1126, 1
        %v1129 = vsel %vm1109, %v1124, %v1128
        %v1130 = vshrl.u32 %v1102, 16
        %v1132 = vor.u32 %v1130, %v1128
        %v1134 = vshll.u32 %v1103, 16
        %v1136 = vrot.slane %v1134, 1
        %v1137 = vsel %vm1109, %v1132, %v1136
        %v1138 = vshrl.u32 %v1103, 16
        %v1140 = vor.u32 %v1138, %v1136
        %v1142 = vshll.u32 %v1104, 16
        %v1144 = vrot.slane %v1142, 1
        %v1145 = vsel %vm1109, %v1140, %v1144
        %v1146 = vshrl.u32 %v1104, 16
        %v1148 = vor.u32 %v1146, %v1144
        %v1150 = vshll.u32 %v1105, 16
        %v1152 = vrot.slane %v1150, 1
        %v1153 = vsel %vm1109, %v1148, %v1152
        %v1154 = vshrl.u32 %v1105, 16
        %v1156 = vor.u32 %v1154, %v1152
        %v1158 = vshll.u32 %v1106, 16
        %v1160 = vrot.slane %v1158, 1
        %v1161 = vsel %vm1109, %v1156, %v1160
        %v1162 = vshrl.u32 %v1106, 16
        %v1164 = vor.u32 %v1162, %v1160
        %v1166 = vshll.u32 %v1107, 16
        %v1168 = vrot.slane %v1166, 1
        %v1169 = vsel %vm1109, %v1164, %v1168
        %v1170 = vshrl.u32 %v1107, 16
        %v1172 = vor.u32 %v1170, %v1168
        %v1174 = vshll.u32 %v1108, 16
        %v1176 = vrot.slane %v1174, 1
        %v1177 = vsel %vm1109, %v1172, %v1176
        %v1182 = vunpack.c.l.b16 %v1062
        %v1183 = vunpack.c.l.b16 %v1063
        %v1184 = vunpack.c.l.b16 %v1064
        %v1185 = vunpack.c.l.b16 %v1065
        %v1186 = vpack.c.b16 %v1183, %v1182
        %v1187 = vpack.c.b16 %v1185, %v1184
        %v1191 = vsel %vm364, %v1121, 0
        %v1194 = vsel %vm364, %v1129, 0
        %v1197 = vsel %vm364, %v1137, 0
        %v1200 = vsel %vm364, %v1145, 0
        %v1203 = vsel %vm364, %v1153, 0
        %v1206 = vsel %vm364, %v1161, 0
        %v1209 = vsel %vm364, %v1169, 0
        %v1212 = vsel %vm364, %v1177, 0
        %1214 = vmatprep.subr.bf16.mxu0 0
        %1215 = vmatpush1.bf16.msra.mxu0 %v1186
        %1216 = vmatprep.subr.bf16.mxu0 0
        %1217 = vmatpush1.bf16.msra.mxu0 %v1187
        %1218 = vmatprep.subr.bf16.mxu0 0
        %1219 = vmatpush1.bf16.msra.mxu0 0
        %1220 = vmatprep.subr.bf16.mxu0 0
        %1221 = vmatpush1.bf16.msra.mxu0 0
        %1222 = vmatprep.subr.bf16.mxu0 0
        %1223 = vmatpush1.bf16.msra.mxu0 0
        %1224 = vmatprep.subr.bf16.mxu0 0
        %1225 = vmatpush1.bf16.msra.mxu0 0
        %1226 = vmatprep.subr.bf16.mxu0 0
        %1227 = vmatpush1.bf16.msra.mxu0 0
        %1228 = vmatprep.subr.bf16.mxu0 0
        %1229 = vmatpush1.bf16.msra.mxu0 0
        %1230 = vmatprep.subr.bf16.mxu0 0
        %1231 = vmatpush1.bf16.msra.mxu0 0
        %1232 = vmatprep.subr.bf16.mxu0 0
        %1233 = vmatpush1.bf16.msra.mxu0 0
        %1234 = vmatprep.subr.bf16.mxu0 0
        %1235 = vmatpush1.bf16.msra.mxu0 0
        %1236 = vmatprep.subr.bf16.mxu0 0
        %1237 = vmatpush1.bf16.msra.mxu0 0
        %1238 = vmatprep.subr.bf16.mxu0 0
        %1239 = vmatpush1.bf16.msra.mxu0 0
        %1240 = vmatprep.subr.bf16.mxu0 0
        %1241 = vmatpush1.bf16.msra.mxu0 0
        %1242 = vmatprep.subr.bf16.mxu0 0
        %1243 = vmatpush1.bf16.msra.mxu0 0
        %1244 = vmatprep.subr.bf16.mxu0 0
        %1245 = vmatpush1.bf16.msra.mxu0 0
        %1246 = vmatprep.mubr.bf16.mxu0 0
        %1247 = vmatmul.mubr.bf16.gmra.mrb[0].mxu0 %v1191
        %v1248 = vpop.f32.mrb[0].mxu0
        %v1249 = vadd.f32 0.0, %v1248
        %v1250 = vpop.f32.mrb[0].mxu0
        %v1251 = vpop.f32.mrb[0].mxu0
        %v1252 = vpop.f32.mrb[0].mxu0
        %1253 = vmatprep.mubr.bf16.mxu0 0
        %1254 = vmatmul.mubr.bf16.gmra.mrb[0].mxu0 %v1194
        %v1255 = vpop.f32.mrb[0].mxu0
        %v1256 = vadd.f32 0.0, %v1255
        %v1257 = vpop.f32.mrb[0].mxu0
        %v1258 = vpop.f32.mrb[0].mxu0
        %v1259 = vpop.f32.mrb[0].mxu0
        %1260 = vmatprep.mubr.bf16.mxu0 0
        %1261 = vmatmul.mubr.bf16.gmra.mrb[0].mxu0 %v1197
        %v1262 = vpop.f32.mrb[0].mxu0
        %v1263 = vadd.f32 0.0, %v1262
        %v1264 = vpop.f32.mrb[0].mxu0
        %v1265 = vpop.f32.mrb[0].mxu0
        %v1266 = vpop.f32.mrb[0].mxu0
        %1267 = vmatprep.mubr.bf16.mxu0 0
        %1268 = vmatmul.mubr.bf16.gmra.mrb[0].mxu0 %v1200
        %v1269 = vpop.f32.mrb[0].mxu0
        %v1270 = vadd.f32 0.0, %v1269
        %v1271 = vpop.f32.mrb[0].mxu0
        %v1272 = vpop.f32.mrb[0].mxu0
        %v1273 = vpop.f32.mrb[0].mxu0
        %1274 = vmatprep.mubr.bf16.mxu0 0
        %1275 = vmatmul.mubr.bf16.gmra.mrb[0].mxu0 %v1203
        %v1276 = vpop.f32.mrb[0].mxu0
        %v1277 = vadd.f32 0.0, %v1276
        %v1278 = vpop.f32.mrb[0].mxu0
        %v1279 = vpop.f32.mrb[0].mxu0
        %v1280 = vpop.f32.mrb[0].mxu0
        %1281 = vmatprep.mubr.bf16.mxu0 0
        %1282 = vmatmul.mubr.bf16.gmra.mrb[0].mxu0 %v1206
        %v1283 = vpop.f32.mrb[0].mxu0
        %v1284 = vadd.f32 0.0, %v1283
        %v1285 = vpop.f32.mrb[0].mxu0
        %v1286 = vpop.f32.mrb[0].mxu0
        %v1287 = vpop.f32.mrb[0].mxu0
        %1288 = vmatprep.mubr.bf16.mxu0 0
        %1289 = vmatmul.mubr.bf16.gmra.mrb[0].mxu0 %v1209
        %v1290 = vpop.f32.mrb[0].mxu0
        %v1291 = vadd.f32 0.0, %v1290
        %v1292 = vpop.f32.mrb[0].mxu0
        %v1293 = vpop.f32.mrb[0].mxu0
        %v1294 = vpop.f32.mrb[0].mxu0
        %1295 = vmatprep.mubr.bf16.mxu0 0
        %1296 = vmatmul.mubr.bf16.gmra.mrb[0].mxu0 %v1212
        %v1297 = vpop.f32.mrb[0].mxu0
        %v1298 = vadd.f32 0.0, %v1297
        %v1299 = vpop.f32.mrb[0].mxu0
        %v1300 = vpop.f32.mrb[0].mxu0
        %v1301 = vpop.f32.mrb[0].mxu0
        %1302 = vdwg.mxu0
        %v1307 = vunpack.c.l.b16 %v1056
        %v1308 = vunpack.c.l.b16 %v1057
        %v1309 = vunpack.c.l.b16 %v1058
        %v1310 = vunpack.c.l.b16 %v1059
        %v1311 = vpack.c.b16 %v1308, %v1307
        %v1312 = vpack.c.b16 %v1310, %v1309
        %v1315 = vsel %vm364, %v1100, 0
        %v1317 = vsel %vm364, %v1101, 0
        %v1319 = vsel %vm364, %v1102, 0
        %v1321 = vsel %vm364, %v1103, 0
        %v1323 = vsel %vm364, %v1104, 0
        %v1325 = vsel %vm364, %v1105, 0
        %v1327 = vsel %vm364, %v1106, 0
        %v1329 = vsel %vm364, %v1107, 0
        %1331 = vmatprep.subr.bf16.mxu0 0
        %1332 = vmatpush1.bf16.msra.mxu0 %v1311
        %1333 = vmatprep.subr.bf16.mxu0 0
        %1334 = vmatpush1.bf16.msra.mxu0 %v1312
        %1335 = vmatprep.subr.bf16.mxu0 0
        %1336 = vmatpush1.bf16.msra.mxu0 0
        %1337 = vmatprep.subr.bf16.mxu0 0
        %1338 = vmatpush1.bf16.msra.mxu0 0
        %1339 = vmatprep.subr.bf16.mxu0 0
        %1340 = vmatpush1.bf16.msra.mxu0 0
        %1341 = vmatprep.subr.bf16.mxu0 0
        %1342 = vmatpush1.bf16.msra.mxu0 0
        %1343 = vmatprep.subr.bf16.mxu0 0
        %1344 = vmatpush1.bf16.msra.mxu0 0
        %1345 = vmatprep.subr.bf16.mxu0 0
        %1346 = vmatpush1.bf16.msra.mxu0 0
        %1347 = vmatprep.subr.bf16.mxu0 0
        %1348 = vmatpush1.bf16.msra.mxu0 0
        %1349 = vmatprep.subr.bf16.mxu0 0
        %1350 = vmatpush1.bf16.msra.mxu0 0
        %1351 = vmatprep.subr.bf16.mxu0 0
        %1352 = vmatpush1.bf16.msra.mxu0 0
        %1353 = vmatprep.subr.bf16.mxu0 0
        %1354 = vmatpush1.bf16.msra.mxu0 0
        %1355 = vmatprep.subr.bf16.mxu0 0
        %1356 = vmatpush1.bf16.msra.mxu0 0
        %1357 = vmatprep.subr.bf16.mxu0 0
        %1358 = vmatpush1.bf16.msra.mxu0 0
        %1359 = vmatprep.subr.bf16.mxu0 0
        %1360 = vmatpush1.bf16.msra.mxu0 0
        %1361 = vmatprep.subr.bf16.mxu0 0
        %1362 = vmatpush1.bf16.msra.mxu0 0
        %1363 = vmatprep.mubr.bf16.mxu0 0
        %1364 = vmatmul.mubr.bf16.gmra.mrb[0].mxu0 %v1315
        %v1365 = vpop.f32.mrb[0].mxu0
        %v1366 = vadd.f32 %v1249, %v1365
        %v1367 = vpop.f32.mrb[0].mxu0
        %v1368 = vpop.f32.mrb[0].mxu0
        %v1369 = vpop.f32.mrb[0].mxu0
        %1370 = vmatprep.mubr.bf16.mxu0 0
        %1371 = vmatmul.mubr.bf16.gmra.mrb[0].mxu0 %v1317
        %v1372 = vpop.f32.mrb[0].mxu0
        %v1373 = vadd.f32 %v1256, %v1372
        %v1374 = vpop.f32.mrb[0].mxu0
        %v1375 = vpop.f32.mrb[0].mxu0
        %v1376 = vpop.f32.mrb[0].mxu0
        %1377 = vmatprep.mubr.bf16.mxu0 0
        %1378 = vmatmul.mubr.bf16.gmra.mrb[0].mxu0 %v1319
        %v1379 = vpop.f32.mrb[0].mxu0
        %v1380 = vadd.f32 %v1263, %v1379
        %v1381 = vpop.f32.mrb[0].mxu0
        %v1382 = vpop.f32.mrb[0].mxu0
        %v1383 = vpop.f32.mrb[0].mxu0
        %1384 = vmatprep.mubr.bf16.mxu0 0
        %1385 = vmatmul.mubr.bf16.gmra.mrb[0].mxu0 %v1321
        %v1386 = vpop.f32.mrb[0].mxu0
        %v1387 = vadd.f32 %v1270, %v1386
        %v1388 = vpop.f32.mrb[0].mxu0
        %v1389 = vpop.f32.mrb[0].mxu0
        %v1390 = vpop.f32.mrb[0].mxu0
        %1391 = vmatprep.mubr.bf16.mxu0 0
        %1392 = vmatmul.mubr.bf16.gmra.mrb[0].mxu0 %v1323
        %v1393 = vpop.f32.mrb[0].mxu0
        %v1394 = vadd.f32 %v1277, %v1393
        %v1395 = vpop.f32.mrb[0].mxu0
        %v1396 = vpop.f32.mrb[0].mxu0
        %v1397 = vpop.f32.mrb[0].mxu0
        %1398 = vmatprep.mubr.bf16.mxu0 0
        %1399 = vmatmul.mubr.bf16.gmra.mrb[0].mxu0 %v1325
        %v1400 = vpop.f32.mrb[0].mxu0
        %v1401 = vadd.f32 %v1284, %v1400
        %v1402 = vpop.f32.mrb[0].mxu0
        %v1403 = vpop.f32.mrb[0].mxu0
        %v1404 = vpop.f32.mrb[0].mxu0
        %1405 = vmatprep.mubr.bf16.mxu0 0
        %1406 = vmatmul.mubr.bf16.gmra.mrb[0].mxu0 %v1327
        %v1407 = vpop.f32.mrb[0].mxu0
        %v1408 = vadd.f32 %v1291, %v1407
        %v1409 = vpop.f32.mrb[0].mxu0
        %v1410 = vpop.f32.mrb[0].mxu0
        %v1411 = vpop.f32.mrb[0].mxu0
        %1412 = vmatprep.mubr.bf16.mxu0 0
        %1413 = vmatmul.mubr.bf16.gmra.mrb[0].mxu0 %v1329
        %v1414 = vpop.f32.mrb[0].mxu0
        %v1415 = vadd.f32 %v1298, %v1414
        %v1416 = vpop.f32.mrb[0].mxu0
        %v1417 = vpop.f32.mrb[0].mxu0
        %v1418 = vpop.f32.mrb[0].mxu0
        %1419 = vdwg.mxu0
        %v1420 = vld [vmem:[#allocation2] sm:$0xe]
        %s1421 = scalar_lea.vmem [#allocation9], 32
        %v1422 = vld [vmem:[%s1421] sm:$0xf]
        %v1423 = vld [vmem:[%s1421 + $0x4] sm:$0xf]
        %v1424 = vld [vmem:[%s1421 + $0x8] sm:$0xf]
        %v1425 = vld [vmem:[%s1421 + $0xc] sm:$0xf]
        %v1427 = vunpack.c.l.b16 %v1420
        %v1428 = vpack.c.b16 %v1084, %v1427
        %vm1429 = vcmask 1046528
        %v1430 = vrot.slane %v1428, 1
        %v1431 = vrot.slane %v1101, 1
        %v1432 = vsel %vm1429, %v1430, %v1431
        %v1433 = vrot.slane %v1102, 1
        %v1434 = vsel %vm1429, %v1431, %v1433
        %v1435 = vrot.slane %v1103, 1
        %v1436 = vsel %vm1429, %v1433, %v1435
        %v1437 = vrot.slane %v1104, 1
        %v1438 = vsel %vm1429, %v1435, %v1437
        %v1439 = vrot.slane %v1105, 1
        %v1440 = vsel %vm1429, %v1437, %v1439
        %v1441 = vrot.slane %v1106, 1
        %v1442 = vsel %vm1429, %v1439, %v1441
        %v1443 = vrot.slane %v1107, 1
        %v1444 = vsel %vm1429, %v1441, %v1443
        %v1445 = vrot.slane %v1108, 1
        %v1446 = vsel %vm1429, %v1443, %v1445
        %v1451 = vunpack.c.l.b16 %v1422
        %v1452 = vunpack.c.l.b16 %v1423
        %v1453 = vunpack.c.l.b16 %v1424
        %v1454 = vunpack.c.l.b16 %v1425
        %v1455 = vpack.c.b16 %v1452, %v1451
        %v1456 = vpack.c.b16 %v1454, %v1453
        %v1460 = vsel %vm364, %v1432, 0
        %v1463 = vsel %vm364, %v1434, 0
        %v1466 = vsel %vm364, %v1436, 0
        %v1469 = vsel %vm364, %v1438, 0
        %v1472 = vsel %vm364, %v1440, 0
        %v1475 = vsel %vm364, %v1442, 0
        %v1478 = vsel %vm364, %v1444, 0
        %v1481 = vsel %vm364, %v1446, 0
        %1483 = vmatprep.subr.bf16.mxu0 0
        %1484 = vmatpush1.bf16.msra.mxu0 %v1455
        %1485 = vmatprep.subr.bf16.mxu0 0
        %1486 = vmatpush1.bf16.msra.mxu0 %v1456
        %1487 = vmatprep.subr.bf16.mxu0 0
        %1488 = vmatpush1.bf16.msra.mxu0 0
        %1489 = vmatprep.subr.bf16.mxu0 0
        %1490 = vmatpush1.bf16.msra.mxu0 0
        %1491 = vmatprep.subr.bf16.mxu0 0
        %1492 = vmatpush1.bf16.msra.mxu0 0
        %1493 = vmatprep.subr.bf16.mxu0 0
        %1494 = vmatpush1.bf16.msra.mxu0 0
        %1495 = vmatprep.subr.bf16.mxu0 0
        %1496 = vmatpush1.bf16.msra.mxu0 0
        %1497 = vmatprep.subr.bf16.mxu0 0
        %1498 = vmatpush1.bf16.msra.mxu0 0
        %1499 = vmatprep.subr.bf16.mxu0 0
        %1500 = vmatpush1.bf16.msra.mxu0 0
        %1501 = vmatprep.subr.bf16.mxu0 0
        %1502 = vmatpush1.bf16.msra.mxu0 0
        %1503 = vmatprep.subr.bf16.mxu0 0
        %1504 = vmatpush1.bf16.msra.mxu0 0
        %1505 = vmatprep.subr.bf16.mxu0 0
        %1506 = vmatpush1.bf16.msra.mxu0 0
        %1507 = vmatprep.subr.bf16.mxu0 0
        %1508 = vmatpush1.bf16.msra.mxu0 0
        %1509 = vmatprep.subr.bf16.mxu0 0
        %1510 = vmatpush1.bf16.msra.mxu0 0
        %1511 = vmatprep.subr.bf16.mxu0 0
        %1512 = vmatpush1.bf16.msra.mxu0 0
        %1513 = vmatprep.subr.bf16.mxu0 0
        %1514 = vmatpush1.bf16.msra.mxu0 0
        %1515 = vmatprep.mubr.bf16.mxu0 0
        %1516 = vmatmul.mubr.bf16.gmra.mrb[0].mxu0 %v1460
        %v1517 = vpop.f32.mrb[0].mxu0
        %v1518 = vadd.f32 0.0, %v1517
        %v1519 = vpop.f32.mrb[0].mxu0
        %v1520 = vpop.f32.mrb[0].mxu0
        %v1521 = vpop.f32.mrb[0].mxu0
        %1522 = vmatprep.mubr.bf16.mxu0 0
        %1523 = vmatmul.mubr.bf16.gmra.mrb[0].mxu0 %v1463
        %v1524 = vpop.f32.mrb[0].mxu0
        %v1525 = vadd.f32 0.0, %v1524
        %v1526 = vpop.f32.mrb[0].mxu0
        %v1527 = vpop.f32.mrb[0].mxu0
        %v1528 = vpop.f32.mrb[0].mxu0
        %1529 = vmatprep.mubr.bf16.mxu0 0
        %1530 = vmatmul.mubr.bf16.gmra.mrb[0].mxu0 %v1466
        %v1531 = vpop.f32.mrb[0].mxu0
        %v1532 = vadd.f32 0.0, %v1531
        %v1533 = vpop.f32.mrb[0].mxu0
        %v1534 = vpop.f32.mrb[0].mxu0
        %v1535 = vpop.f32.mrb[0].mxu0
        %1536 = vmatprep.mubr.bf16.mxu0 0
        %1537 = vmatmul.mubr.bf16.gmra.mrb[0].mxu0 %v1469
        %v1538 = vpop.f32.mrb[0].mxu0
        %v1539 = vadd.f32 0.0, %v1538
        %v1540 = vpop.f32.mrb[0].mxu0
        %v1541 = vpop.f32.mrb[0].mxu0
        %v1542 = vpop.f32.mrb[0].mxu0
        %1543 = vmatprep.mubr.bf16.mxu0 0
        %1544 = vmatmul.mubr.bf16.gmra.mrb[0].mxu0 %v1472
        %v1545 = vpop.f32.mrb[0].mxu0
        %v1546 = vadd.f32 0.0, %v1545
        %v1547 = vpop.f32.mrb[0].mxu0
        %v1548 = vpop.f32.mrb[0].mxu0
        %v1549 = vpop.f32.mrb[0].mxu0
        %1550 = vmatprep.mubr.bf16.mxu0 0
        %1551 = vmatmul.mubr.bf16.gmra.mrb[0].mxu0 %v1475
        %v1552 = vpop.f32.mrb[0].mxu0
        %v1553 = vadd.f32 0.0, %v1552
        %v1554 = vpop.f32.mrb[0].mxu0
        %v1555 = vpop.f32.mrb[0].mxu0
        %v1556 = vpop.f32.mrb[0].mxu0
        %1557 = vmatprep.mubr.bf16.mxu0 0
        %1558 = vmatmul.mubr.bf16.gmra.mrb[0].mxu0 %v1478
        %v1559 = vpop.f32.mrb[0].mxu0
        %v1560 = vadd.f32 0.0, %v1559
        %v1561 = vpop.f32.mrb[0].mxu0
        %v1562 = vpop.f32.mrb[0].mxu0
        %v1563 = vpop.f32.mrb[0].mxu0
        %1564 = vmatprep.mubr.bf16.mxu0 0
        %1565 = vmatmul.mubr.bf16.gmra.mrb[0].mxu0 %v1481
        %v1566 = vpop.f32.mrb[0].mxu0
        %v1567 = vadd.f32 0.0, %v1566
        %v1568 = vpop.f32.mrb[0].mxu0
        %v1569 = vpop.f32.mrb[0].mxu0
        %v1570 = vpop.f32.mrb[0].mxu0
        %1571 = vdwg.mxu0
        %v1572 = vadd.f32 %v1366, %v1518
        %v1573 = vadd.f32 %v1373, %v1525
        %v1574 = vadd.f32 %v1380, %v1532
        %v1575 = vadd.f32 %v1387, %v1539
        %v1576 = vadd.f32 %v1394, %v1546
        %v1577 = vadd.f32 %v1401, %v1553
        %v1578 = vadd.f32 %v1408, %v1560
        %v1579 = vadd.f32 %v1415, %v1567
        %v1580 = vld [vmem:[#allocation2 + $0x8] sm:$0xf]
        %v1581 = vld [vmem:[#allocation2 + $0xc] sm:$0xf]
        %v1582 = vld [vmem:[#allocation2 + $0x10] sm:$0xf]
        %v1583 = vld [vmem:[#allocation2 + $0x14] sm:$0xf]
        %v1584 = vld [vmem:[#allocation2 + $0x18] sm:$0xf]
        %v1585 = vld [vmem:[#allocation2 + $0x1c] sm:$0xf]
        %v1586 = vld [vmem:[#allocation2 + $0x20] sm:$0xf]
        %v1587 = vld [vmem:[#allocation2 + $0x24] sm:$0xf]
        %v1588 = vld [vmem:[#allocation2 + $0x28] sm:$0xf]
        %v1589 = vld [vmem:[#allocation2 + $0x2c] sm:$0xf]
        %v1590 = vld [vmem:[#allocation2 + $0x30] sm:$0xf]
        %v1591 = vld [vmem:[#allocation2 + $0x34] sm:$0xf]
        %v1592 = vld [vmem:[#allocation2 + $0x38] sm:$0xf]
        %v1593 = vld [vmem:[#allocation2 + $0x3c] sm:$0xf]
        %v1594 = vld [vmem:[#allocation2 + $0x40] sm:$0xf]
        %v1595 = vld [vmem:[#allocation2 + $0x44] sm:$0xf]
        %s1596 = scalar_lea.vmem [#allocation9], 48
        %v1597 = vld [vmem:[%s1596] sm:$0xf]
        %v1598 = vld [vmem:[%s1596 + $0x4] sm:$0xf]
        %v1599 = vld [vmem:[%s1596 + $0x8] sm:$0xf]
        %v1600 = vld [vmem:[%s1596 + $0xc] sm:$0xf]
        %v1617 = vunpack.c.l.b16 %v1580
        %v1618 = vunpack.c.l.b16 %v1581
        %v1619 = vunpack.c.l.b16 %v1582
        %v1620 = vunpack.c.l.b16 %v1583
        %v1621 = vunpack.c.l.b16 %v1584
        %v1622 = vunpack.c.l.b16 %v1585
        %v1623 = vunpack.c.l.b16 %v1586
        %v1624 = vunpack.c.l.b16 %v1587
        %v1625 = vunpack.c.l.b16 %v1588
        %v1626 = vunpack.c.l.b16 %v1589
        %v1627 = vunpack.c.l.b16 %v1590
        %v1628 = vunpack.c.l.b16 %v1591
        %v1629 = vunpack.c.l.b16 %v1592
        %v1630 = vunpack.c.l.b16 %v1593
        %v1631 = vunpack.c.l.b16 %v1594
        %v1632 = vunpack.c.l.b16 %v1595
        %v1633 = vpack.c.b16 %v1618, %v1617
        %v1634 = vpack.c.b16 %v1620, %v1619
        %v1635 = vpack.c.b16 %v1622, %v1621
        %v1636 = vpack.c.b16 %v1624, %v1623
        %v1637 = vpack.c.b16 %v1626, %v1625
        %v1638 = vpack.c.b16 %v1628, %v1627
        %v1639 = vpack.c.b16 %v1630, %v1629
        %v1640 = vpack.c.b16 %v1632, %v1631
        %v1645 = vunpack.c.l.b16 %v1597
        %v1646 = vunpack.c.l.b16 %v1598
        %v1647 = vunpack.c.l.b16 %v1599
        %v1648 = vunpack.c.l.b16 %v1600
        %v1649 = vpack.c.b16 %v1646, %v1645
        %v1650 = vpack.c.b16 %v1648, %v1647
        %v1654 = vsel %vm364, %v1633, 0
        %v1657 = vsel %vm364, %v1634, 0
        %v1660 = vsel %vm364, %v1635, 0
        %v1663 = vsel %vm364, %v1636, 0
        %v1666 = vsel %vm364, %v1637, 0
        %v1669 = vsel %vm364, %v1638, 0
        %v1672 = vsel %vm364, %v1639, 0
        %v1675 = vsel %vm364, %v1640, 0
        %1677 = vmatprep.subr.bf16.mxu0 0
        %1678 = vmatpush1.bf16.msra.mxu0 %v1649
        %1679 = vmatprep.subr.bf16.mxu0 0
        %1680 = vmatpush1.bf16.msra.mxu0 %v1650
        %1681 = vmatprep.subr.bf16.mxu0 0
        %1682 = vmatpush1.bf16.msra.mxu0 0
        %1683 = vmatprep.subr.bf16.mxu0 0
        %1684 = vmatpush1.bf16.msra.mxu0 0
        %1685 = vmatprep.subr.bf16.mxu0 0
        %1686 = vmatpush1.bf16.msra.mxu0 0
        %1687 = vmatprep.subr.bf16.mxu0 0
        %1688 = vmatpush1.bf16.msra.mxu0 0
        %1689 = vmatprep.subr.bf16.mxu0 0
        %1690 = vmatpush1.bf16.msra.mxu0 0
        %1691 = vmatprep.subr.bf16.mxu0 0
        %1692 = vmatpush1.bf16.msra.mxu0 0
        %1693 = vmatprep.subr.bf16.mxu0 0
        %1694 = vmatpush1.bf16.msra.mxu0 0
        %1695 = vmatprep.subr.bf16.mxu0 0
        %1696 = vmatpush1.bf16.msra.mxu0 0
        %1697 = vmatprep.subr.bf16.mxu0 0
        %1698 = vmatpush1.bf16.msra.mxu0 0
        %1699 = vmatprep.subr.bf16.mxu0 0
        %1700 = vmatpush1.bf16.msra.mxu0 0
        %1701 = vmatprep.subr.bf16.mxu0 0
        %1702 = vmatpush1.bf16.msra.mxu0 0
        %1703 = vmatprep.subr.bf16.mxu0 0
        %1704 = vmatpush1.bf16.msra.mxu0 0
        %1705 = vmatprep.subr.bf16.mxu0 0
        %1706 = vmatpush1.bf16.msra.mxu0 0
        %1707 = vmatprep.subr.bf16.mxu0 0
        %1708 = vmatpush1.bf16.msra.mxu0 0
        %1709 = vmatprep.mubr.bf16.mxu0 0
        %1710 = vmatmul.mubr.bf16.gmra.mrb[0].mxu0 %v1654
        %v1711 = vpop.f32.mrb[0].mxu0
        %v1712 = vadd.f32 0.0, %v1711
        %v1713 = vpop.f32.mrb[0].mxu0
        %v1714 = vpop.f32.mrb[0].mxu0
        %v1715 = vpop.f32.mrb[0].mxu0
        %1716 = vmatprep.mubr.bf16.mxu0 0
        %1717 = vmatmul.mubr.bf16.gmra.mrb[0].mxu0 %v1657
        %v1718 = vpop.f32.mrb[0].mxu0
        %v1719 = vadd.f32 0.0, %v1718
        %v1720 = vpop.f32.mrb[0].mxu0
        %v1721 = vpop.f32.mrb[0].mxu0
        %v1722 = vpop.f32.mrb[0].mxu0
        %1723 = vmatprep.mubr.bf16.mxu0 0
        %1724 = vmatmul.mubr.bf16.gmra.mrb[0].mxu0 %v1660
        %v1725 = vpop.f32.mrb[0].mxu0
        %v1726 = vadd.f32 0.0, %v1725
        %v1727 = vpop.f32.mrb[0].mxu0
        %v1728 = vpop.f32.mrb[0].mxu0
        %v1729 = vpop.f32.mrb[0].mxu0
        %1730 = vmatprep.mubr.bf16.mxu0 0
        %1731 = vmatmul.mubr.bf16.gmra.mrb[0].mxu0 %v1663
        %v1732 = vpop.f32.mrb[0].mxu0
        %v1733 = vadd.f32 0.0, %v1732
        %v1734 = vpop.f32.mrb[0].mxu0
        %v1735 = vpop.f32.mrb[0].mxu0
        %v1736 = vpop.f32.mrb[0].mxu0
        %1737 = vmatprep.mubr.bf16.mxu0 0
        %1738 = vmatmul.mubr.bf16.gmra.mrb[0].mxu0 %v1666
        %v1739 = vpop.f32.mrb[0].mxu0
        %v1740 = vadd.f32 0.0, %v1739
        %v1741 = vpop.f32.mrb[0].mxu0
        %v1742 = vpop.f32.mrb[0].mxu0
        %v1743 = vpop.f32.mrb[0].mxu0
        %1744 = vmatprep.mubr.bf16.mxu0 0
        %1745 = vmatmul.mubr.bf16.gmra.mrb[0].mxu0 %v1669
        %v1746 = vpop.f32.mrb[0].mxu0
        %v1747 = vadd.f32 0.0, %v1746
        %v1748 = vpop.f32.mrb[0].mxu0
        %v1749 = vpop.f32.mrb[0].mxu0
        %v1750 = vpop.f32.mrb[0].mxu0
        %1751 = vmatprep.mubr.bf16.mxu0 0
        %1752 = vmatmul.mubr.bf16.gmra.mrb[0].mxu0 %v1672
        %v1753 = vpop.f32.mrb[0].mxu0
        %v1754 = vadd.f32 0.0, %v1753
        %v1755 = vpop.f32.mrb[0].mxu0
        %v1756 = vpop.f32.mrb[0].mxu0
        %v1757 = vpop.f32.mrb[0].mxu0
        %1758 = vmatprep.mubr.bf16.mxu0 0
        %1759 = vmatmul.mubr.bf16.gmra.mrb[0].mxu0 %v1675
        %v1760 = vpop.f32.mrb[0].mxu0
        %v1761 = vadd.f32 0.0, %v1760
        %v1762 = vpop.f32.mrb[0].mxu0
        %v1763 = vpop.f32.mrb[0].mxu0
        %v1764 = vpop.f32.mrb[0].mxu0
        %1765 = vdwg.mxu0
        %v1766 = vadd.f32 %v1572, %v1712
        %v1767 = vadd.f32 %v1573, %v1719
        %v1768 = vadd.f32 %v1574, %v1726
        %v1769 = vadd.f32 %v1575, %v1733
        %v1770 = vadd.f32 %v1576, %v1740
        %v1771 = vadd.f32 %v1577, %v1747
        %v1772 = vadd.f32 %v1578, %v1754
        %v1773 = vadd.f32 %v1579, %v1761
        %v1774 = vld [vmem:[#allocation2 + $0x8] sm:$0xf]
        %v1775 = vld [vmem:[#allocation2 + $0xc] sm:$0xf]
        %v1776 = vld [vmem:[#allocation2 + $0x10] sm:$0xf]
        %v1777 = vld [vmem:[#allocation2 + $0x14] sm:$0xf]
        %v1778 = vld [vmem:[#allocation2 + $0x18] sm:$0xf]
        %v1779 = vld [vmem:[#allocation2 + $0x1c] sm:$0xf]
        %v1780 = vld [vmem:[#allocation2 + $0x20] sm:$0xf]
        %v1781 = vld [vmem:[#allocation2 + $0x24] sm:$0xf]
        %v1782 = vld [vmem:[#allocation2 + $0x28] sm:$0xf]
        %v1783 = vld [vmem:[#allocation2 + $0x2c] sm:$0xf]
        %v1784 = vld [vmem:[#allocation2 + $0x30] sm:$0xf]
        %v1785 = vld [vmem:[#allocation2 + $0x34] sm:$0xf]
        %v1786 = vld [vmem:[#allocation2 + $0x38] sm:$0xf]
        %v1787 = vld [vmem:[#allocation2 + $0x3c] sm:$0xf]
        %v1788 = vld [vmem:[#allocation2 + $0x40] sm:$0xf]
        %v1789 = vld [vmem:[#allocation2 + $0x44] sm:$0xf]
        %v1790 = vld [vmem:[#allocation2 + $0x48] sm:$0x1]
        %s1791 = scalar_lea.vmem [#allocation9], 64
        %v1792 = vld [vmem:[%s1791] sm:$0xf]
        %v1793 = vld [vmem:[%s1791 + $0x4] sm:$0xf]
        %v1794 = vld [vmem:[%s1791 + $0x8] sm:$0xf]
        %v1795 = vld [vmem:[%s1791 + $0xc] sm:$0xf]
        %v1813 = vunpack.c.l.b16 %v1774
        %v1814 = vunpack.c.l.b16 %v1775
        %v1815 = vunpack.c.l.b16 %v1776
        %v1816 = vunpack.c.l.b16 %v1777
        %v1817 = vunpack.c.l.b16 %v1778
        %v1818 = vunpack.c.l.b16 %v1779
        %v1819 = vunpack.c.l.b16 %v1780
        %v1820 = vunpack.c.l.b16 %v1781
        %v1821 = vunpack.c.l.b16 %v1782
        %v1822 = vunpack.c.l.b16 %v1783
        %v1823 = vunpack.c.l.b16 %v1784
        %v1824 = vunpack.c.l.b16 %v1785
        %v1825 = vunpack.c.l.b16 %v1786
        %v1826 = vunpack.c.l.b16 %v1787
        %v1827 = vunpack.c.l.b16 %v1788
        %v1828 = vunpack.c.l.b16 %v1789
        %v1829 = vunpack.c.l.b16 %v1790
        %v1830 = vpack.c.b16 %v1814, %v1813
        %v1831 = vpack.c.b16 %v1816, %v1815
        %v1832 = vpack.c.b16 %v1818, %v1817
        %v1833 = vpack.c.b16 %v1820, %v1819
        %v1834 = vpack.c.b16 %v1822, %v1821
        %v1835 = vpack.c.b16 %v1824, %v1823
        %v1836 = vpack.c.b16 %v1826, %v1825
        %v1837 = vpack.c.b16 %v1828, %v1827
        %v1838 = vpack.c.b16 %v1829, %v1829
        %v1840 = vshrl.u32 %v1830, 16
        %v1842 = vshll.u32 %v1830, 16
        %v1844 = vrot.slane %v1842, 1
        %v1845 = vor.u32 %v1840, %v1844
        %v1847 = vshll.u32 %v1831, 16
        %v1849 = vrot.slane %v1847, 1
        %v1850 = vsel %vm1109, %v1845, %v1849
        %v1851 = vshrl.u32 %v1831, 16
        %v1853 = vor.u32 %v1851, %v1849
        %v1855 = vshll.u32 %v1832, 16
        %v1857 = vrot.slane %v1855, 1
        %v1858 = vsel %vm1109, %v1853, %v1857
        %v1859 = vshrl.u32 %v1832, 16
        %v1861 = vor.u32 %v1859, %v1857
        %v1863 = vshll.u32 %v1833, 16
        %v1865 = vrot.slane %v1863, 1
        %v1866 = vsel %vm1109, %v1861, %v1865
        %v1867 = vshrl.u32 %v1833, 16
        %v1869 = vor.u32 %v1867, %v1865
        %v1871 = vshll.u32 %v1834, 16
        %v1873 = vrot.slane %v1871, 1
        %v1874 = vsel %vm1109, %v1869, %v1873
        %v1875 = vshrl.u32 %v1834, 16
        %v1877 = vor.u32 %v1875, %v1873
        %v1879 = vshll.u32 %v1835, 16
        %v1881 = vrot.slane %v1879, 1
        %v1882 = vsel %vm1109, %v1877, %v1881
        %v1883 = vshrl.u32 %v1835, 16
        %v1885 = vor.u32 %v1883, %v1881
        %v1887 = vshll.u32 %v1836, 16
        %v1889 = vrot.slane %v1887, 1
        %v1890 = vsel %vm1109, %v1885, %v1889
        %v1891 = vshrl.u32 %v1836, 16
        %v1893 = vor.u32 %v1891, %v1889
        %v1895 = vshll.u32 %v1837, 16
        %v1897 = vrot.slane %v1895, 1
        %v1898 = vsel %vm1109, %v1893, %v1897
        %v1899 = vshrl.u32 %v1837, 16
        %v1901 = vor.u32 %v1899, %v1897
        %v1903 = vshll.u32 %v1838, 16
        %v1905 = vrot.slane %v1903, 1
        %v1906 = vsel %vm1109, %v1901, %v1905
        %v1911 = vunpack.c.l.b16 %v1792
        %v1912 = vunpack.c.l.b16 %v1793
        %v1913 = vunpack.c.l.b16 %v1794
        %v1914 = vunpack.c.l.b16 %v1795
        %v1915 = vpack.c.b16 %v1912, %v1911
        %v1916 = vpack.c.b16 %v1914, %v1913
        %v1920 = vsel %vm364, %v1850, 0
        %v1923 = vsel %vm364, %v1858, 0
        %v1926 = vsel %vm364, %v1866, 0
        %v1929 = vsel %vm364, %v1874, 0
        %v1932 = vsel %vm364, %v1882, 0
        %v1935 = vsel %vm364, %v1890, 0
        %v1938 = vsel %vm364, %v1898, 0
        %v1941 = vsel %vm364, %v1906, 0
        %1943 = vmatprep.subr.bf16.mxu0 0
        %1944 = vmatpush1.bf16.msra.mxu0 %v1915
        %1945 = vmatprep.subr.bf16.mxu0 0
        %1946 = vmatpush1.bf16.msra.mxu0 %v1916
        %1947 = vmatprep.subr.bf16.mxu0 0
        %1948 = vmatpush1.bf16.msra.mxu0 0
        %1949 = vmatprep.subr.bf16.mxu0 0
        %1950 = vmatpush1.bf16.msra.mxu0 0
        %1951 = vmatprep.subr.bf16.mxu0 0
        %1952 = vmatpush1.bf16.msra.mxu0 0
        %1953 = vmatprep.subr.bf16.mxu0 0
        %1954 = vmatpush1.bf16.msra.mxu0 0
        %1955 = vmatprep.subr.bf16.mxu0 0
        %1956 = vmatpush1.bf16.msra.mxu0 0
        %1957 = vmatprep.subr.bf16.mxu0 0
        %1958 = vmatpush1.bf16.msra.mxu0 0
        %1959 = vmatprep.subr.bf16.mxu0 0
        %1960 = vmatpush1.bf16.msra.mxu0 0
        %1961 = vmatprep.subr.bf16.mxu0 0
        %1962 = vmatpush1.bf16.msra.mxu0 0
        %1963 = vmatprep.subr.bf16.mxu0 0
        %1964 = vmatpush1.bf16.msra.mxu0 0
        %1965 = vmatprep.subr.bf16.mxu0 0
        %1966 = vmatpush1.bf16.msra.mxu0 0
        %1967 = vmatprep.subr.bf16.mxu0 0
        %1968 = vmatpush1.bf16.msra.mxu0 0
        %1969 = vmatprep.subr.bf16.mxu0 0
        %1970 = vmatpush1.bf16.msra.mxu0 0
        %1971 = vmatprep.subr.bf16.mxu0 0
        %1972 = vmatpush1.bf16.msra.mxu0 0
        %1973 = vmatprep.subr.bf16.mxu0 0
        %1974 = vmatpush1.bf16.msra.mxu0 0
        %1975 = vmatprep.mubr.bf16.mxu0 0
        %1976 = vmatmul.mubr.bf16.gmra.mrb[0].mxu0 %v1920
        %v1977 = vpop.f32.mrb[0].mxu0
        %v1978 = vadd.f32 0.0, %v1977
        %v1979 = vpop.f32.mrb[0].mxu0
        %v1980 = vpop.f32.mrb[0].mxu0
        %v1981 = vpop.f32.mrb[0].mxu0
        %1982 = vmatprep.mubr.bf16.mxu0 0
        %1983 = vmatmul.mubr.bf16.gmra.mrb[0].mxu0 %v1923
        %v1984 = vpop.f32.mrb[0].mxu0
        %v1985 = vadd.f32 0.0, %v1984
        %v1986 = vpop.f32.mrb[0].mxu0
        %v1987 = vpop.f32.mrb[0].mxu0
        %v1988 = vpop.f32.mrb[0].mxu0
        %1989 = vmatprep.mubr.bf16.mxu0 0
        %1990 = vmatmul.mubr.bf16.gmra.mrb[0].mxu0 %v1926
        %v1991 = vpop.f32.mrb[0].mxu0
        %v1992 = vadd.f32 0.0, %v1991
        %v1993 = vpop.f32.mrb[0].mxu0
        %v1994 = vpop.f32.mrb[0].mxu0
        %v1995 = vpop.f32.mrb[0].mxu0
        %1996 = vmatprep.mubr.bf16.mxu0 0
        %1997 = vmatmul.mubr.bf16.gmra.mrb[0].mxu0 %v1929
        %v1998 = vpop.f32.mrb[0].mxu0
        %v1999 = vadd.f32 0.0, %v1998
        %v2000 = vpop.f32.mrb[0].mxu0
        %v2001 = vpop.f32.mrb[0].mxu0
        %v2002 = vpop.f32.mrb[0].mxu0
        %2003 = vmatprep.mubr.bf16.mxu0 0
        %2004 = vmatmul.mubr.bf16.gmra.mrb[0].mxu0 %v1932
        %v2005 = vpop.f32.mrb[0].mxu0
        %v2006 = vadd.f32 0.0, %v2005
        %v2007 = vpop.f32.mrb[0].mxu0
        %v2008 = vpop.f32.mrb[0].mxu0
        %v2009 = vpop.f32.mrb[0].mxu0
        %2010 = vmatprep.mubr.bf16.mxu0 0
        %2011 = vmatmul.mubr.bf16.gmra.mrb[0].mxu0 %v1935
        %v2012 = vpop.f32.mrb[0].mxu0
        %v2013 = vadd.f32 0.0, %v2012
        %v2014 = vpop.f32.mrb[0].mxu0
        %v2015 = vpop.f32.mrb[0].mxu0
        %v2016 = vpop.f32.mrb[0].mxu0
        %2017 = vmatprep.mubr.bf16.mxu0 0
        %2018 = vmatmul.mubr.bf16.gmra.mrb[0].mxu0 %v1938
        %v2019 = vpop.f32.mrb[0].mxu0
        %v2020 = vadd.f32 0.0, %v2019
        %v2021 = vpop.f32.mrb[0].mxu0
        %v2022 = vpop.f32.mrb[0].mxu0
        %v2023 = vpop.f32.mrb[0].mxu0
        %2024 = vmatprep.mubr.bf16.mxu0 0
        %2025 = vmatmul.mubr.bf16.gmra.mrb[0].mxu0 %v1941
        %v2026 = vpop.f32.mrb[0].mxu0
        %v2027 = vadd.f32 0.0, %v2026
        %v2028 = vpop.f32.mrb[0].mxu0
        %v2029 = vpop.f32.mrb[0].mxu0
        %v2030 = vpop.f32.mrb[0].mxu0
        %2031 = vdwg.mxu0
        %v2032 = vadd.f32 %v1766, %v1978
        %v2033 = vadd.f32 %v1767, %v1985
        %v2034 = vadd.f32 %v1768, %v1992
        %v2035 = vadd.f32 %v1769, %v1999
        %v2036 = vadd.f32 %v1770, %v2006
        %v2037 = vadd.f32 %v1771, %v2013
        %v2038 = vadd.f32 %v1772, %v2020
        %v2039 = vadd.f32 %v1773, %v2027
        %v2040 = vld [vmem:[#allocation2 + $0x8] sm:$0xe]
        %s2041 = scalar_lea.vmem [#allocation9], 80
        %v2042 = vld [vmem:[%s2041] sm:$0xf]
        %v2043 = vld [vmem:[%s2041 + $0x4] sm:$0xf]
        %v2044 = vld [vmem:[%s2041 + $0x8] sm:$0xf]
        %v2045 = vld [vmem:[%s2041 + $0xc] sm:$0xf]
        %v2047 = vunpack.c.l.b16 %v2040
        %v2048 = vpack.c.b16 %v1814, %v2047
        %v2049 = vrot.slane %v2048, 1
        %v2050 = vrot.slane %v1831, 1
        %v2051 = vsel %vm1429, %v2049, %v2050
        %v2052 = vrot.slane %v1832, 1
        %v2053 = vsel %vm1429, %v2050, %v2052
        %v2054 = vrot.slane %v1833, 1
        %v2055 = vsel %vm1429, %v2052, %v2054
        %v2056 = vrot.slane %v1834, 1
        %v2057 = vsel %vm1429, %v2054, %v2056
        %v2058 = vrot.slane %v1835, 1
        %v2059 = vsel %vm1429, %v2056, %v2058
        %v2060 = vrot.slane %v1836, 1
        %v2061 = vsel %vm1429, %v2058, %v2060
        %v2062 = vrot.slane %v1837, 1
        %v2063 = vsel %vm1429, %v2060, %v2062
        %v2064 = vrot.slane %v1838, 1
        %v2065 = vsel %vm1429, %v2062, %v2064
        %v2070 = vunpack.c.l.b16 %v2042
        %v2071 = vunpack.c.l.b16 %v2043
        %v2072 = vunpack.c.l.b16 %v2044
        %v2073 = vunpack.c.l.b16 %v2045
        %v2074 = vpack.c.b16 %v2071, %v2070
        %v2075 = vpack.c.b16 %v2073, %v2072
        %v2079 = vsel %vm364, %v2051, 0
        %v2082 = vsel %vm364, %v2053, 0
        %v2085 = vsel %vm364, %v2055, 0
        %v2088 = vsel %vm364, %v2057, 0
        %v2091 = vsel %vm364, %v2059, 0
        %v2094 = vsel %vm364, %v2061, 0
        %v2097 = vsel %vm364, %v2063, 0
        %v2100 = vsel %vm364, %v2065, 0
        %2102 = vmatprep.subr.bf16.mxu0 0
        %2103 = vmatpush1.bf16.msra.mxu0 %v2074
        %2104 = vmatprep.subr.bf16.mxu0 0
        %2105 = vmatpush1.bf16.msra.mxu0 %v2075
        %2106 = vmatprep.subr.bf16.mxu0 0
        %2107 = vmatpush1.bf16.msra.mxu0 0
        %2108 = vmatprep.subr.bf16.mxu0 0
        %2109 = vmatpush1.bf16.msra.mxu0 0
        %2110 = vmatprep.subr.bf16.mxu0 0
        %2111 = vmatpush1.bf16.msra.mxu0 0
        %2112 = vmatprep.subr.bf16.mxu0 0
        %2113 = vmatpush1.bf16.msra.mxu0 0
        %2114 = vmatprep.subr.bf16.mxu0 0
        %2115 = vmatpush1.bf16.msra.mxu0 0
        %2116 = vmatprep.subr.bf16.mxu0 0
        %2117 = vmatpush1.bf16.msra.mxu0 0
        %2118 = vmatprep.subr.bf16.mxu0 0
        %2119 = vmatpush1.bf16.msra.mxu0 0
        %2120 = vmatprep.subr.bf16.mxu0 0
        %2121 = vmatpush1.bf16.msra.mxu0 0
        %2122 = vmatprep.subr.bf16.mxu0 0
        %2123 = vmatpush1.bf16.msra.mxu0 0
        %2124 = vmatprep.subr.bf16.mxu0 0
        %2125 = vmatpush1.bf16.msra.mxu0 0
        %2126 = vmatprep.subr.bf16.mxu0 0
        %2127 = vmatpush1.bf16.msra.mxu0 0
        %2128 = vmatprep.subr.bf16.mxu0 0
        %2129 = vmatpush1.bf16.msra.mxu0 0
        %2130 = vmatprep.subr.bf16.mxu0 0
        %2131 = vmatpush1.bf16.msra.mxu0 0
        %2132 = vmatprep.subr.bf16.mxu0 0
        %2133 = vmatpush1.bf16.msra.mxu0 0
        %2134 = vmatprep.mubr.bf16.mxu0 0
        %2135 = vmatmul.mubr.bf16.gmra.mrb[0].mxu0 %v2079
        %v2136 = vpop.f32.mrb[0].mxu0
        %v2137 = vadd.f32 0.0, %v2136
        %v2138 = vpop.f32.mrb[0].mxu0
        %v2139 = vpop.f32.mrb[0].mxu0
        %v2140 = vpop.f32.mrb[0].mxu0
        %2141 = vmatprep.mubr.bf16.mxu0 0
        %2142 = vmatmul.mubr.bf16.gmra.mrb[0].mxu0 %v2082
        %v2143 = vpop.f32.mrb[0].mxu0
        %v2144 = vadd.f32 0.0, %v2143
        %v2145 = vpop.f32.mrb[0].mxu0
        %v2146 = vpop.f32.mrb[0].mxu0
        %v2147 = vpop.f32.mrb[0].mxu0
        %2148 = vmatprep.mubr.bf16.mxu0 0
        %2149 = vmatmul.mubr.bf16.gmra.mrb[0].mxu0 %v2085
        %v2150 = vpop.f32.mrb[0].mxu0
        %v2151 = vadd.f32 0.0, %v2150
        %v2152 = vpop.f32.mrb[0].mxu0
        %v2153 = vpop.f32.mrb[0].mxu0
        %v2154 = vpop.f32.mrb[0].mxu0
        %2155 = vmatprep.mubr.bf16.mxu0 0
        %2156 = vmatmul.mubr.bf16.gmra.mrb[0].mxu0 %v2088
        %v2157 = vpop.f32.mrb[0].mxu0
        %v2158 = vadd.f32 0.0, %v2157
        %v2159 = vpop.f32.mrb[0].mxu0
        %v2160 = vpop.f32.mrb[0].mxu0
        %v2161 = vpop.f32.mrb[0].mxu0
        %2162 = vmatprep.mubr.bf16.mxu0 0
        %2163 = vmatmul.mubr.bf16.gmra.mrb[0].mxu0 %v2091
        %v2164 = vpop.f32.mrb[0].mxu0
        %v2165 = vadd.f32 0.0, %v2164
        %v2166 = vpop.f32.mrb[0].mxu0
        %v2167 = vpop.f32.mrb[0].mxu0
        %v2168 = vpop.f32.mrb[0].mxu0
        %2169 = vmatprep.mubr.bf16.mxu0 0
        %2170 = vmatmul.mubr.bf16.gmra.mrb[0].mxu0 %v2094
        %v2171 = vpop.f32.mrb[0].mxu0
        %v2172 = vadd.f32 0.0, %v2171
        %v2173 = vpop.f32.mrb[0].mxu0
        %v2174 = vpop.f32.mrb[0].mxu0
        %v2175 = vpop.f32.mrb[0].mxu0
        %2176 = vmatprep.mubr.bf16.mxu0 0
        %2177 = vmatmul.mubr.bf16.gmra.mrb[0].mxu0 %v2097
        %v2178 = vpop.f32.mrb[0].mxu0
        %v2179 = vadd.f32 0.0, %v2178
        %v2180 = vpop.f32.mrb[0].mxu0
        %v2181 = vpop.f32.mrb[0].mxu0
        %v2182 = vpop.f32.mrb[0].mxu0
        %2183 = vmatprep.mubr.bf16.mxu0 0
        %2184 = vmatmul.mubr.bf16.gmra.mrb[0].mxu0 %v2100
        %v2185 = vpop.f32.mrb[0].mxu0
        %v2186 = vadd.f32 0.0, %v2185
        %v2187 = vpop.f32.mrb[0].mxu0
        %v2188 = vpop.f32.mrb[0].mxu0
        %v2189 = vpop.f32.mrb[0].mxu0
        %2190 = vdwg.mxu0
        %v2191 = vadd.f32 %v2032, %v2137
        %v2192 = vadd.f32 %v2033, %v2144
        %v2193 = vadd.f32 %v2034, %v2151
        %v2194 = vadd.f32 %v2035, %v2158
        %v2195 = vadd.f32 %v2036, %v2165
        %v2196 = vadd.f32 %v2037, %v2172
        %v2197 = vadd.f32 %v2038, %v2179
        %v2198 = vadd.f32 %v2039, %v2186
        %v2199 = vld [vmem:[#allocation2 + $0x10] sm:$0xf]
        %v2200 = vld [vmem:[#allocation2 + $0x14] sm:$0xf]
        %v2201 = vld [vmem:[#allocation2 + $0x18] sm:$0xf]
        %v2202 = vld [vmem:[#allocation2 + $0x1c] sm:$0xf]
        %v2203 = vld [vmem:[#allocation2 + $0x20] sm:$0xf]
        %v2204 = vld [vmem:[#allocation2 + $0x24] sm:$0xf]
        %v2205 = vld [vmem:[#allocation2 + $0x28] sm:$0xf]
        %v2206 = vld [vmem:[#allocation2 + $0x2c] sm:$0xf]
        %v2207 = vld [vmem:[#allocation2 + $0x30] sm:$0xf]
        %v2208 = vld [vmem:[#allocation2 + $0x34] sm:$0xf]
        %v2209 = vld [vmem:[#allocation2 + $0x38] sm:$0xf]
        %v2210 = vld [vmem:[#allocation2 + $0x3c] sm:$0xf]
        %v2211 = vld [vmem:[#allocation2 + $0x40] sm:$0xf]
        %v2212 = vld [vmem:[#allocation2 + $0x44] sm:$0xf]
        %v2213 = vld [vmem:[#allocation2 + $0x48] sm:$0xf]
        %v2214 = vld [vmem:[#allocation2 + $0x4c] sm:$0xf]
        %s2215 = scalar_lea.vmem [#allocation9], 96
        %v2216 = vld [vmem:[%s2215] sm:$0xf]
        %v2217 = vld [vmem:[%s2215 + $0x4] sm:$0xf]
        %v2218 = vld [vmem:[%s2215 + $0x8] sm:$0xf]
        %v2219 = vld [vmem:[%s2215 + $0xc] sm:$0xf]
        %v2236 = vunpack.c.l.b16 %v2199
        %v2237 = vunpack.c.l.b16 %v2200
        %v2238 = vunpack.c.l.b16 %v2201
        %v2239 = vunpack.c.l.b16 %v2202
        %v2240 = vunpack.c.l.b16 %v2203
        %v2241 = vunpack.c.l.b16 %v2204
        %v2242 = vunpack.c.l.b16 %v2205
        %v2243 = vunpack.c.l.b16 %v2206
        %v2244 = vunpack.c.l.b16 %v2207
        %v2245 = vunpack.c.l.b16 %v2208
        %v2246 = vunpack.c.l.b16 %v2209
        %v2247 = vunpack.c.l.b16 %v2210
        %v2248 = vunpack.c.l.b16 %v2211
        %v2249 = vunpack.c.l.b16 %v2212
        %v2250 = vunpack.c.l.b16 %v2213
        %v2251 = vunpack.c.l.b16 %v2214
        %v2252 = vpack.c.b16 %v2237, %v2236
        %v2253 = vpack.c.b16 %v2239, %v2238
        %v2254 = vpack.c.b16 %v2241, %v2240
        %v2255 = vpack.c.b16 %v2243, %v2242
        %v2256 = vpack.c.b16 %v2245, %v2244
        %v2257 = vpack.c.b16 %v2247, %v2246
        %v2258 = vpack.c.b16 %v2249, %v2248
        %v2259 = vpack.c.b16 %v2251, %v2250
        %v2264 = vunpack.c.l.b16 %v2216
        %v2265 = vunpack.c.l.b16 %v2217
        %v2266 = vunpack.c.l.b16 %v2218
        %v2267 = vunpack.c.l.b16 %v2219
        %v2268 = vpack.c.b16 %v2265, %v2264
        %v2269 = vpack.c.b16 %v2267, %v2266
        %v2273 = vsel %vm364, %v2252, 0
        %v2276 = vsel %vm364, %v2253, 0
        %v2279 = vsel %vm364, %v2254, 0
        %v2282 = vsel %vm364, %v2255, 0
        %v2285 = vsel %vm364, %v2256, 0
        %v2288 = vsel %vm364, %v2257, 0
        %v2291 = vsel %vm364, %v2258, 0
        %v2294 = vsel %vm364, %v2259, 0
        %2296 = vmatprep.subr.bf16.mxu0 0
        %2297 = vmatpush1.bf16.msra.mxu0 %v2268
        %2298 = vmatprep.subr.bf16.mxu0 0
        %2299 = vmatpush1.bf16.msra.mxu0 %v2269
        %2300 = vmatprep.subr.bf16.mxu0 0
        %2301 = vmatpush1.bf16.msra.mxu0 0
        %2302 = vmatprep.subr.bf16.mxu0 0
        %2303 = vmatpush1.bf16.msra.mxu0 0
        %2304 = vmatprep.subr.bf16.mxu0 0
        %2305 = vmatpush1.bf16.msra.mxu0 0
        %2306 = vmatprep.subr.bf16.mxu0 0
        %2307 = vmatpush1.bf16.msra.mxu0 0
        %2308 = vmatprep.subr.bf16.mxu0 0
        %2309 = vmatpush1.bf16.msra.mxu0 0
        %2310 = vmatprep.subr.bf16.mxu0 0
        %2311 = vmatpush1.bf16.msra.mxu0 0
        %2312 = vmatprep.subr.bf16.mxu0 0
        %2313 = vmatpush1.bf16.msra.mxu0 0
        %2314 = vmatprep.subr.bf16.mxu0 0
        %2315 = vmatpush1.bf16.msra.mxu0 0
        %2316 = vmatprep.subr.bf16.mxu0 0
        %2317 = vmatpush1.bf16.msra.mxu0 0
        %2318 = vmatprep.subr.bf16.mxu0 0
        %2319 = vmatpush1.bf16.msra.mxu0 0
        %2320 = vmatprep.subr.bf16.mxu0 0
        %2321 = vmatpush1.bf16.msra.mxu0 0
        %2322 = vmatprep.subr.bf16.mxu0 0
        %2323 = vmatpush1.bf16.msra.mxu0 0
        %2324 = vmatprep.subr.bf16.mxu0 0
        %2325 = vmatpush1.bf16.msra.mxu0 0
        %2326 = vmatprep.subr.bf16.mxu0 0
        %2327 = vmatpush1.bf16.msra.mxu0 0
        %2328 = vmatprep.mubr.bf16.mxu0 0
        %2329 = vmatmul.mubr.bf16.gmra.mrb[0].mxu0 %v2273
        %v2330 = vpop.f32.mrb[0].mxu0
        %v2331 = vadd.f32 0.0, %v2330
        %v2332 = vpop.f32.mrb[0].mxu0
        %v2333 = vpop.f32.mrb[0].mxu0
        %v2334 = vpop.f32.mrb[0].mxu0
        %2335 = vmatprep.mubr.bf16.mxu0 0
        %2336 = vmatmul.mubr.bf16.gmra.mrb[0].mxu0 %v2276
        %v2337 = vpop.f32.mrb[0].mxu0
        %v2338 = vadd.f32 0.0, %v2337
        %v2339 = vpop.f32.mrb[0].mxu0
        %v2340 = vpop.f32.mrb[0].mxu0
        %v2341 = vpop.f32.mrb[0].mxu0
        %2342 = vmatprep.mubr.bf16.mxu0 0
        %2343 = vmatmul.mubr.bf16.gmra.mrb[0].mxu0 %v2279
        %v2344 = vpop.f32.mrb[0].mxu0
        %v2345 = vadd.f32 0.0, %v2344
        %v2346 = vpop.f32.mrb[0].mxu0
        %v2347 = vpop.f32.mrb[0].mxu0
        %v2348 = vpop.f32.mrb[0].mxu0
        %2349 = vmatprep.mubr.bf16.mxu0 0
        %2350 = vmatmul.mubr.bf16.gmra.mrb[0].mxu0 %v2282
        %v2351 = vpop.f32.mrb[0].mxu0
        %v2352 = vadd.f32 0.0, %v2351
        %v2353 = vpop.f32.mrb[0].mxu0
        %v2354 = vpop.f32.mrb[0].mxu0
        %v2355 = vpop.f32.mrb[0].mxu0
        %2356 = vmatprep.mubr.bf16.mxu0 0
        %2357 = vmatmul.mubr.bf16.gmra.mrb[0].mxu0 %v2285
        %v2358 = vpop.f32.mrb[0].mxu0
        %v2359 = vadd.f32 0.0, %v2358
        %v2360 = vpop.f32.mrb[0].mxu0
        %v2361 = vpop.f32.mrb[0].mxu0
        %v2362 = vpop.f32.mrb[0].mxu0
        %2363 = vmatprep.mubr.bf16.mxu0 0
        %2364 = vmatmul.mubr.bf16.gmra.mrb[0].mxu0 %v2288
        %v2365 = vpop.f32.mrb[0].mxu0
        %v2366 = vadd.f32 0.0, %v2365
        %v2367 = vpop.f32.mrb[0].mxu0
        %v2368 = vpop.f32.mrb[0].mxu0
        %v2369 = vpop.f32.mrb[0].mxu0
        %2370 = vmatprep.mubr.bf16.mxu0 0
        %2371 = vmatmul.mubr.bf16.gmra.mrb[0].mxu0 %v2291
        %v2372 = vpop.f32.mrb[0].mxu0
        %v2373 = vadd.f32 0.0, %v2372
        %v2374 = vpop.f32.mrb[0].mxu0
        %v2375 = vpop.f32.mrb[0].mxu0
        %v2376 = vpop.f32.mrb[0].mxu0
        %2377 = vmatprep.mubr.bf16.mxu0 0
        %2378 = vmatmul.mubr.bf16.gmra.mrb[0].mxu0 %v2294
        %v2379 = vpop.f32.mrb[0].mxu0
        %v2380 = vadd.f32 0.0, %v2379
        %v2381 = vpop.f32.mrb[0].mxu0
        %v2382 = vpop.f32.mrb[0].mxu0
        %v2383 = vpop.f32.mrb[0].mxu0
        %2384 = vdwg.mxu0
        %v2385 = vadd.f32 %v2191, %v2331
        %v2386 = vadd.f32 %v2192, %v2338
        %v2387 = vadd.f32 %v2193, %v2345
        %v2388 = vadd.f32 %v2194, %v2352
        %v2389 = vadd.f32 %v2195, %v2359
        %v2390 = vadd.f32 %v2196, %v2366
        %v2391 = vadd.f32 %v2197, %v2373
        %v2392 = vadd.f32 %v2198, %v2380
        %v2393 = vld [vmem:[#allocation2 + $0x10] sm:$0xf]
        %v2394 = vld [vmem:[#allocation2 + $0x14] sm:$0xf]
        %v2395 = vld [vmem:[#allocation2 + $0x18] sm:$0xf]
        %v2396 = vld [vmem:[#allocation2 + $0x1c] sm:$0xf]
        %v2397 = vld [vmem:[#allocation2 + $0x20] sm:$0xf]
        %v2398 = vld [vmem:[#allocation2 + $0x24] sm:$0xf]
        %v2399 = vld [vmem:[#allocation2 + $0x28] sm:$0xf]
        %v2400 = vld [vmem:[#allocation2 + $0x2c] sm:$0xf]
        %v2401 = vld [vmem:[#allocation2 + $0x30] sm:$0xf]
        %v2402 = vld [vmem:[#allocation2 + $0x34] sm:$0xf]
        %v2403 = vld [vmem:[#allocation2 + $0x38] sm:$0xf]
        %v2404 = vld [vmem:[#allocation2 + $0x3c] sm:$0xf]
        %v2405 = vld [vmem:[#allocation2 + $0x40] sm:$0xf]
        %v2406 = vld [vmem:[#allocation2 + $0x44] sm:$0xf]
        %v2407 = vld [vmem:[#allocation2 + $0x48] sm:$0xf]
        %v2408 = vld [vmem:[#allocation2 + $0x4c] sm:$0xf]
        %v2409 = vld [vmem:[#allocation2 + $0x50] sm:$0x1]
        %s2410 = scalar_lea.vmem [#allocation9], 112
        %v2411 = vld [vmem:[%s2410] sm:$0xf]
        %v2412 = vld [vmem:[%s2410 + $0x4] sm:$0xf]
        %v2413 = vld [vmem:[%s2410 + $0x8] sm:$0xf]
        %v2414 = vld [vmem:[%s2410 + $0xc] sm:$0xf]
        %v2432 = vunpack.c.l.b16 %v2393
        %v2433 = vunpack.c.l.b16 %v2394
        %v2434 = vunpack.c.l.b16 %v2395
        %v2435 = vunpack.c.l.b16 %v2396
        %v2436 = vunpack.c.l.b16 %v2397
        %v2437 = vunpack.c.l.b16 %v2398
        %v2438 = vunpack.c.l.b16 %v2399
        %v2439 = vunpack.c.l.b16 %v2400
        %v2440 = vunpack.c.l.b16 %v2401
        %v2441 = vunpack.c.l.b16 %v2402
        %v2442 = vunpack.c.l.b16 %v2403
        %v2443 = vunpack.c.l.b16 %v2404
        %v2444 = vunpack.c.l.b16 %v2405
        %v2445 = vunpack.c.l.b16 %v2406
        %v2446 = vunpack.c.l.b16 %v2407
        %v2447 = vunpack.c.l.b16 %v2408
        %v2448 = vunpack.c.l.b16 %v2409
        %v2449 = vpack.c.b16 %v2433, %v2432
        %v2450 = vpack.c.b16 %v2435, %v2434
        %v2451 = vpack.c.b16 %v2437, %v2436
        %v2452 = vpack.c.b16 %v2439, %v2438
        %v2453 = vpack.c.b16 %v2441, %v2440
        %v2454 = vpack.c.b16 %v2443, %v2442
        %v2455 = vpack.c.b16 %v2445, %v2444
        %v2456 = vpack.c.b16 %v2447, %v2446
        %v2457 = vpack.c.b16 %v2448, %v2448
        %v2459 = vshrl.u32 %v2449, 16
        %v2461 = vshll.u32 %v2449, 16
        %v2463 = vrot.slane %v2461, 1
        %v2464 = vor.u32 %v2459, %v2463
        %v2466 = vshll.u32 %v2450, 16
        %v2468 = vrot.slane %v2466, 1
        %v2469 = vsel %vm1109, %v2464, %v2468
        %v2470 = vshrl.u32 %v2450, 16
        %v2472 = vor.u32 %v2470, %v2468
        %v2474 = vshll.u32 %v2451, 16
        %v2476 = vrot.slane %v2474, 1
        %v2477 = vsel %vm1109, %v2472, %v2476
        %v2478 = vshrl.u32 %v2451, 16
        %v2480 = vor.u32 %v2478, %v2476
        %v2482 = vshll.u32 %v2452, 16
        %v2484 = vrot.slane %v2482, 1
        %v2485 = vsel %vm1109, %v2480, %v2484
        %v2486 = vshrl.u32 %v2452, 16
        %v2488 = vor.u32 %v2486, %v2484
        %v2490 = vshll.u32 %v2453, 16
        %v2492 = vrot.slane %v2490, 1
        %v2493 = vsel %vm1109, %v2488, %v2492
        %v2494 = vshrl.u32 %v2453, 16
        %v2496 = vor.u32 %v2494, %v2492
        %v2498 = vshll.u32 %v2454, 16
        %v2500 = vrot.slane %v2498, 1
        %v2501 = vsel %vm1109, %v2496, %v2500
        %v2502 = vshrl.u32 %v2454, 16
        %v2504 = vor.u32 %v2502, %v2500
        %v2506 = vshll.u32 %v2455, 16
        %v2508 = vrot.slane %v2506, 1
        %v2509 = vsel %vm1109, %v2504, %v2508
        %v2510 = vshrl.u32 %v2455, 16
        %v2512 = vor.u32 %v2510, %v2508
        %v2514 = vshll.u32 %v2456, 16
        %v2516 = vrot.slane %v2514, 1
        %v2517 = vsel %vm1109, %v2512, %v2516
        %v2518 = vshrl.u32 %v2456, 16
        %v2520 = vor.u32 %v2518, %v2516
        %v2522 = vshll.u32 %v2457, 16
        %v2524 = vrot.slane %v2522, 1
        %v2525 = vsel %vm1109, %v2520, %v2524
        %v2530 = vunpack.c.l.b16 %v2411
        %v2531 = vunpack.c.l.b16 %v2412
        %v2532 = vunpack.c.l.b16 %v2413
        %v2533 = vunpack.c.l.b16 %v2414
        %v2534 = vpack.c.b16 %v2531, %v2530
        %v2535 = vpack.c.b16 %v2533, %v2532
        %v2539 = vsel %vm364, %v2469, 0
        %v2542 = vsel %vm364, %v2477, 0
        %v2545 = vsel %vm364, %v2485, 0
        %v2548 = vsel %vm364, %v2493, 0
        %v2551 = vsel %vm364, %v2501, 0
        %v2554 = vsel %vm364, %v2509, 0
        %v2557 = vsel %vm364, %v2517, 0
        %v2560 = vsel %vm364, %v2525, 0
        %2562 = vmatprep.subr.bf16.mxu0 0
        %2563 = vmatpush1.bf16.msra.mxu0 %v2534
        %2564 = vmatprep.subr.bf16.mxu0 0
        %2565 = vmatpush1.bf16.msra.mxu0 %v2535
        %2566 = vmatprep.subr.bf16.mxu0 0
        %2567 = vmatpush1.bf16.msra.mxu0 0
        %2568 = vmatprep.subr.bf16.mxu0 0
        %2569 = vmatpush1.bf16.msra.mxu0 0
        %2570 = vmatprep.subr.bf16.mxu0 0
        %2571 = vmatpush1.bf16.msra.mxu0 0
        %2572 = vmatprep.subr.bf16.mxu0 0
        %2573 = vmatpush1.bf16.msra.mxu0 0
        %2574 = vmatprep.subr.bf16.mxu0 0
        %2575 = vmatpush1.bf16.msra.mxu0 0
        %2576 = vmatprep.subr.bf16.mxu0 0
        %2577 = vmatpush1.bf16.msra.mxu0 0
        %2578 = vmatprep.subr.bf16.mxu0 0
        %2579 = vmatpush1.bf16.msra.mxu0 0
        %2580 = vmatprep.subr.bf16.mxu0 0
        %2581 = vmatpush1.bf16.msra.mxu0 0
        %2582 = vmatprep.subr.bf16.mxu0 0
        %2583 = vmatpush1.bf16.msra.mxu0 0
        %2584 = vmatprep.subr.bf16.mxu0 0
        %2585 = vmatpush1.bf16.msra.mxu0 0
        %2586 = vmatprep.subr.bf16.mxu0 0
        %2587 = vmatpush1.bf16.msra.mxu0 0
        %2588 = vmatprep.subr.bf16.mxu0 0
        %2589 = vmatpush1.bf16.msra.mxu0 0
        %2590 = vmatprep.subr.bf16.mxu0 0
        %2591 = vmatpush1.bf16.msra.mxu0 0
        %2592 = vmatprep.subr.bf16.mxu0 0
        %2593 = vmatpush1.bf16.msra.mxu0 0
        %2594 = vmatprep.mubr.bf16.mxu0 0
        %2595 = vmatmul.mubr.bf16.gmra.mrb[0].mxu0 %v2539
        %v2596 = vpop.f32.mrb[0].mxu0
        %v2597 = vadd.f32 0.0, %v2596
        %v2598 = vpop.f32.mrb[0].mxu0
        %v2599 = vpop.f32.mrb[0].mxu0
        %v2600 = vpop.f32.mrb[0].mxu0
        %2601 = vmatprep.mubr.bf16.mxu0 0
        %2602 = vmatmul.mubr.bf16.gmra.mrb[0].mxu0 %v2542
        %v2603 = vpop.f32.mrb[0].mxu0
        %v2604 = vadd.f32 0.0, %v2603
        %v2605 = vpop.f32.mrb[0].mxu0
        %v2606 = vpop.f32.mrb[0].mxu0
        %v2607 = vpop.f32.mrb[0].mxu0
        %2608 = vmatprep.mubr.bf16.mxu0 0
        %2609 = vmatmul.mubr.bf16.gmra.mrb[0].mxu0 %v2545
        %v2610 = vpop.f32.mrb[0].mxu0
        %v2611 = vadd.f32 0.0, %v2610
        %v2612 = vpop.f32.mrb[0].mxu0
        %v2613 = vpop.f32.mrb[0].mxu0
        %v2614 = vpop.f32.mrb[0].mxu0
        %2615 = vmatprep.mubr.bf16.mxu0 0
        %2616 = vmatmul.mubr.bf16.gmra.mrb[0].mxu0 %v2548
        %v2617 = vpop.f32.mrb[0].mxu0
        %v2618 = vadd.f32 0.0, %v2617
        %v2619 = vpop.f32.mrb[0].mxu0
        %v2620 = vpop.f32.mrb[0].mxu0
        %v2621 = vpop.f32.mrb[0].mxu0
        %2622 = vmatprep.mubr.bf16.mxu0 0
        %2623 = vmatmul.mubr.bf16.gmra.mrb[0].mxu0 %v2551
        %v2624 = vpop.f32.mrb[0].mxu0
        %v2625 = vadd.f32 0.0, %v2624
        %v2626 = vpop.f32.mrb[0].mxu0
        %v2627 = vpop.f32.mrb[0].mxu0
        %v2628 = vpop.f32.mrb[0].mxu0
        %2629 = vmatprep.mubr.bf16.mxu0 0
        %2630 = vmatmul.mubr.bf16.gmra.mrb[0].mxu0 %v2554
        %v2631 = vpop.f32.mrb[0].mxu0
        %v2632 = vadd.f32 0.0, %v2631
        %v2633 = vpop.f32.mrb[0].mxu0
        %v2634 = vpop.f32.mrb[0].mxu0
        %v2635 = vpop.f32.mrb[0].mxu0
        %2636 = vmatprep.mubr.bf16.mxu0 0
        %2637 = vmatmul.mubr.bf16.gmra.mrb[0].mxu0 %v2557
        %v2638 = vpop.f32.mrb[0].mxu0
        %v2639 = vadd.f32 0.0, %v2638
        %v2640 = vpop.f32.mrb[0].mxu0
        %v2641 = vpop.f32.mrb[0].mxu0
        %v2642 = vpop.f32.mrb[0].mxu0
        %2643 = vmatprep.mubr.bf16.mxu0 0
        %2644 = vmatmul.mubr.bf16.gmra.mrb[0].mxu0 %v2560
        %v2645 = vpop.f32.mrb[0].mxu0
        %v2646 = vadd.f32 0.0, %v2645
        %v2647 = vpop.f32.mrb[0].mxu0
        %v2648 = vpop.f32.mrb[0].mxu0
        %v2649 = vpop.f32.mrb[0].mxu0
        %2650 = vdwg.mxu0
        %v2651 = vadd.f32 %v2385, %v2597
        %v2652 = vadd.f32 %v2386, %v2604
        %v2653 = vadd.f32 %v2387, %v2611
        %v2654 = vadd.f32 %v2388, %v2618
        %v2655 = vadd.f32 %v2389, %v2625
        %v2656 = vadd.f32 %v2390, %v2632
        %v2657 = vadd.f32 %v2391, %v2639
        %v2658 = vadd.f32 %v2392, %v2646
        %v2659 = vld [vmem:[#allocation2 + $0x10] sm:$0xe]
        %s2660 = scalar_lea.vmem [#allocation9], 128
        %v2661 = vld [vmem:[%s2660] sm:$0xf]
        %v2662 = vld [vmem:[%s2660 + $0x4] sm:$0xf]
        %v2663 = vld [vmem:[%s2660 + $0x8] sm:$0xf]
        %v2664 = vld [vmem:[%s2660 + $0xc] sm:$0xf]
        %v2666 = vunpack.c.l.b16 %v2659
        %v2667 = vpack.c.b16 %v2433, %v2666
        %v2668 = vrot.slane %v2667, 1
        %v2669 = vrot.slane %v2450, 1
        %v2670 = vsel %vm1429, %v2668, %v2669
        %v2671 = vrot.slane %v2451, 1
        %v2672 = vsel %vm1429, %v2669, %v2671
        %v2673 = vrot.slane %v2452, 1
        %v2674 = vsel %vm1429, %v2671, %v2673
        %v2675 = vrot.slane %v2453, 1
        %v2676 = vsel %vm1429, %v2673, %v2675
        %v2677 = vrot.slane %v2454, 1
        %v2678 = vsel %vm1429, %v2675, %v2677
        %v2679 = vrot.slane %v2455, 1
        %v2680 = vsel %vm1429, %v2677, %v2679
        %v2681 = vrot.slane %v2456, 1
        %v2682 = vsel %vm1429, %v2679, %v2681
        %v2683 = vrot.slane %v2457, 1
        %v2684 = vsel %vm1429, %v2681, %v2683
        %v2689 = vunpack.c.l.b16 %v2661
        %v2690 = vunpack.c.l.b16 %v2662
        %v2691 = vunpack.c.l.b16 %v2663
        %v2692 = vunpack.c.l.b16 %v2664
        %v2693 = vpack.c.b16 %v2690, %v2689
        %v2694 = vpack.c.b16 %v2692, %v2691
        %v2698 = vsel %vm364, %v2670, 0
        %v2701 = vsel %vm364, %v2672, 0
        %v2704 = vsel %vm364, %v2674, 0
        %v2707 = vsel %vm364, %v2676, 0
        %v2710 = vsel %vm364, %v2678, 0
        %v2713 = vsel %vm364, %v2680, 0
        %v2716 = vsel %vm364, %v2682, 0
        %v2719 = vsel %vm364, %v2684, 0
        %2721 = vmatprep.subr.bf16.mxu0 0
        %2722 = vmatpush1.bf16.msra.mxu0 %v2693
        %2723 = vmatprep.subr.bf16.mxu0 0
        %2724 = vmatpush1.bf16.msra.mxu0 %v2694
        %2725 = vmatprep.subr.bf16.mxu0 0
        %2726 = vmatpush1.bf16.msra.mxu0 0
        %2727 = vmatprep.subr.bf16.mxu0 0
        %2728 = vmatpush1.bf16.msra.mxu0 0
        %2729 = vmatprep.subr.bf16.mxu0 0
        %2730 = vmatpush1.bf16.msra.mxu0 0
        %2731 = vmatprep.subr.bf16.mxu0 0
        %2732 = vmatpush1.bf16.msra.mxu0 0
        %2733 = vmatprep.subr.bf16.mxu0 0
        %2734 = vmatpush1.bf16.msra.mxu0 0
        %2735 = vmatprep.subr.bf16.mxu0 0
        %2736 = vmatpush1.bf16.msra.mxu0 0
        %2737 = vmatprep.subr.bf16.mxu0 0
        %2738 = vmatpush1.bf16.msra.mxu0 0
        %2739 = vmatprep.subr.bf16.mxu0 0
        %2740 = vmatpush1.bf16.msra.mxu0 0
        %2741 = vmatprep.subr.bf16.mxu0 0
        %2742 = vmatpush1.bf16.msra.mxu0 0
        %2743 = vmatprep.subr.bf16.mxu0 0
        %2744 = vmatpush1.bf16.msra.mxu0 0
        %2745 = vmatprep.subr.bf16.mxu0 0
        %2746 = vmatpush1.bf16.msra.mxu0 0
        %2747 = vmatprep.subr.bf16.mxu0 0
        %2748 = vmatpush1.bf16.msra.mxu0 0
        %2749 = vmatprep.subr.bf16.mxu0 0
        %2750 = vmatpush1.bf16.msra.mxu0 0
        %2751 = vmatprep.subr.bf16.mxu0 0
        %2752 = vmatpush1.bf16.msra.mxu0 0
        %2753 = vmatprep.mubr.bf16.mxu0 0
        %2754 = vmatmul.mubr.bf16.gmra.mrb[0].mxu0 %v2698
        %v2755 = vpop.f32.mrb[0].mxu0
        %v2756 = vadd.f32 0.0, %v2755
        %v2757 = vpop.f32.mrb[0].mxu0
        %v2758 = vpop.f32.mrb[0].mxu0
        %v2759 = vpop.f32.mrb[0].mxu0
        %2760 = vmatprep.mubr.bf16.mxu0 0
        %2761 = vmatmul.mubr.bf16.gmra.mrb[0].mxu0 %v2701
        %v2762 = vpop.f32.mrb[0].mxu0
        %v2763 = vadd.f32 0.0, %v2762
        %v2764 = vpop.f32.mrb[0].mxu0
        %v2765 = vpop.f32.mrb[0].mxu0
        %v2766 = vpop.f32.mrb[0].mxu0
        %2767 = vmatprep.mubr.bf16.mxu0 0
        %2768 = vmatmul.mubr.bf16.gmra.mrb[0].mxu0 %v2704
        %v2769 = vpop.f32.mrb[0].mxu0
        %v2770 = vadd.f32 0.0, %v2769
        %v2771 = vpop.f32.mrb[0].mxu0
        %v2772 = vpop.f32.mrb[0].mxu0
        %v2773 = vpop.f32.mrb[0].mxu0
        %2774 = vmatprep.mubr.bf16.mxu0 0
        %2775 = vmatmul.mubr.bf16.gmra.mrb[0].mxu0 %v2707
        %v2776 = vpop.f32.mrb[0].mxu0
        %v2777 = vadd.f32 0.0, %v2776
        %v2778 = vpop.f32.mrb[0].mxu0
        %v2779 = vpop.f32.mrb[0].mxu0
        %v2780 = vpop.f32.mrb[0].mxu0
        %2781 = vmatprep.mubr.bf16.mxu0 0
        %2782 = vmatmul.mubr.bf16.gmra.mrb[0].mxu0 %v2710
        %v2783 = vpop.f32.mrb[0].mxu0
        %v2784 = vadd.f32 0.0, %v2783
        %v2785 = vpop.f32.mrb[0].mxu0
        %v2786 = vpop.f32.mrb[0].mxu0
        %v2787 = vpop.f32.mrb[0].mxu0
        %2788 = vmatprep.mubr.bf16.mxu0 0
        %2789 = vmatmul.mubr.bf16.gmra.mrb[0].mxu0 %v2713
        %v2790 = vpop.f32.mrb[0].mxu0
        %v2791 = vadd.f32 0.0, %v2790
        %v2792 = vpop.f32.mrb[0].mxu0
        %v2793 = vpop.f32.mrb[0].mxu0
        %v2794 = vpop.f32.mrb[0].mxu0
        %2795 = vmatprep.mubr.bf16.mxu0 0
        %2796 = vmatmul.mubr.bf16.gmra.mrb[0].mxu0 %v2716
        %v2797 = vpop.f32.mrb[0].mxu0
        %v2798 = vadd.f32 0.0, %v2797
        %v2799 = vpop.f32.mrb[0].mxu0
        %v2800 = vpop.f32.mrb[0].mxu0
        %v2801 = vpop.f32.mrb[0].mxu0
        %2802 = vmatprep.mubr.bf16.mxu0 0
        %2803 = vmatmul.mubr.bf16.gmra.mrb[0].mxu0 %v2719
        %v2804 = vpop.f32.mrb[0].mxu0
        %v2805 = vadd.f32 0.0, %v2804
        %v2806 = vpop.f32.mrb[0].mxu0
        %v2807 = vpop.f32.mrb[0].mxu0
        %v2808 = vpop.f32.mrb[0].mxu0
        %2809 = vdwg.mxu0
        %v2810 = vadd.f32 %v2651, %v2756
        %v2811 = vadd.f32 %v2652, %v2763
        %v2812 = vadd.f32 %v2653, %v2770
        %v2813 = vadd.f32 %v2654, %v2777
        %v2814 = vadd.f32 %v2655, %v2784
        %v2815 = vadd.f32 %v2656, %v2791
        %v2816 = vadd.f32 %v2657, %v2798
        %v2817 = vadd.f32 %v2658, %v2805
        %v2818 = vld [vmem:[%s354] sm:$0x1]
        %v2820 = vlaneseq
        %v2821 = vshrl.u32 %v2820, 7
        %v2822 = vsub.s32 0, %v2821
        %v2823 = vrot.slane %v2818, %v2822
        %v2825 = vadd.f32 %v2810, %v2823
        %v2826 = vadd.f32 %v2811, %v2823
        %v2827 = vadd.f32 %v2812, %v2823
        %v2828 = vadd.f32 %v2813, %v2823
        %v2829 = vadd.f32 %v2814, %v2823
        %v2830 = vadd.f32 %v2815, %v2823
        %v2831 = vadd.f32 %v2816, %v2823
        %v2832 = vadd.f32 %v2817, %v2823
        %v2833 = vpack.c.bf16 %v2825, %v2825
        %v2834 = vpack.c.bf16 %v2826, %v2826
        %v2835 = vpack.c.bf16 %v2827, %v2827
        %v2836 = vpack.c.bf16 %v2828, %v2828
        %v2837 = vpack.c.bf16 %v2829, %v2829
        %v2838 = vpack.c.bf16 %v2830, %v2830
        %v2839 = vpack.c.bf16 %v2831, %v2831
        %v2840 = vpack.c.bf16 %v2832, %v2832
        %vm2841 = vcmask 519168
        %2842 = vst.msk [vmem:[%s351] sm:$0xf] %vm2841, %v2833
        %2843 = vst.msk [vmem:[%s351 + $0x4] sm:$0xf] %vm2841, %v2834
        %2844 = vst.msk [vmem:[%s351 + $0x8] sm:$0xf] %vm2841, %v2835
        %2845 = vst.msk [vmem:[%s351 + $0xc] sm:$0xf] %vm2841, %v2836
        %2846 = vst.msk [vmem:[%s351 + $0x10] sm:$0xf] %vm2841, %v2837
        %2847 = vst.msk [vmem:[%s351 + $0x14] sm:$0xf] %vm2841, %v2838
        %2848 = vst.msk [vmem:[%s351 + $0x18] sm:$0xf] %vm2841, %v2839
        %2849 = vst.msk [vmem:[%s351 + $0x1c] sm:$0xf] %vm2841, %v2840
        %s2850 = sand.u32 %s191, 1
        %s2851 = scalar_lea.sflag [#allocation5], %s2850
        %s2852 = sand.u32 %s191, 1
        %s2853 = smul.addr %s2852, 32
        %s2854 = scalar_lea.vmem [#allocation11], %s2853
        // Predicated region
        $region65: #{tpu_custom_call.1} parent=47 // pred_check
          %p2855 = pneg %p201
        $region66: #{tpu_custom_call.1} parent=47 // pred_check_branch
          %2857 = sbr.rel (%p2855) target = $region68
        $region67: #{tpu_custom_call.1} parent=47 // pred_region
          %s2859 = ssub.s32 512, 512
          %2860 = vsyncadd %s2851, %s2859
          %s2861 = smul.addr %s26, 8
          %s2862 = smul.addr %s2861, 64
          %s2863 = scalar_lea.hbm %s7, %s2862
          %s2864 = sshll.u32 %s2854, 4
          %s2865 = int_to_ptr.vmem [resolvable:$true] %s2864
          %2870 = dma.vmem_to_hbm [thread:$0]  %s2865, 512, %s2863, %s2851, 64, 64, 4
        $region68: #{tpu_custom_call.1} parent=47 // pred_fallthru
          _
      $region48: #{tpu_custom_call.1} parent=5 // pred_fallthru
        _
      %p2871 = scmp.le.s32.totalorder 2, %s21
      // Predicated region
      $region69: #{tpu_custom_call.1} parent=5 // pred_check
        %p2872 = pneg %p2871
      $region70: #{tpu_custom_call.1} parent=5 // pred_check_branch
        %2874 = sbr.rel (%p2872) target = $region72
      $region71: #{tpu_custom_call.1} parent=5 // pred_region
        %s2875 = ssub.s32 %s21, 2
        // Predicated region
        $region73: #{tpu_custom_call.1} parent=71 // pred_check
          %p2876 = pneg %p207
        $region74: #{tpu_custom_call.1} parent=71 // pred_check_branch
          %2878 = sbr.rel (%p2876) target = $region76
        $region75: #{tpu_custom_call.1} parent=71 // pred_region
          %s2879 = sand.u32 %s192, 1
          %s2880 = scalar_lea.sflag [#allocation5], %s2879
          %s2881 = sand.u32 %s192, 1
          %s2882 = smul.addr %s2881, 32
          %s2883 = scalar_lea.vmem [#allocation11], %s2882
          %2884 = dma.done %s2880, 512
        $region76: #{tpu_custom_call.1} parent=71 // pred_fallthru
          _
      $region72: #{tpu_custom_call.1} parent=5 // pred_fallthru
        _
    $region6: #{tpu_custom_call.1} parent=1 // loop_footer
      %s25 = sadd.s32 1, %s21
    $region7: #{tpu_custom_call.1} parent=1 // loop_footer_branch
      %20 = sbr.rel target = $region3
    $region8: #{tpu_custom_call.1} parent=1 // loop_exit
      _
    %2885 = vsyncpa [#allocation4], 1
    %s2886 = scalar_lea.sflag [#allocation4], 1
    %2887 = vsyncpa %s2886, 1
    %2888 = vsyncpa [#allocation7], 1
    %2889 = vsyncpa [#allocation10], 1
    %2890 = vsyncpa [#allocation5], 1
    %s2891 = scalar_lea.sflag [#allocation5], 1
    %2892 = vsyncpa %s2891, 1

</llo_original>
